<compile_context>
chip_gen: v5e
topology: v5e:2x2
jax: 0.10.0
libtpu: 0.0.40
codegen_flags: <defaults>
</compile_context>

<pallas_src>
import functools

import jax
import jax.numpy as jnp
from jax.experimental import pallas as pl
from jax.experimental.pallas import tpu as pltpu


def _round_up(x, m):
    return (x + m - 1) // m * m


def _tpu_limits():
    """Returns (vmem_limit_bytes, num_tensorcores) with safe fallbacks."""
    vmem_cap = 64 * 1024 * 1024
    cores = 1
    try:
        info = pltpu.get_tpu_info()
    except Exception:
        info = None
    if info is not None:
        for name in ("vmem_capacity_bytes", "vmem_bytes", "vmem_capacity"):
            try:
                v = int(getattr(info, name))
            except (AttributeError, TypeError, ValueError):
                continue
            if v > 0:
                vmem_cap = v
                break
        for name in ("num_cores", "core_count", "num_tensorcores"):
            try:
                v = int(getattr(info, name))
            except (AttributeError, TypeError, ValueError):
                continue
            if v >= 1:
                cores = v
                break
    # 96 MiB on 128 MiB chips (v5e/v6e), 48 MiB on 64 MiB chips (v7x).
    vmem_limit = min(vmem_cap * 3 // 4, 96 * 1024 * 1024)
    return vmem_limit, cores


def _loss_kernel(det_ref, cgt_ref, seg_ref, tsm_ref, rec_ref, img_ref,
                 det_acc_ref, seg_acc_ref, sc_ref, *,
                 HW, padded, n_tiles, tiles_per_split, uneven):
    t = pl.program_id(1)
    tg = pl.program_id(0) * tiles_per_split + t        # global tile index
    TR = det_ref.shape[2]
    CSEG = seg_ref.shape[1]
    CREC = rec_ref.shape[1]

    @pl.when(t == 0)
    def _init():
        det_acc_ref[...] = jnp.zeros_like(det_acc_ref)
        seg_acc_ref[...] = jnp.zeros_like(seg_acc_ref)
        sc_ref[...] = jnp.zeros_like(sc_ref)

    def sub_sum(x):
        # (..., TR, 128) -> (8, 128): reduce leading axes and groups of 8
        # sublane rows with plain VPU vreg adds (no XLU cross-sublane reduce);
        # the accumulator update below stays a full unmasked vreg store.
        while x.ndim > 2:
            x = jnp.sum(x, axis=0)
        return jnp.sum(x.reshape(TR // 8, 8, 128), axis=0)

    def accumulate(mask):
        # ----- detection: soft-target weighted softmax focal CE + dice -----
        l0 = det_ref[:, 0].astype(jnp.float32)          # (N, TR, 128)
        l1 = det_ref[:, 1].astype(jnp.float32)
        l2 = det_ref[:, 2].astype(jnp.float32)
        g0 = cgt_ref[:, 0].astype(jnp.float32)
        g1 = cgt_ref[:, 1].astype(jnp.float32)
        g2 = cgt_ref[:, 2].astype(jnp.float32)
        m = jnp.maximum(jnp.maximum(l0, l1), l2)
        e0 = jnp.exp(l0 - m)
        e1 = jnp.exp(l1 - m)
        e2 = jnp.exp(l2 - m)
        denom = e0 + e1 + e2
        inv = pl.reciprocal(denom, approx=True)          # EUP slot, ~free
        log_denom = jnp.log(denom)
        ls0 = (l0 - m) - log_denom
        ls1 = (l1 - m) - log_denom
        ls2 = (l2 - m) - log_denom
        # F.cross_entropy re-applies log_softmax, an analytic no-op on an
        # already-log-softmaxed input -> single log_softmax; class weights
        # [0.6, 0.2, 0.2], soft targets, gamma=2 focal term.
        ce = -(0.6 * g0 * ls0 + 0.2 * g1 * ls1 + 0.2 * g2 * ls2)
        ft = 1.0 - jnp.exp(-ce)
        det_focal = ft * ft * ce       # padded pos: gt==0 -> ce==0, no mask

        p0 = e0 * inv
        p1 = e1 * inv
        p2 = e2 * inv
        if mask is not None:           # padded softmax=1/3: keep out of dice
            p0 = p0 * mask
            p1 = p1 * mask
            p2 = p2 * mask
        for ci, (g, p) in enumerate(((g0, p0), (g1, p1), (g2, p2))):
            det_acc_ref[0, 0, ci] += sub_sum(g * p)      # intersection
            det_acc_ref[0, 1, ci] += sub_sum(g + p)      # cardinality
            det_acc_ref[0, 2, ci] += sub_sum(g)          # gt presence

        # ----- segmentation: binary focal (BCE with -100 clamp) + dice -----
        seg_floss = jnp.zeros((8, 128), jnp.float32)
        for ci in range(CSEG):
            sl = seg_ref[:, ci].astype(jnp.float32)
            y = tsm_ref[:, ci].astype(jnp.float32)
            # BCE(sigmoid(sl), y) in softplus form with BCELoss' -100 clamp.
            sp = jnp.maximum(sl, 0.0) + jnp.log(1.0 + jnp.exp(-jnp.abs(sl)))
            log_s = jnp.maximum(sl - sp, -100.0)
            log_1s = jnp.maximum(-sp, -100.0)
            s = jnp.exp(log_s)                            # sigmoid(sl)
            logpt = -(y * log_s + (1.0 - y) * log_1s)
            ft2 = 1.0 - jnp.exp(-logpt)
            # alpha*y + (1-alpha)*(1-y) with alpha=0.25  ==  0.75 - 0.5*y
            floss = ft2 * ft2 * logpt * (0.75 - 0.5 * y)
            if mask is not None:       # padded sigmoid=0.5 and logpt!=0
                floss = floss * mask
                s = s * mask
            seg_floss = seg_floss + sub_sum(floss)
            seg_acc_ref[0, 0, ci] += sub_sum(y * s)
            seg_acc_ref[0, 1, ci] += sub_sum(y + s)
            seg_acc_ref[0, 2, ci] += sub_sum(y)

        # ----- reconstruction: L1 -----
        rec_sum = jnp.zeros((8, 128), jnp.float32)
        for ci in range(CREC):
            rec_sum = rec_sum + sub_sum(
                jnp.abs(rec_ref[:, ci].astype(jnp.float32)
                        - img_ref[:, ci].astype(jnp.float32)))

        sc_ref[0, 0] += sub_sum(det_focal)
        sc_ref[0, 1] += seg_floss
        sc_ref[0, 2] += rec_sum

    if padded:
        # Mask work only on the last spatial tile; unmasked fast path inside.
        is_last = tg == (n_tiles - 1)
        not_last = jnp.logical_not(is_last)
        if uneven:
            not_last = jnp.logical_and(not_last, tg < n_tiles)

        @pl.when(is_last)
        def _masked():
            row = jax.lax.broadcasted_iota(jnp.int32, (TR, 128), 0)
            lane = jax.lax.broadcasted_iota(jnp.int32, (TR, 128), 1)
            pos = ((n_tiles - 1) * TR + row) * 128 + lane
            accumulate((pos < HW).astype(jnp.float32))

        @pl.when(not_last)
        def _fast():
            accumulate(None)
    else:
        if uneven:
            @pl.when(tg < n_tiles)
            def _fast():
                accumulate(None)
        else:
            accumulate(None)


def cell_det_seg_rec_loss(logit_det, logit_seg, logit_rec,
                          cell_gt, tissue_segmap, image):
    assert logit_det.shape == cell_gt.shape
    assert logit_seg.shape == tissue_segmap.shape
    assert logit_rec.shape == image.shape

    N, CDET, H, W = logit_det.shape
    assert CDET == 3, "softmax_focal_loss uses a 3-class weight vector"
    CSEG = logit_seg.shape[1]
    CREC = logit_rec.shape[1]
    HW = H * W

    vmem_limit, num_cores = _tpu_limits()
    budget = min(8 * 1024 * 1024, vmem_limit // 4)   # per-step input bytes

    def isz(x):
        return jnp.dtype(x.dtype).itemsize

    # HBM bytes per row of 128 spatial positions across all six inputs
    # (native dtypes kept; the kernel upcasts per-channel after the DMA, so
    # feeding bf16 halves HBM traffic on mem-bound v5e/v6e).
    bytes_per_row = 128 * N * (
        CDET * (isz(logit_det) + isz(cell_gt))
        + CSEG * (isz(logit_seg) + isz(tissue_segmap))
        + CREC * (isz(logit_rec) + isz(image)))

    rows = (HW + 127) // 128
    rows8 = _round_up(rows, 8)
    tr_cap = max(8, min(1024, (budget // bytes_per_row) // 8 * 8))

    # Prefer a TR that divides rows8, so no padding beyond the minimal <8-row
    # tail is ever materialized (jnp.pad re-reads/writes all six inputs).
    TR = 8
    for d in range(min(tr_cap, rows8), 7, -8):
        if rows8 % d == 0:
            TR = d
            break
    rows_p = rows8
    # Only if divisibility forces pathologically small tiles on a big problem
    # do we pay for padding the row axis up to a comfortable TR.
    if TR < min(tr_cap, 64) and rows8 >= 16 * min(tr_cap, 64):
        TR = min(tr_cap, 256)
        rows_p = _round_up(rows, TR)     # keeps padding confined to last tile

    padded = rows_p * 128 != HW          # false whenever HW % 1024 == 0
    n_tiles = rows_p // TR

    # Real 2-TC split only when the hardware reports >=2 TensorCores (v7x);
    # v5e/v6e stay single-split (no extra serial loop / output slab).
    if num_cores >= 2 and n_tiles >= num_cores:
        n_split = num_cores
    else:
        n_split = 1
    tiles_per_split = -(-n_tiles // n_split)
    uneven = n_split * tiles_per_split != n_tiles

    def prep(x, C):
        x = x.reshape(N, C, HW)
        if padded:
            x = jnp.pad(x, ((0, 0), (0, 0), (0, rows_p * 128 - HW)))
        return x.reshape(N, C, rows_p, 128)

    det = prep(logit_det, CDET)
    cgt = prep(cell_gt, CDET)
    seg = prep(logit_seg, CSEG)
    tsm = prep(tissue_segmap, CSEG)
    rec = prep(logit_rec, CREC)
    img = prep(image, CREC)

    def tile_index(c, t):
        i = c * tiles_per_split + t
        if uneven:
            i = jnp.minimum(i, n_tiles - 1)   # clamped duplicate, skipped in-kernel
        return i

    def in_spec(C):
        return pl.BlockSpec((N, C, TR, 128),
                            lambda c, t: (0, 0, tile_index(c, t), 0))

    kernel = functools.partial(
        _loss_kernel, HW=HW, padded=padded, n_tiles=n_tiles,
        tiles_per_split=tiles_per_split, uneven=uneven)

    in_bytes = sum(int(x.size) * isz(x) for x in (det, cgt, seg, tsm, rec, img))
    cost = pl.CostEstimate(
        flops=int(N * rows_p * 128 * (40 * CDET + 25 * CSEG + 3 * CREC)),
        transcendentals=int(N * rows_p * 128 * (6 + 3 * CSEG)),
        bytes_accessed=in_bytes)

    if n_split > 1:
        dim_sem = (pltpu.CORE_PARALLEL, pltpu.ARBITRARY)
    else:
        dim_sem = (pltpu.ARBITRARY, pltpu.ARBITRARY)

    det_acc, seg_acc, sc = pl.pallas_call(
        kernel,
        out_shape=(
            jax.ShapeDtypeStruct((n_split, 3, CDET, 8, 128), jnp.float32),
            jax.ShapeDtypeStruct((n_split, 3, CSEG, 8, 128), jnp.float32),
            jax.ShapeDtypeStruct((n_split, 3, 8, 128), jnp.float32),
        ),
        grid_spec=pltpu.PrefetchScalarGridSpec(
            num_scalar_prefetch=0,
            grid=(n_split, tiles_per_split),
            in_specs=[in_spec(CDET), in_spec(CDET),
                      in_spec(CSEG), in_spec(CSEG),
                      in_spec(CREC), in_spec(CREC)],
            out_specs=[
                pl.BlockSpec((1, 3, CDET, 8, 128), lambda c, t: (c, 0, 0, 0, 0)),
                pl.BlockSpec((1, 3, CSEG, 8, 128), lambda c, t: (c, 0, 0, 0, 0)),
                pl.BlockSpec((1, 3, 8, 128), lambda c, t: (c, 0, 0, 0)),
            ],
        ),
        compiler_params=pltpu.CompilerParams(
            dimension_semantics=dim_sem,
            vmem_limit_bytes=int(vmem_limit)),
        cost_estimate=cost,
    )(det, cgt, seg, tsm, rec, img)

    # ---- tiny finalize in XLA: combine core/sublane/lane partials ----------
    det_sums = jnp.sum(det_acc, axis=(0, 3, 4))   # (3, CDET): inter/card/ysum
    seg_sums = jnp.sum(seg_acc, axis=(0, 3, 4))   # (3, CSEG)
    sc_sums = jnp.sum(sc, axis=(0, 2, 3))         # (3,): det_ce, seg_ce, rec_l1

    eps = 1e-7

    def dice(sums, C):
        inter, card, ysum = sums[0], sums[1], sums[2]
        dl = 1.0 - 2.0 * inter / jnp.maximum(card, eps)
        return jnp.sum(dl * (ysum > 0.0).astype(jnp.float32)) / C

    det_ce = sc_sums[0] / (N * HW)
    seg_ce = sc_sums[1] / (N * CSEG * HW)
    rec_l1 = sc_sums[2] / (N * CREC * HW)
    return det_ce + dice(det_sums, CDET) + seg_ce + dice(seg_sums, CSEG) + rec_l1


if __name__ == "__main__":
    key = jax.random.PRNGKey(0)
    ks = jax.random.split(key, 6)

    N, H, W = 2, 16, 16
    CDET, CSEG, CREC = 3, 2, 3

    logit_det = jax.random.normal(ks[0], (N, CDET, H, W), jnp.float32)
    cell_gt = jax.random.uniform(ks[1], (N, CDET, H, W), jnp.float32)
    logit_seg = jax.random.normal(ks[2], (N, CSEG, H, W), jnp.float32)
    tissue_segmap = jax.random.uniform(ks[3], (N, CSEG, H, W), jnp.float32)
    logit_rec = jax.random.normal(ks[4], (N, CREC, H, W), jnp.float32)
    image = jax.random.uniform(ks[5], (N, CREC, H, W), jnp.float32)

    loss = cell_det_seg_rec_loss(logit_det, logit_seg, logit_rec,
                                 cell_gt, tissue_segmap, image)
    jax.block_until_ready(loss)
    print("KERNEL_OK")
</pallas_src>

<mosaic_0001>
module attributes {stable_mosaic.version = 11 : i64} {
  func.func @_loss_kernel(%arg0: i32, %arg1: i32, %arg2: memref<2x3x8x128xf32, #tpu.memory_space<vmem>>, %arg3: memref<2x3x8x128xf32, #tpu.memory_space<vmem>>, %arg4: memref<2x2x8x128xf32, #tpu.memory_space<vmem>>, %arg5: memref<2x2x8x128xf32, #tpu.memory_space<vmem>>, %arg6: memref<2x3x8x128xf32, #tpu.memory_space<vmem>>, %arg7: memref<2x3x8x128xf32, #tpu.memory_space<vmem>>, %arg8: memref<1x3x3x8x128xf32, #tpu.memory_space<vmem>>, %arg9: memref<1x3x2x8x128xf32, #tpu.memory_space<vmem>>, %arg10: memref<1x3x8x128xf32, #tpu.memory_space<vmem>>) attributes {dimension_semantics = [#tpu.dimension_semantics<arbitrary>, #tpu.dimension_semantics<arbitrary>], iteration_bounds = array<i64: 1, 1>, scalar_prefetch = 0 : i64, scratch_operands = 0 : i64, tpu.core_type = #tpu.core_type<tc>, window_params = [{transform_indices = @transform_0, window_bounds = array<i64: 2, 3, 8, 128>}, {transform_indices = @transform_1, window_bounds = array<i64: 2, 3, 8, 128>}, {transform_indices = @transform_2, window_bounds = array<i64: 2, 2, 8, 128>}, {transform_indices = @transform_3, window_bounds = array<i64: 2, 2, 8, 128>}, {transform_indices = @transform_4, window_bounds = array<i64: 2, 3, 8, 128>}, {transform_indices = @transform_5, window_bounds = array<i64: 2, 3, 8, 128>}, {transform_indices = @transform_6, window_bounds = array<i64: 1, 3, 3, 8, 128>}, {transform_indices = @transform_7, window_bounds = array<i64: 1, 3, 2, 8, 128>}, {transform_indices = @transform_8, window_bounds = array<i64: 1, 3, 8, 128>}]} {
    %c1_i32 = arith.constant 1 : i32
    %0 = arith.muli %arg0, %c1_i32 : i32
    %1 = arith.addi %0, %arg1 : i32
    %c0_i32 = arith.constant 0 : i32
    %2 = arith.cmpi eq, %arg1, %c0_i32 : i32
    %3 = arith.extui %2 : i1 to i32
    %c0_i32_0 = arith.constant 0 : i32
    %4 = arith.cmpi ne, %3, %c0_i32_0 : i32
    scf.if %4 {
      %cst = arith.constant 0.000000e+00 : f32
      %11 = vector.broadcast %cst : f32 to vector<1x3x3x8x128xf32>
      %c0 = arith.constant 0 : index
      %c0_4 = arith.constant 0 : index
      %c0_5 = arith.constant 0 : index
      %c0_6 = arith.constant 0 : index
      %c0_7 = arith.constant 0 : index
      %12 = vector.load %arg8[%c0, %c0_4, %c0_5, %c0_6, %c0_7] : memref<1x3x3x8x128xf32, #tpu.memory_space<vmem>>, vector<1x3x3x8x128xf32>
      tpu.vector_store %arg8[%c0, %c0_4, %c0_5, %c0_6, %c0_7], %11 {strides = array<i32>} : memref<1x3x3x8x128xf32, #tpu.memory_space<vmem>>, vector<1x3x3x8x128xf32>,
      %cst_8 = arith.constant 0.000000e+00 : f32
      %13 = vector.broadcast %cst_8 : f32 to vector<1x3x2x8x128xf32>
      %c0_9 = arith.constant 0 : index
      %c0_10 = arith.constant 0 : index
      %c0_11 = arith.constant 0 : index
      %c0_12 = arith.constant 0 : index
      %c0_13 = arith.constant 0 : index
      %14 = vector.load %arg9[%c0_9, %c0_10, %c0_11, %c0_12, %c0_13] : memref<1x3x2x8x128xf32, #tpu.memory_space<vmem>>, vector<1x3x2x8x128xf32>
      tpu.vector_store %arg9[%c0_9, %c0_10, %c0_11, %c0_12, %c0_13], %13 {strides = array<i32>} : memref<1x3x2x8x128xf32, #tpu.memory_space<vmem>>, vector<1x3x2x8x128xf32>,
      %cst_14 = arith.constant 0.000000e+00 : f32
      %15 = vector.broadcast %cst_14 : f32 to vector<1x3x8x128xf32>
      %c0_15 = arith.constant 0 : index
      %c0_16 = arith.constant 0 : index
      %c0_17 = arith.constant 0 : index
      %c0_18 = arith.constant 0 : index
      %16 = vector.load %arg10[%c0_15, %c0_16, %c0_17, %c0_18] : memref<1x3x8x128xf32, #tpu.memory_space<vmem>>, vector<1x3x8x128xf32>
      tpu.vector_store %arg10[%c0_15, %c0_16, %c0_17, %c0_18], %15 {strides = array<i32>} : memref<1x3x8x128xf32, #tpu.memory_space<vmem>>, vector<1x3x8x128xf32>,
    } else {
    }
    %c0_i32_1 = arith.constant 0 : i32
    %5 = arith.cmpi eq, %1, %c0_i32_1 : i32
    %true = arith.constant true
    %6 = arith.xori %5, %true : i1
    %7 = arith.extui %5 : i1 to i32
    %c0_i32_2 = arith.constant 0 : i32
    %8 = arith.cmpi ne, %7, %c0_i32_2 : i32
    scf.if %8 {
      %11 = tpu.iota {dimensions = array<i32: 0>} : vector<8x128xi32>
      %12 = tpu.iota {dimensions = array<i32: 1>} : vector<8x128xi32>
      %c0_i32_4 = arith.constant 0 : i32
      %13 = vector.broadcast %c0_i32_4 : i32 to vector<8x128xi32>
      %14 = arith.addi %13, %11 : vector<8x128xi32>
      %c128_i32 = arith.constant 128 : i32
      %15 = vector.broadcast %c128_i32 : i32 to vector<8x128xi32>
      %16 = arith.muli %14, %15 : vector<8x128xi32>
      %17 = arith.addi %16, %12 : vector<8x128xi32>
      %c256_i32 = arith.constant 256 : i32
      %18 = vector.broadcast %c256_i32 : i32 to vector<8x128xi32>
      %19 = arith.cmpi slt, %17, %18 : vector<8x128xi32>
      %20 = arith.extui %19 : vector<8x128xi1> to vector<8x128xi32>
      %21 = arith.sitofp %20 : vector<8x128xi32> to vector<8x128xf32>
      %c0 = arith.constant 0 : index
      %c0_5 = arith.constant 0 : index
      %c0_6 = arith.constant 0 : index
      %c0_7 = arith.constant 0 : index
      %22 = vector.load %arg2[%c0, %c0_5, %c0_6, %c0_7] : memref<2x3x8x128xf32, #tpu.memory_space<vmem>>, vector<2x1x8x128xf32>
      %23 = vector.shape_cast %22 : vector<2x1x8x128xf32> to vector<2x8x128xf32>
      %c0_8 = arith.constant 0 : index
      %c1 = arith.constant 1 : index
      %c0_9 = arith.constant 0 : index
      %c0_10 = arith.constant 0 : index
      %24 = vector.load %arg2[%c0_8, %c1, %c0_9, %c0_10] : memref<2x3x8x128xf32, #tpu.memory_space<vmem>>, vector<2x1x8x128xf32>
      %25 = vector.shape_cast %24 : vector<2x1x8x128xf32> to vector<2x8x128xf32>
      %c0_11 = arith.constant 0 : index
      %c2 = arith.constant 2 : index
      %c0_12 = arith.constant 0 : index
      %c0_13 = arith.constant 0 : index
      %26 = vector.load %arg2[%c0_11, %c2, %c0_12, %c0_13] : memref<2x3x8x128xf32, #tpu.memory_space<vmem>>, vector<2x1x8x128xf32>
      %27 = vector.shape_cast %26 : vector<2x1x8x128xf32> to vector<2x8x128xf32>
      %c0_14 = arith.constant 0 : index
      %c0_15 = arith.constant 0 : index
      %c0_16 = arith.constant 0 : index
      %c0_17 = arith.constant 0 : index
      %28 = vector.load %arg3[%c0_14, %c0_15, %c0_16, %c0_17] : memref<2x3x8x128xf32, #tpu.memory_space<vmem>>, vector<2x1x8x128xf32>
      %29 = vector.shape_cast %28 : vector<2x1x8x128xf32> to vector<2x8x128xf32>
      %c0_18 = arith.constant 0 : index
      %c1_19 = arith.constant 1 : index
      %c0_20 = arith.constant 0 : index
      %c0_21 = arith.constant 0 : index
      %30 = vector.load %arg3[%c0_18, %c1_19, %c0_20, %c0_21] : memref<2x3x8x128xf32, #tpu.memory_space<vmem>>, vector<2x1x8x128xf32>
      %31 = vector.shape_cast %30 : vector<2x1x8x128xf32> to vector<2x8x128xf32>
      %c0_22 = arith.constant 0 : index
      %c2_23 = arith.constant 2 : index
      %c0_24 = arith.constant 0 : index
      %c0_25 = arith.constant 0 : index
      %32 = vector.load %arg3[%c0_22, %c2_23, %c0_24, %c0_25] : memref<2x3x8x128xf32, #tpu.memory_space<vmem>>, vector<2x1x8x128xf32>
      %33 = vector.shape_cast %32 : vector<2x1x8x128xf32> to vector<2x8x128xf32>
      %34 = arith.maximumf %23, %25 : vector<2x8x128xf32>
      %35 = arith.maximumf %34, %27 : vector<2x8x128xf32>
      %36 = arith.subf %23, %35 : vector<2x8x128xf32>
      %37 = math.exp %36 : vector<2x8x128xf32>
      %38 = arith.subf %25, %35 : vector<2x8x128xf32>
      %39 = math.exp %38 : vector<2x8x128xf32>
      %40 = arith.subf %27, %35 : vector<2x8x128xf32>
      %41 = math.exp %40 : vector<2x8x128xf32>
      %42 = arith.addf %37, %39 : vector<2x8x128xf32>
      %43 = arith.addf %42, %41 : vector<2x8x128xf32>
      %44 = tpu.reciprocal %43 {approx = true} : vector<2x8x128xf32> -> vector<2x8x128xf32>
      %45 = math.log %43 : vector<2x8x128xf32>
      %46 = arith.subf %23, %35 : vector<2x8x128xf32>
      %47 = arith.subf %46, %45 : vector<2x8x128xf32>
      %48 = arith.subf %25, %35 : vector<2x8x128xf32>
      %49 = arith.subf %48, %45 : vector<2x8x128xf32>
      %50 = arith.subf %27, %35 : vector<2x8x128xf32>
      %51 = arith.subf %50, %45 : vector<2x8x128xf32>
      %cst = arith.constant 6.000000e-01 : f32
      %52 = vector.broadcast %cst : f32 to vector<2x8x128xf32>
      %53 = arith.mulf %52, %29 : vector<2x8x128xf32>
      %54 = arith.mulf %53, %47 : vector<2x8x128xf32>
      %cst_26 = arith.constant 2.000000e-01 : f32
      %55 = vector.broadcast %cst_26 : f32 to vector<2x8x128xf32>
      %56 = arith.mulf %55, %31 : vector<2x8x128xf32>
      %57 = arith.mulf %56, %49 : vector<2x8x128xf32>
      %58 = arith.addf %54, %57 : vector<2x8x128xf32>
      %cst_27 = arith.constant 2.000000e-01 : f32
      %59 = vector.broadcast %cst_27 : f32 to vector<2x8x128xf32>
      %60 = arith.mulf %59, %33 : vector<2x8x128xf32>
      %61 = arith.mulf %60, %51 : vector<2x8x128xf32>
      %62 = arith.addf %58, %61 : vector<2x8x128xf32>
      %cst_28 = arith.constant 0.000000e+00 : f32
      %63 = vector.broadcast %cst_28 : f32 to vector<2x8x128xf32>
      %64 = arith.subf %63, %62 : vector<2x8x128xf32>
      %cst_29 = arith.constant 0.000000e+00 : f32
      %65 = vector.broadcast %cst_29 : f32 to vector<2x8x128xf32>
      %66 = arith.subf %65, %64 : vector<2x8x128xf32>
      %67 = math.exp %66 : vector<2x8x128xf32>
      %cst_30 = arith.constant 1.000000e+00 : f32
      %68 = vector.broadcast %cst_30 : f32 to vector<2x8x128xf32>
      %69 = arith.subf %68, %67 : vector<2x8x128xf32>
      %70 = arith.mulf %69, %69 : vector<2x8x128xf32>
      %71 = arith.mulf %70, %64 : vector<2x8x128xf32>
      %72 = arith.mulf %37, %44 : vector<2x8x128xf32>
      %73 = arith.mulf %39, %44 : vector<2x8x128xf32>
      %74 = arith.mulf %41, %44 : vector<2x8x128xf32>
      %75 = vector.shape_cast %21 : vector<8x128xf32> to vector<1x8x128xf32>
      %76 = vector.broadcast %75 : vector<1x8x128xf32> to vector<2x8x128xf32>
      %77 = arith.mulf %72, %76 : vector<2x8x128xf32>
      %78 = vector.shape_cast %21 : vector<8x128xf32> to vector<1x8x128xf32>
      %79 = vector.broadcast %78 : vector<1x8x128xf32> to vector<2x8x128xf32>
      %80 = arith.mulf %73, %79 : vector<2x8x128xf32>
      %81 = vector.shape_cast %21 : vector<8x128xf32> to vector<1x8x128xf32>
      %82 = vector.broadcast %81 : vector<1x8x128xf32> to vector<2x8x128xf32>
      %83 = arith.mulf %74, %82 : vector<2x8x128xf32>
      %c0_31 = arith.constant 0 : index
      %c0_32 = arith.constant 0 : index
      %c0_33 = arith.constant 0 : index
      %c0_34 = arith.constant 0 : index
      %c0_35 = arith.constant 0 : index
      %84 = vector.load %arg8[%c0_31, %c0_32, %c0_33, %c0_34, %c0_35] : memref<1x3x3x8x128xf32, #tpu.memory_space<vmem>>, vector<1x1x1x8x128xf32>
      %85 = vector.shape_cast %84 : vector<1x1x1x8x128xf32> to vector<8x128xf32>
      %86 = arith.mulf %29, %77 : vector<2x8x128xf32>
      %cst_36 = arith.constant dense<0.000000e+00> : vector<8x128xf32>
      %87 = vector.multi_reduction <add>, %86, %cst_36 [0] : vector<2x8x128xf32> to vector<8x128xf32>
      %88 = vector.shape_cast %87 : vector<8x128xf32> to vector<1x8x128xf32>
      %cst_37 = arith.constant dense<0.000000e+00> : vector<8x128xf32>
      %89 = vector.multi_reduction <add>, %88, %cst_37 [0] : vector<1x8x128xf32> to vector<8x128xf32>
      %90 = arith.addf %85, %89 : vector<8x128xf32>
      %c0_38 = arith.constant 0 : index
      %c0_39 = arith.constant 0 : index
      %c0_40 = arith.constant 0 : index
      %c0_41 = arith.constant 0 : index
      %c0_42 = arith.constant 0 : index
      %91 = vector.load %arg8[%c0_38, %c0_39, %c0_40, %c0_41, %c0_42] : memref<1x3x3x8x128xf32, #tpu.memory_space<vmem>>, vector<1x1x1x8x128xf32>
      %92 = vector.shape_cast %91 : vector<1x1x1x8x128xf32> to vector<8x128xf32>
      %93 = vector.shape_cast %90 : vector<8x128xf32> to vector<1x1x1x8x128xf32>
      tpu.vector_store %arg8[%c0_38, %c0_39, %c0_40, %c0_41, %c0_42], %93 {strides = array<i32>} : memref<1x3x3x8x128xf32, #tpu.memory_space<vmem>>, vector<1x1x1x8x128xf32>,
      %c0_43 = arith.constant 0 : index
      %c1_44 = arith.constant 1 : index
      %c0_45 = arith.constant 0 : index
      %c0_46 = arith.constant 0 : index
      %c0_47 = arith.constant 0 : index
      %94 = vector.load %arg8[%c0_43, %c1_44, %c0_45, %c0_46, %c0_47] : memref<1x3x3x8x128xf32, #tpu.memory_space<vmem>>, vector<1x1x1x8x128xf32>
      %95 = vector.shape_cast %94 : vector<1x1x1x8x128xf32> to vector<8x128xf32>
      %96 = arith.addf %29, %77 : vector<2x8x128xf32>
      %cst_48 = arith.constant dense<0.000000e+00> : vector<8x128xf32>
      %97 = vector.multi_reduction <add>, %96, %cst_48 [0] : vector<2x8x128xf32> to vector<8x128xf32>
      %98 = vector.shape_cast %97 : vector<8x128xf32> to vector<1x8x128xf32>
      %cst_49 = arith.constant dense<0.000000e+00> : vector<8x128xf32>
      %99 = vector.multi_reduction <add>, %98, %cst_49 [0] : vector<1x8x128xf32> to vector<8x128xf32>
      %100 = arith.addf %95, %99 : vector<8x128xf32>
      %c0_50 = arith.constant 0 : index
      %c1_51 = arith.constant 1 : index
      %c0_52 = arith.constant 0 : index
      %c0_53 = arith.constant 0 : index
      %c0_54 = arith.constant 0 : index
      %101 = vector.load %arg8[%c0_50, %c1_51, %c0_52, %c0_53, %c0_54] : memref<1x3x3x8x128xf32, #tpu.memory_space<vmem>>, vector<1x1x1x8x128xf32>
      %102 = vector.shape_cast %101 : vector<1x1x1x8x128xf32> to vector<8x128xf32>
      %103 = vector.shape_cast %100 : vector<8x128xf32> to vector<1x1x1x8x128xf32>
      tpu.vector_store %arg8[%c0_50, %c1_51, %c0_52, %c0_53, %c0_54], %103 {strides = array<i32>} : memref<1x3x3x8x128xf32, #tpu.memory_space<vmem>>, vector<1x1x1x8x128xf32>,
      %c0_55 = arith.constant 0 : index
      %c2_56 = arith.constant 2 : index
      %c0_57 = arith.constant 0 : index
      %c0_58 = arith.constant 0 : index
      %c0_59 = arith.constant 0 : index
      %104 = vector.load %arg8[%c0_55, %c2_56, %c0_57, %c0_58, %c0_59] : memref<1x3x3x8x128xf32, #tpu.memory_space<vmem>>, vector<1x1x1x8x128xf32>
      %105 = vector.shape_cast %104 : vector<1x1x1x8x128xf32> to vector<8x128xf32>
      %cst_60 = arith.constant dense<0.000000e+00> : vector<8x128xf32>
      %106 = vector.multi_reduction <add>, %29, %cst_60 [0] : vector<2x8x128xf32> to vector<8x128xf32>
      %107 = vector.shape_cast %106 : vector<8x128xf32> to vector<1x8x128xf32>
      %cst_61 = arith.constant dense<0.000000e+00> : vector<8x128xf32>
      %108 = vector.multi_reduction <add>, %107, %cst_61 [0] : vector<1x8x128xf32> to vector<8x128xf32>
      %109 = arith.addf %105, %108 : vector<8x128xf32>
      %c0_62 = arith.constant 0 : index
      %c2_63 = arith.constant 2 : index
      %c0_64 = arith.constant 0 : index
      %c0_65 = arith.constant 0 : index
      %c0_66 = arith.constant 0 : index
      %110 = vector.load %arg8[%c0_62, %c2_63, %c0_64, %c0_65, %c0_66] : memref<1x3x3x8x128xf32, #tpu.memory_space<vmem>>, vector<1x1x1x8x128xf32>
      %111 = vector.shape_cast %110 : vector<1x1x1x8x128xf32> to vector<8x128xf32>
      %112 = vector.shape_cast %109 : vector<8x128xf32> to vector<1x1x1x8x128xf32>
      tpu.vector_store %arg8[%c0_62, %c2_63, %c0_64, %c0_65, %c0_66], %112 {strides = array<i32>} : memref<1x3x3x8x128xf32, #tpu.memory_space<vmem>>, vector<1x1x1x8x128xf32>,
      %c0_67 = arith.constant 0 : index
      %c0_68 = arith.constant 0 : index
      %c1_69 = arith.constant 1 : index
      %c0_70 = arith.constant 0 : index
      %c0_71 = arith.constant 0 : index
      %113 = vector.load %arg8[%c0_67, %c0_68, %c1_69, %c0_70, %c0_71] : memref<1x3x3x8x128xf32, #tpu.memory_space<vmem>>, vector<1x1x1x8x128xf32>
      %114 = vector.shape_cast %113 : vector<1x1x1x8x128xf32> to vector<8x128xf32>
      %115 = arith.mulf %31, %80 : vector<2x8x128xf32>
      %cst_72 = arith.constant dense<0.000000e+00> : vector<8x128xf32>
      %116 = vector.multi_reduction <add>, %115, %cst_72 [0] : vector<2x8x128xf32> to vector<8x128xf32>
      %117 = vector.shape_cast %116 : vector<8x128xf32> to vector<1x8x128xf32>
      %cst_73 = arith.constant dense<0.000000e+00> : vector<8x128xf32>
      %118 = vector.multi_reduction <add>, %117, %cst_73 [0] : vector<1x8x128xf32> to vector<8x128xf32>
      %119 = arith.addf %114, %118 : vector<8x128xf32>
      %c0_74 = arith.constant 0 : index
      %c0_75 = arith.constant 0 : index
      %c1_76 = arith.constant 1 : index
      %c0_77 = arith.constant 0 : index
      %c0_78 = arith.constant 0 : index
      %120 = vector.load %arg8[%c0_74, %c0_75, %c1_76, %c0_77, %c0_78] : memref<1x3x3x8x128xf32, #tpu.memory_space<vmem>>, vector<1x1x1x8x128xf32>
      %121 = vector.shape_cast %120 : vector<1x1x1x8x128xf32> to vector<8x128xf32>
      %122 = vector.shape_cast %119 : vector<8x128xf32> to vector<1x1x1x8x128xf32>
      tpu.vector_store %arg8[%c0_74, %c0_75, %c1_76, %c0_77, %c0_78], %122 {strides = array<i32>} : memref<1x3x3x8x128xf32, #tpu.memory_space<vmem>>, vector<1x1x1x8x128xf32>,
      %c0_79 = arith.constant 0 : index
      %c1_80 = arith.constant 1 : index
      %c1_81 = arith.constant 1 : index
      %c0_82 = arith.constant 0 : index
      %c0_83 = arith.constant 0 : index
      %123 = vector.load %arg8[%c0_79, %c1_80, %c1_81, %c0_82, %c0_83] : memref<1x3x3x8x128xf32, #tpu.memory_space<vmem>>, vector<1x1x1x8x128xf32>
      %124 = vector.shape_cast %123 : vector<1x1x1x8x128xf32> to vector<8x128xf32>
      %125 = arith.addf %31, %80 : vector<2x8x128xf32>
      %cst_84 = arith.constant dense<0.000000e+00> : vector<8x128xf32>
      %126 = vector.multi_reduction <add>, %125, %cst_84 [0] : vector<2x8x128xf32> to vector<8x128xf32>
      %127 = vector.shape_cast %126 : vector<8x128xf32> to vector<1x8x128xf32>
      %cst_85 = arith.constant dense<0.000000e+00> : vector<8x128xf32>
      %128 = vector.multi_reduction <add>, %127, %cst_85 [0] : vector<1x8x128xf32> to vector<8x128xf32>
      %129 = arith.addf %124, %128 : vector<8x128xf32>
      %c0_86 = arith.constant 0 : index
      %c1_87 = arith.constant 1 : index
      %c1_88 = arith.constant 1 : index
      %c0_89 = arith.constant 0 : index
      %c0_90 = arith.constant 0 : index
      %130 = vector.load %arg8[%c0_86, %c1_87, %c1_88, %c0_89, %c0_90] : memref<1x3x3x8x128xf32, #tpu.memory_space<vmem>>, vector<1x1x1x8x128xf32>
      %131 = vector.shape_cast %130 : vector<1x1x1x8x128xf32> to vector<8x128xf32>
      %132 = vector.shape_cast %129 : vector<8x128xf32> to vector<1x1x1x8x128xf32>
      tpu.vector_store %arg8[%c0_86, %c1_87, %c1_88, %c0_89, %c0_90], %132 {strides = array<i32>} : memref<1x3x3x8x128xf32, #tpu.memory_space<vmem>>, vector<1x1x1x8x128xf32>,
      %c0_91 = arith.constant 0 : index
      %c2_92 = arith.constant 2 : index
      %c1_93 = arith.constant 1 : index
      %c0_94 = arith.constant 0 : index
      %c0_95 = arith.constant 0 : index
      %133 = vector.load %arg8[%c0_91, %c2_92, %c1_93, %c0_94, %c0_95] : memref<1x3x3x8x128xf32, #tpu.memory_space<vmem>>, vector<1x1x1x8x128xf32>
      %134 = vector.shape_cast %133 : vector<1x1x1x8x128xf32> to vector<8x128xf32>
      %cst_96 = arith.constant dense<0.000000e+00> : vector<8x128xf32>
      %135 = vector.multi_reduction <add>, %31, %cst_96 [0] : vector<2x8x128xf32> to vector<8x128xf32>
      %136 = vector.shape_cast %135 : vector<8x128xf32> to vector<1x8x128xf32>
      %cst_97 = arith.constant dense<0.000000e+00> : vector<8x128xf32>
      %137 = vector.multi_reduction <add>, %136, %cst_97 [0] : vector<1x8x128xf32> to vector<8x128xf32>
      %138 = arith.addf %134, %137 : vector<8x128xf32>
      %c0_98 = arith.constant 0 : index
      %c2_99 = arith.constant 2 : index
      %c1_100 = arith.constant 1 : index
      %c0_101 = arith.constant 0 : index
      %c0_102 = arith.constant 0 : index
      %139 = vector.load %arg8[%c0_98, %c2_99, %c1_100, %c0_101, %c0_102] : memref<1x3x3x8x128xf32, #tpu.memory_space<vmem>>, vector<1x1x1x8x128xf32>
      %140 = vector.shape_cast %139 : vector<1x1x1x8x128xf32> to vector<8x128xf32>
      %141 = vector.shape_cast %138 : vector<8x128xf32> to vector<1x1x1x8x128xf32>
      tpu.vector_store %arg8[%c0_98, %c2_99, %c1_100, %c0_101, %c0_102], %141 {strides = array<i32>} : memref<1x3x3x8x128xf32, #tpu.memory_space<vmem>>, vector<1x1x1x8x128xf32>,
      %c0_103 = arith.constant 0 : index
      %c0_104 = arith.constant 0 : index
      %c2_105 = arith.constant 2 : index
      %c0_106 = arith.constant 0 : index
      %c0_107 = arith.constant 0 : index
      %142 = vector.load %arg8[%c0_103, %c0_104, %c2_105, %c0_106, %c0_107] : memref<1x3x3x8x128xf32, #tpu.memory_space<vmem>>, vector<1x1x1x8x128xf32>
      %143 = vector.shape_cast %142 : vector<1x1x1x8x128xf32> to vector<8x128xf32>
      %144 = arith.mulf %33, %83 : vector<2x8x128xf32>
      %cst_108 = arith.constant dense<0.000000e+00> : vector<8x128xf32>
      %145 = vector.multi_reduction <add>, %144, %cst_108 [0] : vector<2x8x128xf32> to vector<8x128xf32>
      %146 = vector.shape_cast %145 : vector<8x128xf32> to vector<1x8x128xf32>
      %cst_109 = arith.constant dense<0.000000e+00> : vector<8x128xf32>
      %147 = vector.multi_reduction <add>, %146, %cst_109 [0] : vector<1x8x128xf32> to vector<8x128xf32>
      %148 = arith.addf %143, %147 : vector<8x128xf32>
      %c0_110 = arith.constant 0 : index
      %c0_111 = arith.constant 0 : index
      %c2_112 = arith.constant 2 : index
      %c0_113 = arith.constant 0 : index
      %c0_114 = arith.constant 0 : index
      %149 = vector.load %arg8[%c0_110, %c0_111, %c2_112, %c0_113, %c0_114] : memref<1x3x3x8x128xf32, #tpu.memory_space<vmem>>, vector<1x1x1x8x128xf32>
      %150 = vector.shape_cast %149 : vector<1x1x1x8x128xf32> to vector<8x128xf32>
      %151 = vector.shape_cast %148 : vector<8x128xf32> to vector<1x1x1x8x128xf32>
      tpu.vector_store %arg8[%c0_110, %c0_111, %c2_112, %c0_113, %c0_114], %151 {strides = array<i32>} : memref<1x3x3x8x128xf32, #tpu.memory_space<vmem>>, vector<1x1x1x8x128xf32>,
      %c0_115 = arith.constant 0 : index
      %c1_116 = arith.constant 1 : index
      %c2_117 = arith.constant 2 : index
      %c0_118 = arith.constant 0 : index
      %c0_119 = arith.constant 0 : index
      %152 = vector.load %arg8[%c0_115, %c1_116, %c2_117, %c0_118, %c0_119] : memref<1x3x3x8x128xf32, #tpu.memory_space<vmem>>, vector<1x1x1x8x128xf32>
      %153 = vector.shape_cast %152 : vector<1x1x1x8x128xf32> to vector<8x128xf32>
      %154 = arith.addf %33, %83 : vector<2x8x128xf32>
      %cst_120 = arith.constant dense<0.000000e+00> : vector<8x128xf32>
      %155 = vector.multi_reduction <add>, %154, %cst_120 [0] : vector<2x8x128xf32> to vector<8x128xf32>
      %156 = vector.shape_cast %155 : vector<8x128xf32> to vector<1x8x128xf32>
      %cst_121 = arith.constant dense<0.000000e+00> : vector<8x128xf32>
      %157 = vector.multi_reduction <add>, %156, %cst_121 [0] : vector<1x8x128xf32> to vector<8x128xf32>
      %158 = arith.addf %153, %157 : vector<8x128xf32>
      %c0_122 = arith.constant 0 : index
      %c1_123 = arith.constant 1 : index
      %c2_124 = arith.constant 2 : index
      %c0_125 = arith.constant 0 : index
      %c0_126 = arith.constant 0 : index
      %159 = vector.load %arg8[%c0_122, %c1_123, %c2_124, %c0_125, %c0_126] : memref<1x3x3x8x128xf32, #tpu.memory_space<vmem>>, vector<1x1x1x8x128xf32>
      %160 = vector.shape_cast %159 : vector<1x1x1x8x128xf32> to vector<8x128xf32>
      %161 = vector.shape_cast %158 : vector<8x128xf32> to vector<1x1x1x8x128xf32>
      tpu.vector_store %arg8[%c0_122, %c1_123, %c2_124, %c0_125, %c0_126], %161 {strides = array<i32>} : memref<1x3x3x8x128xf32, #tpu.memory_space<vmem>>, vector<1x1x1x8x128xf32>,
      %c0_127 = arith.constant 0 : index
      %c2_128 = arith.constant 2 : index
      %c2_129 = arith.constant 2 : index
      %c0_130 = arith.constant 0 : index
      %c0_131 = arith.constant 0 : index
      %162 = vector.load %arg8[%c0_127, %c2_128, %c2_129, %c0_130, %c0_131] : memref<1x3x3x8x128xf32, #tpu.memory_space<vmem>>, vector<1x1x1x8x128xf32>
      %163 = vector.shape_cast %162 : vector<1x1x1x8x128xf32> to vector<8x128xf32>
      %cst_132 = arith.constant dense<0.000000e+00> : vector<8x128xf32>
      %164 = vector.multi_reduction <add>, %33, %cst_132 [0] : vector<2x8x128xf32> to vector<8x128xf32>
      %165 = vector.shape_cast %164 : vector<8x128xf32> to vector<1x8x128xf32>
      %cst_133 = arith.constant dense<0.000000e+00> : vector<8x128xf32>
      %166 = vector.multi_reduction <add>, %165, %cst_133 [0] : vector<1x8x128xf32> to vector<8x128xf32>
      %167 = arith.addf %163, %166 : vector<8x128xf32>
      %c0_134 = arith.constant 0 : index
      %c2_135 = arith.constant 2 : index
      %c2_136 = arith.constant 2 : index
      %c0_137 = arith.constant 0 : index
      %c0_138 = arith.constant 0 : index
      %168 = vector.load %arg8[%c0_134, %c2_135, %c2_136, %c0_137, %c0_138] : memref<1x3x3x8x128xf32, #tpu.memory_space<vmem>>, vector<1x1x1x8x128xf32>
      %169 = vector.shape_cast %168 : vector<1x1x1x8x128xf32> to vector<8x128xf32>
      %170 = vector.shape_cast %167 : vector<8x128xf32> to vector<1x1x1x8x128xf32>
      tpu.vector_store %arg8[%c0_134, %c2_135, %c2_136, %c0_137, %c0_138], %170 {strides = array<i32>} : memref<1x3x3x8x128xf32, #tpu.memory_space<vmem>>, vector<1x1x1x8x128xf32>,
      %cst_139 = arith.constant 0.000000e+00 : f32
      %171 = vector.broadcast %cst_139 : f32 to vector<8x128xf32>
      %c0_140 = arith.constant 0 : index
      %c0_141 = arith.constant 0 : index
      %c0_142 = arith.constant 0 : index
      %c0_143 = arith.constant 0 : index
      %172 = vector.load %arg4[%c0_140, %c0_141, %c0_142, %c0_143] : memref<2x2x8x128xf32, #tpu.memory_space<vmem>>, vector<2x1x8x128xf32>
      %173 = vector.shape_cast %172 : vector<2x1x8x128xf32> to vector<2x8x128xf32>
      %c0_144 = arith.constant 0 : index
      %c0_145 = arith.constant 0 : index
      %c0_146 = arith.constant 0 : index
      %c0_147 = arith.constant 0 : index
      %174 = vector.load %arg5[%c0_144, %c0_145, %c0_146, %c0_147] : memref<2x2x8x128xf32, #tpu.memory_space<vmem>>, vector<2x1x8x128xf32>
      %175 = vector.shape_cast %174 : vector<2x1x8x128xf32> to vector<2x8x128xf32>
      %cst_148 = arith.constant 0.000000e+00 : f32
      %176 = vector.broadcast %cst_148 : f32 to vector<2x8x128xf32>
      %177 = arith.maximumf %173, %176 : vector<2x8x128xf32>
      %178 = math.absf %173 : vector<2x8x128xf32>
      %cst_149 = arith.constant 0.000000e+00 : f32
      %179 = vector.broadcast %cst_149 : f32 to vector<2x8x128xf32>
      %180 = arith.subf %179, %178 : vector<2x8x128xf32>
      %181 = math.exp %180 : vector<2x8x128xf32>
      %cst_150 = arith.constant 1.000000e+00 : f32
      %182 = vector.broadcast %cst_150 : f32 to vector<2x8x128xf32>
      %183 = arith.addf %182, %181 : vector<2x8x128xf32>
      %184 = math.log %183 : vector<2x8x128xf32>
      %185 = arith.addf %177, %184 : vector<2x8x128xf32>
      %186 = arith.subf %173, %185 : vector<2x8x128xf32>
      %cst_151 = arith.constant -1.000000e+02 : f32
      %187 = vector.broadcast %cst_151 : f32 to vector<2x8x128xf32>
      %188 = arith.maximumf %186, %187 : vector<2x8x128xf32>
      %cst_152 = arith.constant 0.000000e+00 : f32
      %189 = vector.broadcast %cst_152 : f32 to vector<2x8x128xf32>
      %190 = arith.subf %189, %185 : vector<2x8x128xf32>
      %cst_153 = arith.constant -1.000000e+02 : f32
      %191 = vector.broadcast %cst_153 : f32 to vector<2x8x128xf32>
      %192 = arith.maximumf %190, %191 : vector<2x8x128xf32>
      %193 = math.exp %188 : vector<2x8x128xf32>
      %194 = arith.mulf %175, %188 : vector<2x8x128xf32>
      %cst_154 = arith.constant 1.000000e+00 : f32
      %195 = vector.broadcast %cst_154 : f32 to vector<2x8x128xf32>
      %196 = arith.subf %195, %175 : vector<2x8x128xf32>
      %197 = arith.mulf %196, %192 : vector<2x8x128xf32>
      %198 = arith.addf %194, %197 : vector<2x8x128xf32>
      %cst_155 = arith.constant 0.000000e+00 : f32
      %199 = vector.broadcast %cst_155 : f32 to vector<2x8x128xf32>
      %200 = arith.subf %199, %198 : vector<2x8x128xf32>
      %cst_156 = arith.constant 0.000000e+00 : f32
      %201 = vector.broadcast %cst_156 : f32 to vector<2x8x128xf32>
      %202 = arith.subf %201, %200 : vector<2x8x128xf32>
      %203 = math.exp %202 : vector<2x8x128xf32>
      %cst_157 = arith.constant 1.000000e+00 : f32
      %204 = vector.broadcast %cst_157 : f32 to vector<2x8x128xf32>
      %205 = arith.subf %204, %203 : vector<2x8x128xf32>
      %206 = arith.mulf %205, %205 : vector<2x8x128xf32>
      %207 = arith.mulf %206, %200 : vector<2x8x128xf32>
      %cst_158 = arith.constant 5.000000e-01 : f32
      %208 = vector.broadcast %cst_158 : f32 to vector<2x8x128xf32>
      %209 = arith.mulf %208, %175 : vector<2x8x128xf32>
      %cst_159 = arith.constant 7.500000e-01 : f32
      %210 = vector.broadcast %cst_159 : f32 to vector<2x8x128xf32>
      %211 = arith.subf %210, %209 : vector<2x8x128xf32>
      %212 = arith.mulf %207, %211 : vector<2x8x128xf32>
      %213 = vector.shape_cast %21 : vector<8x128xf32> to vector<1x8x128xf32>
      %214 = vector.broadcast %213 : vector<1x8x128xf32> to vector<2x8x128xf32>
      %215 = arith.mulf %212, %214 : vector<2x8x128xf32>
      %216 = vector.shape_cast %21 : vector<8x128xf32> to vector<1x8x128xf32>
      %217 = vector.broadcast %216 : vector<1x8x128xf32> to vector<2x8x128xf32>
      %218 = arith.mulf %193, %217 : vector<2x8x128xf32>
      %cst_160 = arith.constant dense<0.000000e+00> : vector<8x128xf32>
      %219 = vector.multi_reduction <add>, %215, %cst_160 [0] : vector<2x8x128xf32> to vector<8x128xf32>
      %220 = vector.shape_cast %219 : vector<8x128xf32> to vector<1x8x128xf32>
      %cst_161 = arith.constant dense<0.000000e+00> : vector<8x128xf32>
      %221 = vector.multi_reduction <add>, %220, %cst_161 [0] : vector<1x8x128xf32> to vector<8x128xf32>
      %222 = arith.addf %171, %221 : vector<8x128xf32>
      %c0_162 = arith.constant 0 : index
      %c0_163 = arith.constant 0 : index
      %c0_164 = arith.constant 0 : index
      %c0_165 = arith.constant 0 : index
      %c0_166 = arith.constant 0 : index
      %223 = vector.load %arg9[%c0_162, %c0_163, %c0_164, %c0_165, %c0_166] : memref<1x3x2x8x128xf32, #tpu.memory_space<vmem>>, vector<1x1x1x8x128xf32>
      %224 = vector.shape_cast %223 : vector<1x1x1x8x128xf32> to vector<8x128xf32>
      %225 = arith.mulf %175, %218 : vector<2x8x128xf32>
      %cst_167 = arith.constant dense<0.000000e+00> : vector<8x128xf32>
      %226 = vector.multi_reduction <add>, %225, %cst_167 [0] : vector<2x8x128xf32> to vector<8x128xf32>
      %227 = vector.shape_cast %226 : vector<8x128xf32> to vector<1x8x128xf32>
      %cst_168 = arith.constant dense<0.000000e+00> : vector<8x128xf32>
      %228 = vector.multi_reduction <add>, %227, %cst_168 [0] : vector<1x8x128xf32> to vector<8x128xf32>
      %229 = arith.addf %224, %228 : vector<8x128xf32>
      %c0_169 = arith.constant 0 : index
      %c0_170 = arith.constant 0 : index
      %c0_171 = arith.constant 0 : index
      %c0_172 = arith.constant 0 : index
      %c0_173 = arith.constant 0 : index
      %230 = vector.load %arg9[%c0_169, %c0_170, %c0_171, %c0_172, %c0_173] : memref<1x3x2x8x128xf32, #tpu.memory_space<vmem>>, vector<1x1x1x8x128xf32>
      %231 = vector.shape_cast %230 : vector<1x1x1x8x128xf32> to vector<8x128xf32>
      %232 = vector.shape_cast %229 : vector<8x128xf32> to vector<1x1x1x8x128xf32>
      tpu.vector_store %arg9[%c0_169, %c0_170, %c0_171, %c0_172, %c0_173], %232 {strides = array<i32>} : memref<1x3x2x8x128xf32, #tpu.memory_space<vmem>>, vector<1x1x1x8x128xf32>,
      %c0_174 = arith.constant 0 : index
      %c1_175 = arith.constant 1 : index
      %c0_176 = arith.constant 0 : index
      %c0_177 = arith.constant 0 : index
      %c0_178 = arith.constant 0 : index
      %233 = vector.load %arg9[%c0_174, %c1_175, %c0_176, %c0_177, %c0_178] : memref<1x3x2x8x128xf32, #tpu.memory_space<vmem>>, vector<1x1x1x8x128xf32>
      %234 = vector.shape_cast %233 : vector<1x1x1x8x128xf32> to vector<8x128xf32>
      %235 = arith.addf %175, %218 : vector<2x8x128xf32>
      %cst_179 = arith.constant dense<0.000000e+00> : vector<8x128xf32>
      %236 = vector.multi_reduction <add>, %235, %cst_179 [0] : vector<2x8x128xf32> to vector<8x128xf32>
      %237 = vector.shape_cast %236 : vector<8x128xf32> to vector<1x8x128xf32>
      %cst_180 = arith.constant dense<0.000000e+00> : vector<8x128xf32>
      %238 = vector.multi_reduction <add>, %237, %cst_180 [0] : vector<1x8x128xf32> to vector<8x128xf32>
      %239 = arith.addf %234, %238 : vector<8x128xf32>
      %c0_181 = arith.constant 0 : index
      %c1_182 = arith.constant 1 : index
      %c0_183 = arith.constant 0 : index
      %c0_184 = arith.constant 0 : index
      %c0_185 = arith.constant 0 : index
      %240 = vector.load %arg9[%c0_181, %c1_182, %c0_183, %c0_184, %c0_185] : memref<1x3x2x8x128xf32, #tpu.memory_space<vmem>>, vector<1x1x1x8x128xf32>
      %241 = vector.shape_cast %240 : vector<1x1x1x8x128xf32> to vector<8x128xf32>
      %242 = vector.shape_cast %239 : vector<8x128xf32> to vector<1x1x1x8x128xf32>
      tpu.vector_store %arg9[%c0_181, %c1_182, %c0_183, %c0_184, %c0_185], %242 {strides = array<i32>} : memref<1x3x2x8x128xf32, #tpu.memory_space<vmem>>, vector<1x1x1x8x128xf32>,
      %c0_186 = arith.constant 0 : index
      %c2_187 = arith.constant 2 : index
      %c0_188 = arith.constant 0 : index
      %c0_189 = arith.constant 0 : index
      %c0_190 = arith.constant 0 : index
      %243 = vector.load %arg9[%c0_186, %c2_187, %c0_188, %c0_189, %c0_190] : memref<1x3x2x8x128xf32, #tpu.memory_space<vmem>>, vector<1x1x1x8x128xf32>
      %244 = vector.shape_cast %243 : vector<1x1x1x8x128xf32> to vector<8x128xf32>
      %cst_191 = arith.constant dense<0.000000e+00> : vector<8x128xf32>
      %245 = vector.multi_reduction <add>, %175, %cst_191 [0] : vector<2x8x128xf32> to vector<8x128xf32>
      %246 = vector.shape_cast %245 : vector<8x128xf32> to vector<1x8x128xf32>
      %cst_192 = arith.constant dense<0.000000e+00> : vector<8x128xf32>
      %247 = vector.multi_reduction <add>, %246, %cst_192 [0] : vector<1x8x128xf32> to vector<8x128xf32>
      %248 = arith.addf %244, %247 : vector<8x128xf32>
      %c0_193 = arith.constant 0 : index
      %c2_194 = arith.constant 2 : index
      %c0_195 = arith.constant 0 : index
      %c0_196 = arith.constant 0 : index
      %c0_197 = arith.constant 0 : index
      %249 = vector.load %arg9[%c0_193, %c2_194, %c0_195, %c0_196, %c0_197] : memref<1x3x2x8x128xf32, #tpu.memory_space<vmem>>, vector<1x1x1x8x128xf32>
      %250 = vector.shape_cast %249 : vector<1x1x1x8x128xf32> to vector<8x128xf32>
      %251 = vector.shape_cast %248 : vector<8x128xf32> to vector<1x1x1x8x128xf32>
      tpu.vector_store %arg9[%c0_193, %c2_194, %c0_195, %c0_196, %c0_197], %251 {strides = array<i32>} : memref<1x3x2x8x128xf32, #tpu.memory_space<vmem>>, vector<1x1x1x8x128xf32>,
      %c0_198 = arith.constant 0 : index
      %c1_199 = arith.constant 1 : index
      %c0_200 = arith.constant 0 : index
      %c0_201 = arith.constant 0 : index
      %252 = vector.load %arg4[%c0_198, %c1_199, %c0_200, %c0_201] : memref<2x2x8x128xf32, #tpu.memory_space<vmem>>, vector<2x1x8x128xf32>
      %253 = vector.shape_cast %252 : vector<2x1x8x128xf32> to vector<2x8x128xf32>
      %c0_202 = arith.constant 0 : index
      %c1_203 = arith.constant 1 : index
      %c0_204 = arith.constant 0 : index
      %c0_205 = arith.constant 0 : index
      %254 = vector.load %arg5[%c0_202, %c1_203, %c0_204, %c0_205] : memref<2x2x8x128xf32, #tpu.memory_space<vmem>>, vector<2x1x8x128xf32>
      %255 = vector.shape_cast %254 : vector<2x1x8x128xf32> to vector<2x8x128xf32>
      %cst_206 = arith.constant 0.000000e+00 : f32
      %256 = vector.broadcast %cst_206 : f32 to vector<2x8x128xf32>
      %257 = arith.maximumf %253, %256 : vector<2x8x128xf32>
      %258 = math.absf %253 : vector<2x8x128xf32>
      %cst_207 = arith.constant 0.000000e+00 : f32
      %259 = vector.broadcast %cst_207 : f32 to vector<2x8x128xf32>
      %260 = arith.subf %259, %258 : vector<2x8x128xf32>
      %261 = math.exp %260 : vector<2x8x128xf32>
      %cst_208 = arith.constant 1.000000e+00 : f32
      %262 = vector.broadcast %cst_208 : f32 to vector<2x8x128xf32>
      %263 = arith.addf %262, %261 : vector<2x8x128xf32>
      %264 = math.log %263 : vector<2x8x128xf32>
      %265 = arith.addf %257, %264 : vector<2x8x128xf32>
      %266 = arith.subf %253, %265 : vector<2x8x128xf32>
      %cst_209 = arith.constant -1.000000e+02 : f32
      %267 = vector.broadcast %cst_209 : f32 to vector<2x8x128xf32>
      %268 = arith.maximumf %266, %267 : vector<2x8x128xf32>
      %cst_210 = arith.constant 0.000000e+00 : f32
      %269 = vector.broadcast %cst_210 : f32 to vector<2x8x128xf32>
      %270 = arith.subf %269, %265 : vector<2x8x128xf32>
      %cst_211 = arith.constant -1.000000e+02 : f32
      %271 = vector.broadcast %cst_211 : f32 to vector<2x8x128xf32>
      %272 = arith.maximumf %270, %271 : vector<2x8x128xf32>
      %273 = math.exp %268 : vector<2x8x128xf32>
      %274 = arith.mulf %255, %268 : vector<2x8x128xf32>
      %cst_212 = arith.constant 1.000000e+00 : f32
      %275 = vector.broadcast %cst_212 : f32 to vector<2x8x128xf32>
      %276 = arith.subf %275, %255 : vector<2x8x128xf32>
      %277 = arith.mulf %276, %272 : vector<2x8x128xf32>
      %278 = arith.addf %274, %277 : vector<2x8x128xf32>
      %cst_213 = arith.constant 0.000000e+00 : f32
      %279 = vector.broadcast %cst_213 : f32 to vector<2x8x128xf32>
      %280 = arith.subf %279, %278 : vector<2x8x128xf32>
      %cst_214 = arith.constant 0.000000e+00 : f32
      %281 = vector.broadcast %cst_214 : f32 to vector<2x8x128xf32>
      %282 = arith.subf %281, %280 : vector<2x8x128xf32>
      %283 = math.exp %282 : vector<2x8x128xf32>
      %cst_215 = arith.constant 1.000000e+00 : f32
      %284 = vector.broadcast %cst_215 : f32 to vector<2x8x128xf32>
      %285 = arith.subf %284, %283 : vector<2x8x128xf32>
      %286 = arith.mulf %285, %285 : vector<2x8x128xf32>
      %287 = arith.mulf %286, %280 : vector<2x8x128xf32>
      %cst_216 = arith.constant 5.000000e-01 : f32
      %288 = vector.broadcast %cst_216 : f32 to vector<2x8x128xf32>
      %289 = arith.mulf %288, %255 : vector<2x8x128xf32>
      %cst_217 = arith.constant 7.500000e-01 : f32
      %290 = vector.broadcast %cst_217 : f32 to vector<2x8x128xf32>
      %291 = arith.subf %290, %289 : vector<2x8x128xf32>
      %292 = arith.mulf %287, %291 : vector<2x8x128xf32>
      %293 = vector.shape_cast %21 : vector<8x128xf32> to vector<1x8x128xf32>
      %294 = vector.broadcast %293 : vector<1x8x128xf32> to vector<2x8x128xf32>
      %295 = arith.mulf %292, %294 : vector<2x8x128xf32>
      %296 = vector.shape_cast %21 : vector<8x128xf32> to vector<1x8x128xf32>
      %297 = vector.broadcast %296 : vector<1x8x128xf32> to vector<2x8x128xf32>
      %298 = arith.mulf %273, %297 : vector<2x8x128xf32>
      %cst_218 = arith.constant dense<0.000000e+00> : vector<8x128xf32>
      %299 = vector.multi_reduction <add>, %295, %cst_218 [0] : vector<2x8x128xf32> to vector<8x128xf32>
      %300 = vector.shape_cast %299 : vector<8x128xf32> to vector<1x8x128xf32>
      %cst_219 = arith.constant dense<0.000000e+00> : vector<8x128xf32>
      %301 = vector.multi_reduction <add>, %300, %cst_219 [0] : vector<1x8x128xf32> to vector<8x128xf32>
      %302 = arith.addf %222, %301 : vector<8x128xf32>
      %c0_220 = arith.constant 0 : index
      %c0_221 = arith.constant 0 : index
      %c1_222 = arith.constant 1 : index
      %c0_223 = arith.constant 0 : index
      %c0_224 = arith.constant 0 : index
      %303 = vector.load %arg9[%c0_220, %c0_221, %c1_222, %c0_223, %c0_224] : memref<1x3x2x8x128xf32, #tpu.memory_space<vmem>>, vector<1x1x1x8x128xf32>
      %304 = vector.shape_cast %303 : vector<1x1x1x8x128xf32> to vector<8x128xf32>
      %305 = arith.mulf %255, %298 : vector<2x8x128xf32>
      %cst_225 = arith.constant dense<0.000000e+00> : vector<8x128xf32>
      %306 = vector.multi_reduction <add>, %305, %cst_225 [0] : vector<2x8x128xf32> to vector<8x128xf32>
      %307 = vector.shape_cast %306 : vector<8x128xf32> to vector<1x8x128xf32>
      %cst_226 = arith.constant dense<0.000000e+00> : vector<8x128xf32>
      %308 = vector.multi_reduction <add>, %307, %cst_226 [0] : vector<1x8x128xf32> to vector<8x128xf32>
      %309 = arith.addf %304, %308 : vector<8x128xf32>
      %c0_227 = arith.constant 0 : index
      %c0_228 = arith.constant 0 : index
      %c1_229 = arith.constant 1 : index
      %c0_230 = arith.constant 0 : index
      %c0_231 = arith.constant 0 : index
      %310 = vector.load %arg9[%c0_227, %c0_228, %c1_229, %c0_230, %c0_231] : memref<1x3x2x8x128xf32, #tpu.memory_space<vmem>>, vector<1x1x1x8x128xf32>
      %311 = vector.shape_cast %310 : vector<1x1x1x8x128xf32> to vector<8x128xf32>
      %312 = vector.shape_cast %309 : vector<8x128xf32> to vector<1x1x1x8x128xf32>
      tpu.vector_store %arg9[%c0_227, %c0_228, %c1_229, %c0_230, %c0_231], %312 {strides = array<i32>} : memref<1x3x2x8x128xf32, #tpu.memory_space<vmem>>, vector<1x1x1x8x128xf32>,
      %c0_232 = arith.constant 0 : index
      %c1_233 = arith.constant 1 : index
      %c1_234 = arith.constant 1 : index
      %c0_235 = arith.constant 0 : index
      %c0_236 = arith.constant 0 : index
      %313 = vector.load %arg9[%c0_232, %c1_233, %c1_234, %c0_235, %c0_236] : memref<1x3x2x8x128xf32, #tpu.memory_space<vmem>>, vector<1x1x1x8x128xf32>
      %314 = vector.shape_cast %313 : vector<1x1x1x8x128xf32> to vector<8x128xf32>
      %315 = arith.addf %255, %298 : vector<2x8x128xf32>
      %cst_237 = arith.constant dense<0.000000e+00> : vector<8x128xf32>
      %316 = vector.multi_reduction <add>, %315, %cst_237 [0] : vector<2x8x128xf32> to vector<8x128xf32>
      %317 = vector.shape_cast %316 : vector<8x128xf32> to vector<1x8x128xf32>
      %cst_238 = arith.constant dense<0.000000e+00> : vector<8x128xf32>
      %318 = vector.multi_reduction <add>, %317, %cst_238 [0] : vector<1x8x128xf32> to vector<8x128xf32>
      %319 = arith.addf %314, %318 : vector<8x128xf32>
      %c0_239 = arith.constant 0 : index
      %c1_240 = arith.constant 1 : index
      %c1_241 = arith.constant 1 : index
      %c0_242 = arith.constant 0 : index
      %c0_243 = arith.constant 0 : index
      %320 = vector.load %arg9[%c0_239, %c1_240, %c1_241, %c0_242, %c0_243] : memref<1x3x2x8x128xf32, #tpu.memory_space<vmem>>, vector<1x1x1x8x128xf32>
      %321 = vector.shape_cast %320 : vector<1x1x1x8x128xf32> to vector<8x128xf32>
      %322 = vector.shape_cast %319 : vector<8x128xf32> to vector<1x1x1x8x128xf32>
      tpu.vector_store %arg9[%c0_239, %c1_240, %c1_241, %c0_242, %c0_243], %322 {strides = array<i32>} : memref<1x3x2x8x128xf32, #tpu.memory_space<vmem>>, vector<1x1x1x8x128xf32>,
      %c0_244 = arith.constant 0 : index
      %c2_245 = arith.constant 2 : index
      %c1_246 = arith.constant 1 : index
      %c0_247 = arith.constant 0 : index
      %c0_248 = arith.constant 0 : index
      %323 = vector.load %arg9[%c0_244, %c2_245, %c1_246, %c0_247, %c0_248] : memref<1x3x2x8x128xf32, #tpu.memory_space<vmem>>, vector<1x1x1x8x128xf32>
      %324 = vector.shape_cast %323 : vector<1x1x1x8x128xf32> to vector<8x128xf32>
      %cst_249 = arith.constant dense<0.000000e+00> : vector<8x128xf32>
      %325 = vector.multi_reduction <add>, %255, %cst_249 [0] : vector<2x8x128xf32> to vector<8x128xf32>
      %326 = vector.shape_cast %325 : vector<8x128xf32> to vector<1x8x128xf32>
      %cst_250 = arith.constant dense<0.000000e+00> : vector<8x128xf32>
      %327 = vector.multi_reduction <add>, %326, %cst_250 [0] : vector<1x8x128xf32> to vector<8x128xf32>
      %328 = arith.addf %324, %327 : vector<8x128xf32>
      %c0_251 = arith.constant 0 : index
      %c2_252 = arith.constant 2 : index
      %c1_253 = arith.constant 1 : index
      %c0_254 = arith.constant 0 : index
      %c0_255 = arith.constant 0 : index
      %329 = vector.load %arg9[%c0_251, %c2_252, %c1_253, %c0_254, %c0_255] : memref<1x3x2x8x128xf32, #tpu.memory_space<vmem>>, vector<1x1x1x8x128xf32>
      %330 = vector.shape_cast %329 : vector<1x1x1x8x128xf32> to vector<8x128xf32>
      %331 = vector.shape_cast %328 : vector<8x128xf32> to vector<1x1x1x8x128xf32>
      tpu.vector_store %arg9[%c0_251, %c2_252, %c1_253, %c0_254, %c0_255], %331 {strides = array<i32>} : memref<1x3x2x8x128xf32, #tpu.memory_space<vmem>>, vector<1x1x1x8x128xf32>,
      %cst_256 = arith.constant 0.000000e+00 : f32
      %332 = vector.broadcast %cst_256 : f32 to vector<8x128xf32>
      %c0_257 = arith.constant 0 : index
      %c0_258 = arith.constant 0 : index
      %c0_259 = arith.constant 0 : index
      %c0_260 = arith.constant 0 : index
      %333 = vector.load %arg6[%c0_257, %c0_258, %c0_259, %c0_260] : memref<2x3x8x128xf32, #tpu.memory_space<vmem>>, vector<2x1x8x128xf32>
      %334 = vector.shape_cast %333 : vector<2x1x8x128xf32> to vector<2x8x128xf32>
      %c0_261 = arith.constant 0 : index
      %c0_262 = arith.constant 0 : index
      %c0_263 = arith.constant 0 : index
      %c0_264 = arith.constant 0 : index
      %335 = vector.load %arg7[%c0_261, %c0_262, %c0_263, %c0_264] : memref<2x3x8x128xf32, #tpu.memory_space<vmem>>, vector<2x1x8x128xf32>
      %336 = vector.shape_cast %335 : vector<2x1x8x128xf32> to vector<2x8x128xf32>
      %337 = arith.subf %334, %336 : vector<2x8x128xf32>
      %338 = math.absf %337 : vector<2x8x128xf32>
      %cst_265 = arith.constant dense<0.000000e+00> : vector<8x128xf32>
      %339 = vector.multi_reduction <add>, %338, %cst_265 [0] : vector<2x8x128xf32> to vector<8x128xf32>
      %340 = vector.shape_cast %339 : vector<8x128xf32> to vector<1x8x128xf32>
      %cst_266 = arith.constant dense<0.000000e+00> : vector<8x128xf32>
      %341 = vector.multi_reduction <add>, %340, %cst_266 [0] : vector<1x8x128xf32> to vector<8x128xf32>
      %342 = arith.addf %332, %341 : vector<8x128xf32>
      %c0_267 = arith.constant 0 : index
      %c1_268 = arith.constant 1 : index
      %c0_269 = arith.constant 0 : index
      %c0_270 = arith.constant 0 : index
      %343 = vector.load %arg6[%c0_267, %c1_268, %c0_269, %c0_270] : memref<2x3x8x128xf32, #tpu.memory_space<vmem>>, vector<2x1x8x128xf32>
      %344 = vector.shape_cast %343 : vector<2x1x8x128xf32> to vector<2x8x128xf32>
      %c0_271 = arith.constant 0 : index
      %c1_272 = arith.constant 1 : index
      %c0_273 = arith.constant 0 : index
      %c0_274 = arith.constant 0 : index
      %345 = vector.load %arg7[%c0_271, %c1_272, %c0_273, %c0_274] : memref<2x3x8x128xf32, #tpu.memory_space<vmem>>, vector<2x1x8x128xf32>
      %346 = vector.shape_cast %345 : vector<2x1x8x128xf32> to vector<2x8x128xf32>
      %347 = arith.subf %344, %346 : vector<2x8x128xf32>
      %348 = math.absf %347 : vector<2x8x128xf32>
      %cst_275 = arith.constant dense<0.000000e+00> : vector<8x128xf32>
      %349 = vector.multi_reduction <add>, %348, %cst_275 [0] : vector<2x8x128xf32> to vector<8x128xf32>
      %350 = vector.shape_cast %349 : vector<8x128xf32> to vector<1x8x128xf32>
      %cst_276 = arith.constant dense<0.000000e+00> : vector<8x128xf32>
      %351 = vector.multi_reduction <add>, %350, %cst_276 [0] : vector<1x8x128xf32> to vector<8x128xf32>
      %352 = arith.addf %342, %351 : vector<8x128xf32>
      %c0_277 = arith.constant 0 : index
      %c2_278 = arith.constant 2 : index
      %c0_279 = arith.constant 0 : index
      %c0_280 = arith.constant 0 : index
      %353 = vector.load %arg6[%c0_277, %c2_278, %c0_279, %c0_280] : memref<2x3x8x128xf32, #tpu.memory_space<vmem>>, vector<2x1x8x128xf32>
      %354 = vector.shape_cast %353 : vector<2x1x8x128xf32> to vector<2x8x128xf32>
      %c0_281 = arith.constant 0 : index
      %c2_282 = arith.constant 2 : index
      %c0_283 = arith.constant 0 : index
      %c0_284 = arith.constant 0 : index
      %355 = vector.load %arg7[%c0_281, %c2_282, %c0_283, %c0_284] : memref<2x3x8x128xf32, #tpu.memory_space<vmem>>, vector<2x1x8x128xf32>
      %356 = vector.shape_cast %355 : vector<2x1x8x128xf32> to vector<2x8x128xf32>
      %357 = arith.subf %354, %356 : vector<2x8x128xf32>
      %358 = math.absf %357 : vector<2x8x128xf32>
      %cst_285 = arith.constant dense<0.000000e+00> : vector<8x128xf32>
      %359 = vector.multi_reduction <add>, %358, %cst_285 [0] : vector<2x8x128xf32> to vector<8x128xf32>
      %360 = vector.shape_cast %359 : vector<8x128xf32> to vector<1x8x128xf32>
      %cst_286 = arith.constant dense<0.000000e+00> : vector<8x128xf32>
      %361 = vector.multi_reduction <add>, %360, %cst_286 [0] : vector<1x8x128xf32> to vector<8x128xf32>
      %362 = arith.addf %352, %361 : vector<8x128xf32>
      %c0_287 = arith.constant 0 : index
      %c0_288 = arith.constant 0 : index
      %c0_289 = arith.constant 0 : index
      %c0_290 = arith.constant 0 : index
      %363 = vector.load %arg10[%c0_287, %c0_288, %c0_289, %c0_290] : memref<1x3x8x128xf32, #tpu.memory_space<vmem>>, vector<1x1x8x128xf32>
      %364 = vector.shape_cast %363 : vector<1x1x8x128xf32> to vector<8x128xf32>
      %cst_291 = arith.constant dense<0.000000e+00> : vector<8x128xf32>
      %365 = vector.multi_reduction <add>, %71, %cst_291 [0] : vector<2x8x128xf32> to vector<8x128xf32>
      %366 = vector.shape_cast %365 : vector<8x128xf32> to vector<1x8x128xf32>
      %cst_292 = arith.constant dense<0.000000e+00> : vector<8x128xf32>
      %367 = vector.multi_reduction <add>, %366, %cst_292 [0] : vector<1x8x128xf32> to vector<8x128xf32>
      %368 = arith.addf %364, %367 : vector<8x128xf32>
      %c0_293 = arith.constant 0 : index
      %c0_294 = arith.constant 0 : index
      %c0_295 = arith.constant 0 : index
      %c0_296 = arith.constant 0 : index
      %369 = vector.load %arg10[%c0_293, %c0_294, %c0_295, %c0_296] : memref<1x3x8x128xf32, #tpu.memory_space<vmem>>, vector<1x1x8x128xf32>
      %370 = vector.shape_cast %369 : vector<1x1x8x128xf32> to vector<8x128xf32>
      %371 = vector.shape_cast %368 : vector<8x128xf32> to vector<1x1x8x128xf32>
      tpu.vector_store %arg10[%c0_293, %c0_294, %c0_295, %c0_296], %371 {strides = array<i32>} : memref<1x3x8x128xf32, #tpu.memory_space<vmem>>, vector<1x1x8x128xf32>,
      %c0_297 = arith.constant 0 : index
      %c1_298 = arith.constant 1 : index
      %c0_299 = arith.constant 0 : index
      %c0_300 = arith.constant 0 : index
      %372 = vector.load %arg10[%c0_297, %c1_298, %c0_299, %c0_300] : memref<1x3x8x128xf32, #tpu.memory_space<vmem>>, vector<1x1x8x128xf32>
      %373 = vector.shape_cast %372 : vector<1x1x8x128xf32> to vector<8x128xf32>
      %374 = arith.addf %373, %302 : vector<8x128xf32>
      %c0_301 = arith.constant 0 : index
      %c1_302 = arith.constant 1 : index
      %c0_303 = arith.constant 0 : index
      %c0_304 = arith.constant 0 : index
      %375 = vector.load %arg10[%c0_301, %c1_302, %c0_303, %c0_304] : memref<1x3x8x128xf32, #tpu.memory_space<vmem>>, vector<1x1x8x128xf32>
      %376 = vector.shape_cast %375 : vector<1x1x8x128xf32> to vector<8x128xf32>
      %377 = vector.shape_cast %374 : vector<8x128xf32> to vector<1x1x8x128xf32>
      tpu.vector_store %arg10[%c0_301, %c1_302, %c0_303, %c0_304], %377 {strides = array<i32>} : memref<1x3x8x128xf32, #tpu.memory_space<vmem>>, vector<1x1x8x128xf32>,
      %c0_305 = arith.constant 0 : index
      %c2_306 = arith.constant 2 : index
      %c0_307 = arith.constant 0 : index
      %c0_308 = arith.constant 0 : index
      %378 = vector.load %arg10[%c0_305, %c2_306, %c0_307, %c0_308] : memref<1x3x8x128xf32, #tpu.memory_space<vmem>>, vector<1x1x8x128xf32>
      %379 = vector.shape_cast %378 : vector<1x1x8x128xf32> to vector<8x128xf32>
      %380 = arith.addf %379, %362 : vector<8x128xf32>
      %c0_309 = arith.constant 0 : index
      %c2_310 = arith.constant 2 : index
      %c0_311 = arith.constant 0 : index
      %c0_312 = arith.constant 0 : index
      %381 = vector.load %arg10[%c0_309, %c2_310, %c0_311, %c0_312] : memref<1x3x8x128xf32, #tpu.memory_space<vmem>>, vector<1x1x8x128xf32>
      %382 = vector.shape_cast %381 : vector<1x1x8x128xf32> to vector<8x128xf32>
      %383 = vector.shape_cast %380 : vector<8x128xf32> to vector<1x1x8x128xf32>
      tpu.vector_store %arg10[%c0_309, %c2_310, %c0_311, %c0_312], %383 {strides = array<i32>} : memref<1x3x8x128xf32, #tpu.memory_space<vmem>>, vector<1x1x8x128xf32>,
    } else {
    }
    %9 = arith.extui %6 : i1 to i32
    %c0_i32_3 = arith.constant 0 : i32
    %10 = arith.cmpi ne, %9, %c0_i32_3 : i32
    scf.if %10 {
      %c0 = arith.constant 0 : index
      %c0_4 = arith.constant 0 : index
      %c0_5 = arith.constant 0 : index
      %c0_6 = arith.constant 0 : index
      %11 = vector.load %arg2[%c0, %c0_4, %c0_5, %c0_6] : memref<2x3x8x128xf32, #tpu.memory_space<vmem>>, vector<2x1x8x128xf32>
      %12 = vector.shape_cast %11 : vector<2x1x8x128xf32> to vector<2x8x128xf32>
      %c0_7 = arith.constant 0 : index
      %c1 = arith.constant 1 : index
      %c0_8 = arith.constant 0 : index
      %c0_9 = arith.constant 0 : index
      %13 = vector.load %arg2[%c0_7, %c1, %c0_8, %c0_9] : memref<2x3x8x128xf32, #tpu.memory_space<vmem>>, vector<2x1x8x128xf32>
      %14 = vector.shape_cast %13 : vector<2x1x8x128xf32> to vector<2x8x128xf32>
      %c0_10 = arith.constant 0 : index
      %c2 = arith.constant 2 : index
      %c0_11 = arith.constant 0 : index
      %c0_12 = arith.constant 0 : index
      %15 = vector.load %arg2[%c0_10, %c2, %c0_11, %c0_12] : memref<2x3x8x128xf32, #tpu.memory_space<vmem>>, vector<2x1x8x128xf32>
      %16 = vector.shape_cast %15 : vector<2x1x8x128xf32> to vector<2x8x128xf32>
      %c0_13 = arith.constant 0 : index
      %c0_14 = arith.constant 0 : index
      %c0_15 = arith.constant 0 : index
      %c0_16 = arith.constant 0 : index
      %17 = vector.load %arg3[%c0_13, %c0_14, %c0_15, %c0_16] : memref<2x3x8x128xf32, #tpu.memory_space<vmem>>, vector<2x1x8x128xf32>
      %18 = vector.shape_cast %17 : vector<2x1x8x128xf32> to vector<2x8x128xf32>
      %c0_17 = arith.constant 0 : index
      %c1_18 = arith.constant 1 : index
      %c0_19 = arith.constant 0 : index
      %c0_20 = arith.constant 0 : index
      %19 = vector.load %arg3[%c0_17, %c1_18, %c0_19, %c0_20] : memref<2x3x8x128xf32, #tpu.memory_space<vmem>>, vector<2x1x8x128xf32>
      %20 = vector.shape_cast %19 : vector<2x1x8x128xf32> to vector<2x8x128xf32>
      %c0_21 = arith.constant 0 : index
      %c2_22 = arith.constant 2 : index
      %c0_23 = arith.constant 0 : index
      %c0_24 = arith.constant 0 : index
      %21 = vector.load %arg3[%c0_21, %c2_22, %c0_23, %c0_24] : memref<2x3x8x128xf32, #tpu.memory_space<vmem>>, vector<2x1x8x128xf32>
      %22 = vector.shape_cast %21 : vector<2x1x8x128xf32> to vector<2x8x128xf32>
      %23 = arith.maximumf %12, %14 : vector<2x8x128xf32>
      %24 = arith.maximumf %23, %16 : vector<2x8x128xf32>
      %25 = arith.subf %12, %24 : vector<2x8x128xf32>
      %26 = math.exp %25 : vector<2x8x128xf32>
      %27 = arith.subf %14, %24 : vector<2x8x128xf32>
      %28 = math.exp %27 : vector<2x8x128xf32>
      %29 = arith.subf %16, %24 : vector<2x8x128xf32>
      %30 = math.exp %29 : vector<2x8x128xf32>
      %31 = arith.addf %26, %28 : vector<2x8x128xf32>
      %32 = arith.addf %31, %30 : vector<2x8x128xf32>
      %33 = tpu.reciprocal %32 {approx = true} : vector<2x8x128xf32> -> vector<2x8x128xf32>
      %34 = math.log %32 : vector<2x8x128xf32>
      %35 = arith.subf %12, %24 : vector<2x8x128xf32>
      %36 = arith.subf %35, %34 : vector<2x8x128xf32>
      %37 = arith.subf %14, %24 : vector<2x8x128xf32>
      %38 = arith.subf %37, %34 : vector<2x8x128xf32>
      %39 = arith.subf %16, %24 : vector<2x8x128xf32>
      %40 = arith.subf %39, %34 : vector<2x8x128xf32>
      %cst = arith.constant 6.000000e-01 : f32
      %41 = vector.broadcast %cst : f32 to vector<2x8x128xf32>
      %42 = arith.mulf %41, %18 : vector<2x8x128xf32>
      %43 = arith.mulf %42, %36 : vector<2x8x128xf32>
      %cst_25 = arith.constant 2.000000e-01 : f32
      %44 = vector.broadcast %cst_25 : f32 to vector<2x8x128xf32>
      %45 = arith.mulf %44, %20 : vector<2x8x128xf32>
      %46 = arith.mulf %45, %38 : vector<2x8x128xf32>
      %47 = arith.addf %43, %46 : vector<2x8x128xf32>
      %cst_26 = arith.constant 2.000000e-01 : f32
      %48 = vector.broadcast %cst_26 : f32 to vector<2x8x128xf32>
      %49 = arith.mulf %48, %22 : vector<2x8x128xf32>
      %50 = arith.mulf %49, %40 : vector<2x8x128xf32>
      %51 = arith.addf %47, %50 : vector<2x8x128xf32>
      %cst_27 = arith.constant 0.000000e+00 : f32
      %52 = vector.broadcast %cst_27 : f32 to vector<2x8x128xf32>
      %53 = arith.subf %52, %51 : vector<2x8x128xf32>
      %cst_28 = arith.constant 0.000000e+00 : f32
      %54 = vector.broadcast %cst_28 : f32 to vector<2x8x128xf32>
      %55 = arith.subf %54, %53 : vector<2x8x128xf32>
      %56 = math.exp %55 : vector<2x8x128xf32>
      %cst_29 = arith.constant 1.000000e+00 : f32
      %57 = vector.broadcast %cst_29 : f32 to vector<2x8x128xf32>
      %58 = arith.subf %57, %56 : vector<2x8x128xf32>
      %59 = arith.mulf %58, %58 : vector<2x8x128xf32>
      %60 = arith.mulf %59, %53 : vector<2x8x128xf32>
      %61 = arith.mulf %26, %33 : vector<2x8x128xf32>
      %62 = arith.mulf %28, %33 : vector<2x8x128xf32>
      %63 = arith.mulf %30, %33 : vector<2x8x128xf32>
      %c0_30 = arith.constant 0 : index
      %c0_31 = arith.constant 0 : index
      %c0_32 = arith.constant 0 : index
      %c0_33 = arith.constant 0 : index
      %c0_34 = arith.constant 0 : index
      %64 = vector.load %arg8[%c0_30, %c0_31, %c0_32, %c0_33, %c0_34] : memref<1x3x3x8x128xf32, #tpu.memory_space<vmem>>, vector<1x1x1x8x128xf32>
      %65 = vector.shape_cast %64 : vector<1x1x1x8x128xf32> to vector<8x128xf32>
      %66 = arith.mulf %18, %61 : vector<2x8x128xf32>
      %cst_35 = arith.constant dense<0.000000e+00> : vector<8x128xf32>
      %67 = vector.multi_reduction <add>, %66, %cst_35 [0] : vector<2x8x128xf32> to vector<8x128xf32>
      %68 = vector.shape_cast %67 : vector<8x128xf32> to vector<1x8x128xf32>
      %cst_36 = arith.constant dense<0.000000e+00> : vector<8x128xf32>
      %69 = vector.multi_reduction <add>, %68, %cst_36 [0] : vector<1x8x128xf32> to vector<8x128xf32>
      %70 = arith.addf %65, %69 : vector<8x128xf32>
      %c0_37 = arith.constant 0 : index
      %c0_38 = arith.constant 0 : index
      %c0_39 = arith.constant 0 : index
      %c0_40 = arith.constant 0 : index
      %c0_41 = arith.constant 0 : index
      %71 = vector.load %arg8[%c0_37, %c0_38, %c0_39, %c0_40, %c0_41] : memref<1x3x3x8x128xf32, #tpu.memory_space<vmem>>, vector<1x1x1x8x128xf32>
      %72 = vector.shape_cast %71 : vector<1x1x1x8x128xf32> to vector<8x128xf32>
      %73 = vector.shape_cast %70 : vector<8x128xf32> to vector<1x1x1x8x128xf32>
      tpu.vector_store %arg8[%c0_37, %c0_38, %c0_39, %c0_40, %c0_41], %73 {strides = array<i32>} : memref<1x3x3x8x128xf32, #tpu.memory_space<vmem>>, vector<1x1x1x8x128xf32>,
      %c0_42 = arith.constant 0 : index
      %c1_43 = arith.constant 1 : index
      %c0_44 = arith.constant 0 : index
      %c0_45 = arith.constant 0 : index
      %c0_46 = arith.constant 0 : index
      %74 = vector.load %arg8[%c0_42, %c1_43, %c0_44, %c0_45, %c0_46] : memref<1x3x3x8x128xf32, #tpu.memory_space<vmem>>, vector<1x1x1x8x128xf32>
      %75 = vector.shape_cast %74 : vector<1x1x1x8x128xf32> to vector<8x128xf32>
      %76 = arith.addf %18, %61 : vector<2x8x128xf32>
      %cst_47 = arith.constant dense<0.000000e+00> : vector<8x128xf32>
      %77 = vector.multi_reduction <add>, %76, %cst_47 [0] : vector<2x8x128xf32> to vector<8x128xf32>
      %78 = vector.shape_cast %77 : vector<8x128xf32> to vector<1x8x128xf32>
      %cst_48 = arith.constant dense<0.000000e+00> : vector<8x128xf32>
      %79 = vector.multi_reduction <add>, %78, %cst_48 [0] : vector<1x8x128xf32> to vector<8x128xf32>
      %80 = arith.addf %75, %79 : vector<8x128xf32>
      %c0_49 = arith.constant 0 : index
      %c1_50 = arith.constant 1 : index
      %c0_51 = arith.constant 0 : index
      %c0_52 = arith.constant 0 : index
      %c0_53 = arith.constant 0 : index
      %81 = vector.load %arg8[%c0_49, %c1_50, %c0_51, %c0_52, %c0_53] : memref<1x3x3x8x128xf32, #tpu.memory_space<vmem>>, vector<1x1x1x8x128xf32>
      %82 = vector.shape_cast %81 : vector<1x1x1x8x128xf32> to vector<8x128xf32>
      %83 = vector.shape_cast %80 : vector<8x128xf32> to vector<1x1x1x8x128xf32>
      tpu.vector_store %arg8[%c0_49, %c1_50, %c0_51, %c0_52, %c0_53], %83 {strides = array<i32>} : memref<1x3x3x8x128xf32, #tpu.memory_space<vmem>>, vector<1x1x1x8x128xf32>,
      %c0_54 = arith.constant 0 : index
      %c2_55 = arith.constant 2 : index
      %c0_56 = arith.constant 0 : index
      %c0_57 = arith.constant 0 : index
      %c0_58 = arith.constant 0 : index
      %84 = vector.load %arg8[%c0_54, %c2_55, %c0_56, %c0_57, %c0_58] : memref<1x3x3x8x128xf32, #tpu.memory_space<vmem>>, vector<1x1x1x8x128xf32>
      %85 = vector.shape_cast %84 : vector<1x1x1x8x128xf32> to vector<8x128xf32>
      %cst_59 = arith.constant dense<0.000000e+00> : vector<8x128xf32>
      %86 = vector.multi_reduction <add>, %18, %cst_59 [0] : vector<2x8x128xf32> to vector<8x128xf32>
      %87 = vector.shape_cast %86 : vector<8x128xf32> to vector<1x8x128xf32>
      %cst_60 = arith.constant dense<0.000000e+00> : vector<8x128xf32>
      %88 = vector.multi_reduction <add>, %87, %cst_60 [0] : vector<1x8x128xf32> to vector<8x128xf32>
      %89 = arith.addf %85, %88 : vector<8x128xf32>
      %c0_61 = arith.constant 0 : index
      %c2_62 = arith.constant 2 : index
      %c0_63 = arith.constant 0 : index
      %c0_64 = arith.constant 0 : index
      %c0_65 = arith.constant 0 : index
      %90 = vector.load %arg8[%c0_61, %c2_62, %c0_63, %c0_64, %c0_65] : memref<1x3x3x8x128xf32, #tpu.memory_space<vmem>>, vector<1x1x1x8x128xf32>
      %91 = vector.shape_cast %90 : vector<1x1x1x8x128xf32> to vector<8x128xf32>
      %92 = vector.shape_cast %89 : vector<8x128xf32> to vector<1x1x1x8x128xf32>
      tpu.vector_store %arg8[%c0_61, %c2_62, %c0_63, %c0_64, %c0_65], %92 {strides = array<i32>} : memref<1x3x3x8x128xf32, #tpu.memory_space<vmem>>, vector<1x1x1x8x128xf32>,
      %c0_66 = arith.constant 0 : index
      %c0_67 = arith.constant 0 : index
      %c1_68 = arith.constant 1 : index
      %c0_69 = arith.constant 0 : index
      %c0_70 = arith.constant 0 : index
      %93 = vector.load %arg8[%c0_66, %c0_67, %c1_68, %c0_69, %c0_70] : memref<1x3x3x8x128xf32, #tpu.memory_space<vmem>>, vector<1x1x1x8x128xf32>
      %94 = vector.shape_cast %93 : vector<1x1x1x8x128xf32> to vector<8x128xf32>
      %95 = arith.mulf %20, %62 : vector<2x8x128xf32>
      %cst_71 = arith.constant dense<0.000000e+00> : vector<8x128xf32>
      %96 = vector.multi_reduction <add>, %95, %cst_71 [0] : vector<2x8x128xf32> to vector<8x128xf32>
      %97 = vector.shape_cast %96 : vector<8x128xf32> to vector<1x8x128xf32>
      %cst_72 = arith.constant dense<0.000000e+00> : vector<8x128xf32>
      %98 = vector.multi_reduction <add>, %97, %cst_72 [0] : vector<1x8x128xf32> to vector<8x128xf32>
      %99 = arith.addf %94, %98 : vector<8x128xf32>
      %c0_73 = arith.constant 0 : index
      %c0_74 = arith.constant 0 : index
      %c1_75 = arith.constant 1 : index
      %c0_76 = arith.constant 0 : index
      %c0_77 = arith.constant 0 : index
      %100 = vector.load %arg8[%c0_73, %c0_74, %c1_75, %c0_76, %c0_77] : memref<1x3x3x8x128xf32, #tpu.memory_space<vmem>>, vector<1x1x1x8x128xf32>
      %101 = vector.shape_cast %100 : vector<1x1x1x8x128xf32> to vector<8x128xf32>
      %102 = vector.shape_cast %99 : vector<8x128xf32> to vector<1x1x1x8x128xf32>
      tpu.vector_store %arg8[%c0_73, %c0_74, %c1_75, %c0_76, %c0_77], %102 {strides = array<i32>} : memref<1x3x3x8x128xf32, #tpu.memory_space<vmem>>, vector<1x1x1x8x128xf32>,
      %c0_78 = arith.constant 0 : index
      %c1_79 = arith.constant 1 : index
      %c1_80 = arith.constant 1 : index
      %c0_81 = arith.constant 0 : index
      %c0_82 = arith.constant 0 : index
      %103 = vector.load %arg8[%c0_78, %c1_79, %c1_80, %c0_81, %c0_82] : memref<1x3x3x8x128xf32, #tpu.memory_space<vmem>>, vector<1x1x1x8x128xf32>
      %104 = vector.shape_cast %103 : vector<1x1x1x8x128xf32> to vector<8x128xf32>
      %105 = arith.addf %20, %62 : vector<2x8x128xf32>
      %cst_83 = arith.constant dense<0.000000e+00> : vector<8x128xf32>
      %106 = vector.multi_reduction <add>, %105, %cst_83 [0] : vector<2x8x128xf32> to vector<8x128xf32>
      %107 = vector.shape_cast %106 : vector<8x128xf32> to vector<1x8x128xf32>
      %cst_84 = arith.constant dense<0.000000e+00> : vector<8x128xf32>
      %108 = vector.multi_reduction <add>, %107, %cst_84 [0] : vector<1x8x128xf32> to vector<8x128xf32>
      %109 = arith.addf %104, %108 : vector<8x128xf32>
      %c0_85 = arith.constant 0 : index
      %c1_86 = arith.constant 1 : index
      %c1_87 = arith.constant 1 : index
      %c0_88 = arith.constant 0 : index
      %c0_89 = arith.constant 0 : index
      %110 = vector.load %arg8[%c0_85, %c1_86, %c1_87, %c0_88, %c0_89] : memref<1x3x3x8x128xf32, #tpu.memory_space<vmem>>, vector<1x1x1x8x128xf32>
      %111 = vector.shape_cast %110 : vector<1x1x1x8x128xf32> to vector<8x128xf32>
      %112 = vector.shape_cast %109 : vector<8x128xf32> to vector<1x1x1x8x128xf32>
      tpu.vector_store %arg8[%c0_85, %c1_86, %c1_87, %c0_88, %c0_89], %112 {strides = array<i32>} : memref<1x3x3x8x128xf32, #tpu.memory_space<vmem>>, vector<1x1x1x8x128xf32>,
      %c0_90 = arith.constant 0 : index
      %c2_91 = arith.constant 2 : index
      %c1_92 = arith.constant 1 : index
      %c0_93 = arith.constant 0 : index
      %c0_94 = arith.constant 0 : index
      %113 = vector.load %arg8[%c0_90, %c2_91, %c1_92, %c0_93, %c0_94] : memref<1x3x3x8x128xf32, #tpu.memory_space<vmem>>, vector<1x1x1x8x128xf32>
      %114 = vector.shape_cast %113 : vector<1x1x1x8x128xf32> to vector<8x128xf32>
      %cst_95 = arith.constant dense<0.000000e+00> : vector<8x128xf32>
      %115 = vector.multi_reduction <add>, %20, %cst_95 [0] : vector<2x8x128xf32> to vector<8x128xf32>
      %116 = vector.shape_cast %115 : vector<8x128xf32> to vector<1x8x128xf32>
      %cst_96 = arith.constant dense<0.000000e+00> : vector<8x128xf32>
      %117 = vector.multi_reduction <add>, %116, %cst_96 [0] : vector<1x8x128xf32> to vector<8x128xf32>
      %118 = arith.addf %114, %117 : vector<8x128xf32>
      %c0_97 = arith.constant 0 : index
      %c2_98 = arith.constant 2 : index
      %c1_99 = arith.constant 1 : index
      %c0_100 = arith.constant 0 : index
      %c0_101 = arith.constant 0 : index
      %119 = vector.load %arg8[%c0_97, %c2_98, %c1_99, %c0_100, %c0_101] : memref<1x3x3x8x128xf32, #tpu.memory_space<vmem>>, vector<1x1x1x8x128xf32>
      %120 = vector.shape_cast %119 : vector<1x1x1x8x128xf32> to vector<8x128xf32>
      %121 = vector.shape_cast %118 : vector<8x128xf32> to vector<1x1x1x8x128xf32>
      tpu.vector_store %arg8[%c0_97, %c2_98, %c1_99, %c0_100, %c0_101], %121 {strides = array<i32>} : memref<1x3x3x8x128xf32, #tpu.memory_space<vmem>>, vector<1x1x1x8x128xf32>,
      %c0_102 = arith.constant 0 : index
      %c0_103 = arith.constant 0 : index
      %c2_104 = arith.constant 2 : index
      %c0_105 = arith.constant 0 : index
      %c0_106 = arith.constant 0 : index
      %122 = vector.load %arg8[%c0_102, %c0_103, %c2_104, %c0_105, %c0_106] : memref<1x3x3x8x128xf32, #tpu.memory_space<vmem>>, vector<1x1x1x8x128xf32>
      %123 = vector.shape_cast %122 : vector<1x1x1x8x128xf32> to vector<8x128xf32>
      %124 = arith.mulf %22, %63 : vector<2x8x128xf32>
      %cst_107 = arith.constant dense<0.000000e+00> : vector<8x128xf32>
      %125 = vector.multi_reduction <add>, %124, %cst_107 [0] : vector<2x8x128xf32> to vector<8x128xf32>
      %126 = vector.shape_cast %125 : vector<8x128xf32> to vector<1x8x128xf32>
      %cst_108 = arith.constant dense<0.000000e+00> : vector<8x128xf32>
      %127 = vector.multi_reduction <add>, %126, %cst_108 [0] : vector<1x8x128xf32> to vector<8x128xf32>
      %128 = arith.addf %123, %127 : vector<8x128xf32>
      %c0_109 = arith.constant 0 : index
      %c0_110 = arith.constant 0 : index
      %c2_111 = arith.constant 2 : index
      %c0_112 = arith.constant 0 : index
      %c0_113 = arith.constant 0 : index
      %129 = vector.load %arg8[%c0_109, %c0_110, %c2_111, %c0_112, %c0_113] : memref<1x3x3x8x128xf32, #tpu.memory_space<vmem>>, vector<1x1x1x8x128xf32>
      %130 = vector.shape_cast %129 : vector<1x1x1x8x128xf32> to vector<8x128xf32>
      %131 = vector.shape_cast %128 : vector<8x128xf32> to vector<1x1x1x8x128xf32>
      tpu.vector_store %arg8[%c0_109, %c0_110, %c2_111, %c0_112, %c0_113], %131 {strides = array<i32>} : memref<1x3x3x8x128xf32, #tpu.memory_space<vmem>>, vector<1x1x1x8x128xf32>,
      %c0_114 = arith.constant 0 : index
      %c1_115 = arith.constant 1 : index
      %c2_116 = arith.constant 2 : index
      %c0_117 = arith.constant 0 : index
      %c0_118 = arith.constant 0 : index
      %132 = vector.load %arg8[%c0_114, %c1_115, %c2_116, %c0_117, %c0_118] : memref<1x3x3x8x128xf32, #tpu.memory_space<vmem>>, vector<1x1x1x8x128xf32>
      %133 = vector.shape_cast %132 : vector<1x1x1x8x128xf32> to vector<8x128xf32>
      %134 = arith.addf %22, %63 : vector<2x8x128xf32>
      %cst_119 = arith.constant dense<0.000000e+00> : vector<8x128xf32>
      %135 = vector.multi_reduction <add>, %134, %cst_119 [0] : vector<2x8x128xf32> to vector<8x128xf32>
      %136 = vector.shape_cast %135 : vector<8x128xf32> to vector<1x8x128xf32>
      %cst_120 = arith.constant dense<0.000000e+00> : vector<8x128xf32>
      %137 = vector.multi_reduction <add>, %136, %cst_120 [0] : vector<1x8x128xf32> to vector<8x128xf32>
      %138 = arith.addf %133, %137 : vector<8x128xf32>
      %c0_121 = arith.constant 0 : index
      %c1_122 = arith.constant 1 : index
      %c2_123 = arith.constant 2 : index
      %c0_124 = arith.constant 0 : index
      %c0_125 = arith.constant 0 : index
      %139 = vector.load %arg8[%c0_121, %c1_122, %c2_123, %c0_124, %c0_125] : memref<1x3x3x8x128xf32, #tpu.memory_space<vmem>>, vector<1x1x1x8x128xf32>
      %140 = vector.shape_cast %139 : vector<1x1x1x8x128xf32> to vector<8x128xf32>
      %141 = vector.shape_cast %138 : vector<8x128xf32> to vector<1x1x1x8x128xf32>
      tpu.vector_store %arg8[%c0_121, %c1_122, %c2_123, %c0_124, %c0_125], %141 {strides = array<i32>} : memref<1x3x3x8x128xf32, #tpu.memory_space<vmem>>, vector<1x1x1x8x128xf32>,
      %c0_126 = arith.constant 0 : index
      %c2_127 = arith.constant 2 : index
      %c2_128 = arith.constant 2 : index
      %c0_129 = arith.constant 0 : index
      %c0_130 = arith.constant 0 : index
      %142 = vector.load %arg8[%c0_126, %c2_127, %c2_128, %c0_129, %c0_130] : memref<1x3x3x8x128xf32, #tpu.memory_space<vmem>>, vector<1x1x1x8x128xf32>
      %143 = vector.shape_cast %142 : vector<1x1x1x8x128xf32> to vector<8x128xf32>
      %cst_131 = arith.constant dense<0.000000e+00> : vector<8x128xf32>
      %144 = vector.multi_reduction <add>, %22, %cst_131 [0] : vector<2x8x128xf32> to vector<8x128xf32>
      %145 = vector.shape_cast %144 : vector<8x128xf32> to vector<1x8x128xf32>
      %cst_132 = arith.constant dense<0.000000e+00> : vector<8x128xf32>
      %146 = vector.multi_reduction <add>, %145, %cst_132 [0] : vector<1x8x128xf32> to vector<8x128xf32>
      %147 = arith.addf %143, %146 : vector<8x128xf32>
      %c0_133 = arith.constant 0 : index
      %c2_134 = arith.constant 2 : index
      %c2_135 = arith.constant 2 : index
      %c0_136 = arith.constant 0 : index
      %c0_137 = arith.constant 0 : index
      %148 = vector.load %arg8[%c0_133, %c2_134, %c2_135, %c0_136, %c0_137] : memref<1x3x3x8x128xf32, #tpu.memory_space<vmem>>, vector<1x1x1x8x128xf32>
      %149 = vector.shape_cast %148 : vector<1x1x1x8x128xf32> to vector<8x128xf32>
      %150 = vector.shape_cast %147 : vector<8x128xf32> to vector<1x1x1x8x128xf32>
      tpu.vector_store %arg8[%c0_133, %c2_134, %c2_135, %c0_136, %c0_137], %150 {strides = array<i32>} : memref<1x3x3x8x128xf32, #tpu.memory_space<vmem>>, vector<1x1x1x8x128xf32>,
      %cst_138 = arith.constant 0.000000e+00 : f32
      %151 = vector.broadcast %cst_138 : f32 to vector<8x128xf32>
      %c0_139 = arith.constant 0 : index
      %c0_140 = arith.constant 0 : index
      %c0_141 = arith.constant 0 : index
      %c0_142 = arith.constant 0 : index
      %152 = vector.load %arg4[%c0_139, %c0_140, %c0_141, %c0_142] : memref<2x2x8x128xf32, #tpu.memory_space<vmem>>, vector<2x1x8x128xf32>
      %153 = vector.shape_cast %152 : vector<2x1x8x128xf32> to vector<2x8x128xf32>
      %c0_143 = arith.constant 0 : index
      %c0_144 = arith.constant 0 : index
      %c0_145 = arith.constant 0 : index
      %c0_146 = arith.constant 0 : index
      %154 = vector.load %arg5[%c0_143, %c0_144, %c0_145, %c0_146] : memref<2x2x8x128xf32, #tpu.memory_space<vmem>>, vector<2x1x8x128xf32>
      %155 = vector.shape_cast %154 : vector<2x1x8x128xf32> to vector<2x8x128xf32>
      %cst_147 = arith.constant 0.000000e+00 : f32
      %156 = vector.broadcast %cst_147 : f32 to vector<2x8x128xf32>
      %157 = arith.maximumf %153, %156 : vector<2x8x128xf32>
      %158 = math.absf %153 : vector<2x8x128xf32>
      %cst_148 = arith.constant 0.000000e+00 : f32
      %159 = vector.broadcast %cst_148 : f32 to vector<2x8x128xf32>
      %160 = arith.subf %159, %158 : vector<2x8x128xf32>
      %161 = math.exp %160 : vector<2x8x128xf32>
      %cst_149 = arith.constant 1.000000e+00 : f32
      %162 = vector.broadcast %cst_149 : f32 to vector<2x8x128xf32>
      %163 = arith.addf %162, %161 : vector<2x8x128xf32>
      %164 = math.log %163 : vector<2x8x128xf32>
      %165 = arith.addf %157, %164 : vector<2x8x128xf32>
      %166 = arith.subf %153, %165 : vector<2x8x128xf32>
      %cst_150 = arith.constant -1.000000e+02 : f32
      %167 = vector.broadcast %cst_150 : f32 to vector<2x8x128xf32>
      %168 = arith.maximumf %166, %167 : vector<2x8x128xf32>
      %cst_151 = arith.constant 0.000000e+00 : f32
      %169 = vector.broadcast %cst_151 : f32 to vector<2x8x128xf32>
      %170 = arith.subf %169, %165 : vector<2x8x128xf32>
      %cst_152 = arith.constant -1.000000e+02 : f32
      %171 = vector.broadcast %cst_152 : f32 to vector<2x8x128xf32>
      %172 = arith.maximumf %170, %171 : vector<2x8x128xf32>
      %173 = math.exp %168 : vector<2x8x128xf32>
      %174 = arith.mulf %155, %168 : vector<2x8x128xf32>
      %cst_153 = arith.constant 1.000000e+00 : f32
      %175 = vector.broadcast %cst_153 : f32 to vector<2x8x128xf32>
      %176 = arith.subf %175, %155 : vector<2x8x128xf32>
      %177 = arith.mulf %176, %172 : vector<2x8x128xf32>
      %178 = arith.addf %174, %177 : vector<2x8x128xf32>
      %cst_154 = arith.constant 0.000000e+00 : f32
      %179 = vector.broadcast %cst_154 : f32 to vector<2x8x128xf32>
      %180 = arith.subf %179, %178 : vector<2x8x128xf32>
      %cst_155 = arith.constant 0.000000e+00 : f32
      %181 = vector.broadcast %cst_155 : f32 to vector<2x8x128xf32>
      %182 = arith.subf %181, %180 : vector<2x8x128xf32>
      %183 = math.exp %182 : vector<2x8x128xf32>
      %cst_156 = arith.constant 1.000000e+00 : f32
      %184 = vector.broadcast %cst_156 : f32 to vector<2x8x128xf32>
      %185 = arith.subf %184, %183 : vector<2x8x128xf32>
      %186 = arith.mulf %185, %185 : vector<2x8x128xf32>
      %187 = arith.mulf %186, %180 : vector<2x8x128xf32>
      %cst_157 = arith.constant 5.000000e-01 : f32
      %188 = vector.broadcast %cst_157 : f32 to vector<2x8x128xf32>
      %189 = arith.mulf %188, %155 : vector<2x8x128xf32>
      %cst_158 = arith.constant 7.500000e-01 : f32
      %190 = vector.broadcast %cst_158 : f32 to vector<2x8x128xf32>
      %191 = arith.subf %190, %189 : vector<2x8x128xf32>
      %192 = arith.mulf %187, %191 : vector<2x8x128xf32>
      %cst_159 = arith.constant dense<0.000000e+00> : vector<8x128xf32>
      %193 = vector.multi_reduction <add>, %192, %cst_159 [0] : vector<2x8x128xf32> to vector<8x128xf32>
      %194 = vector.shape_cast %193 : vector<8x128xf32> to vector<1x8x128xf32>
      %cst_160 = arith.constant dense<0.000000e+00> : vector<8x128xf32>
      %195 = vector.multi_reduction <add>, %194, %cst_160 [0] : vector<1x8x128xf32> to vector<8x128xf32>
      %196 = arith.addf %151, %195 : vector<8x128xf32>
      %c0_161 = arith.constant 0 : index
      %c0_162 = arith.constant 0 : index
      %c0_163 = arith.constant 0 : index
      %c0_164 = arith.constant 0 : index
      %c0_165 = arith.constant 0 : index
      %197 = vector.load %arg9[%c0_161, %c0_162, %c0_163, %c0_164, %c0_165] : memref<1x3x2x8x128xf32, #tpu.memory_space<vmem>>, vector<1x1x1x8x128xf32>
      %198 = vector.shape_cast %197 : vector<1x1x1x8x128xf32> to vector<8x128xf32>
      %199 = arith.mulf %155, %173 : vector<2x8x128xf32>
      %cst_166 = arith.constant dense<0.000000e+00> : vector<8x128xf32>
      %200 = vector.multi_reduction <add>, %199, %cst_166 [0] : vector<2x8x128xf32> to vector<8x128xf32>
      %201 = vector.shape_cast %200 : vector<8x128xf32> to vector<1x8x128xf32>
      %cst_167 = arith.constant dense<0.000000e+00> : vector<8x128xf32>
      %202 = vector.multi_reduction <add>, %201, %cst_167 [0] : vector<1x8x128xf32> to vector<8x128xf32>
      %203 = arith.addf %198, %202 : vector<8x128xf32>
      %c0_168 = arith.constant 0 : index
      %c0_169 = arith.constant 0 : index
      %c0_170 = arith.constant 0 : index
      %c0_171 = arith.constant 0 : index
      %c0_172 = arith.constant 0 : index
      %204 = vector.load %arg9[%c0_168, %c0_169, %c0_170, %c0_171, %c0_172] : memref<1x3x2x8x128xf32, #tpu.memory_space<vmem>>, vector<1x1x1x8x128xf32>
      %205 = vector.shape_cast %204 : vector<1x1x1x8x128xf32> to vector<8x128xf32>
      %206 = vector.shape_cast %203 : vector<8x128xf32> to vector<1x1x1x8x128xf32>
      tpu.vector_store %arg9[%c0_168, %c0_169, %c0_170, %c0_171, %c0_172], %206 {strides = array<i32>} : memref<1x3x2x8x128xf32, #tpu.memory_space<vmem>>, vector<1x1x1x8x128xf32>,
      %c0_173 = arith.constant 0 : index
      %c1_174 = arith.constant 1 : index
      %c0_175 = arith.constant 0 : index
      %c0_176 = arith.constant 0 : index
      %c0_177 = arith.constant 0 : index
      %207 = vector.load %arg9[%c0_173, %c1_174, %c0_175, %c0_176, %c0_177] : memref<1x3x2x8x128xf32, #tpu.memory_space<vmem>>, vector<1x1x1x8x128xf32>
      %208 = vector.shape_cast %207 : vector<1x1x1x8x128xf32> to vector<8x128xf32>
      %209 = arith.addf %155, %173 : vector<2x8x128xf32>
      %cst_178 = arith.constant dense<0.000000e+00> : vector<8x128xf32>
      %210 = vector.multi_reduction <add>, %209, %cst_178 [0] : vector<2x8x128xf32> to vector<8x128xf32>
      %211 = vector.shape_cast %210 : vector<8x128xf32> to vector<1x8x128xf32>
      %cst_179 = arith.constant dense<0.000000e+00> : vector<8x128xf32>
      %212 = vector.multi_reduction <add>, %211, %cst_179 [0] : vector<1x8x128xf32> to vector<8x128xf32>
      %213 = arith.addf %208, %212 : vector<8x128xf32>
      %c0_180 = arith.constant 0 : index
      %c1_181 = arith.constant 1 : index
      %c0_182 = arith.constant 0 : index
      %c0_183 = arith.constant 0 : index
      %c0_184 = arith.constant 0 : index
      %214 = vector.load %arg9[%c0_180, %c1_181, %c0_182, %c0_183, %c0_184] : memref<1x3x2x8x128xf32, #tpu.memory_space<vmem>>, vector<1x1x1x8x128xf32>
      %215 = vector.shape_cast %214 : vector<1x1x1x8x128xf32> to vector<8x128xf32>
      %216 = vector.shape_cast %213 : vector<8x128xf32> to vector<1x1x1x8x128xf32>
      tpu.vector_store %arg9[%c0_180, %c1_181, %c0_182, %c0_183, %c0_184], %216 {strides = array<i32>} : memref<1x3x2x8x128xf32, #tpu.memory_space<vmem>>, vector<1x1x1x8x128xf32>,
      %c0_185 = arith.constant 0 : index
      %c2_186 = arith.constant 2 : index
      %c0_187 = arith.constant 0 : index
      %c0_188 = arith.constant 0 : index
      %c0_189 = arith.constant 0 : index
      %217 = vector.load %arg9[%c0_185, %c2_186, %c0_187, %c0_188, %c0_189] : memref<1x3x2x8x128xf32, #tpu.memory_space<vmem>>, vector<1x1x1x8x128xf32>
      %218 = vector.shape_cast %217 : vector<1x1x1x8x128xf32> to vector<8x128xf32>
      %cst_190 = arith.constant dense<0.000000e+00> : vector<8x128xf32>
      %219 = vector.multi_reduction <add>, %155, %cst_190 [0] : vector<2x8x128xf32> to vector<8x128xf32>
      %220 = vector.shape_cast %219 : vector<8x128xf32> to vector<1x8x128xf32>
      %cst_191 = arith.constant dense<0.000000e+00> : vector<8x128xf32>
      %221 = vector.multi_reduction <add>, %220, %cst_191 [0] : vector<1x8x128xf32> to vector<8x128xf32>
      %222 = arith.addf %218, %221 : vector<8x128xf32>
      %c0_192 = arith.constant 0 : index
      %c2_193 = arith.constant 2 : index
      %c0_194 = arith.constant 0 : index
      %c0_195 = arith.constant 0 : index
      %c0_196 = arith.constant 0 : index
      %223 = vector.load %arg9[%c0_192, %c2_193, %c0_194, %c0_195, %c0_196] : memref<1x3x2x8x128xf32, #tpu.memory_space<vmem>>, vector<1x1x1x8x128xf32>
      %224 = vector.shape_cast %223 : vector<1x1x1x8x128xf32> to vector<8x128xf32>
      %225 = vector.shape_cast %222 : vector<8x128xf32> to vector<1x1x1x8x128xf32>
      tpu.vector_store %arg9[%c0_192, %c2_193, %c0_194, %c0_195, %c0_196], %225 {strides = array<i32>} : memref<1x3x2x8x128xf32, #tpu.memory_space<vmem>>, vector<1x1x1x8x128xf32>,
      %c0_197 = arith.constant 0 : index
      %c1_198 = arith.constant 1 : index
      %c0_199 = arith.constant 0 : index
      %c0_200 = arith.constant 0 : index
      %226 = vector.load %arg4[%c0_197, %c1_198, %c0_199, %c0_200] : memref<2x2x8x128xf32, #tpu.memory_space<vmem>>, vector<2x1x8x128xf32>
      %227 = vector.shape_cast %226 : vector<2x1x8x128xf32> to vector<2x8x128xf32>
      %c0_201 = arith.constant 0 : index
      %c1_202 = arith.constant 1 : index
      %c0_203 = arith.constant 0 : index
      %c0_204 = arith.constant 0 : index
      %228 = vector.load %arg5[%c0_201, %c1_202, %c0_203, %c0_204] : memref<2x2x8x128xf32, #tpu.memory_space<vmem>>, vector<2x1x8x128xf32>
      %229 = vector.shape_cast %228 : vector<2x1x8x128xf32> to vector<2x8x128xf32>
      %cst_205 = arith.constant 0.000000e+00 : f32
      %230 = vector.broadcast %cst_205 : f32 to vector<2x8x128xf32>
      %231 = arith.maximumf %227, %230 : vector<2x8x128xf32>
      %232 = math.absf %227 : vector<2x8x128xf32>
      %cst_206 = arith.constant 0.000000e+00 : f32
      %233 = vector.broadcast %cst_206 : f32 to vector<2x8x128xf32>
      %234 = arith.subf %233, %232 : vector<2x8x128xf32>
      %235 = math.exp %234 : vector<2x8x128xf32>
      %cst_207 = arith.constant 1.000000e+00 : f32
      %236 = vector.broadcast %cst_207 : f32 to vector<2x8x128xf32>
      %237 = arith.addf %236, %235 : vector<2x8x128xf32>
      %238 = math.log %237 : vector<2x8x128xf32>
      %239 = arith.addf %231, %238 : vector<2x8x128xf32>
      %240 = arith.subf %227, %239 : vector<2x8x128xf32>
      %cst_208 = arith.constant -1.000000e+02 : f32
      %241 = vector.broadcast %cst_208 : f32 to vector<2x8x128xf32>
      %242 = arith.maximumf %240, %241 : vector<2x8x128xf32>
      %cst_209 = arith.constant 0.000000e+00 : f32
      %243 = vector.broadcast %cst_209 : f32 to vector<2x8x128xf32>
      %244 = arith.subf %243, %239 : vector<2x8x128xf32>
      %cst_210 = arith.constant -1.000000e+02 : f32
      %245 = vector.broadcast %cst_210 : f32 to vector<2x8x128xf32>
      %246 = arith.maximumf %244, %245 : vector<2x8x128xf32>
      %247 = math.exp %242 : vector<2x8x128xf32>
      %248 = arith.mulf %229, %242 : vector<2x8x128xf32>
      %cst_211 = arith.constant 1.000000e+00 : f32
      %249 = vector.broadcast %cst_211 : f32 to vector<2x8x128xf32>
      %250 = arith.subf %249, %229 : vector<2x8x128xf32>
      %251 = arith.mulf %250, %246 : vector<2x8x128xf32>
      %252 = arith.addf %248, %251 : vector<2x8x128xf32>
      %cst_212 = arith.constant 0.000000e+00 : f32
      %253 = vector.broadcast %cst_212 : f32 to vector<2x8x128xf32>
      %254 = arith.subf %253, %252 : vector<2x8x128xf32>
      %cst_213 = arith.constant 0.000000e+00 : f32
      %255 = vector.broadcast %cst_213 : f32 to vector<2x8x128xf32>
      %256 = arith.subf %255, %254 : vector<2x8x128xf32>
      %257 = math.exp %256 : vector<2x8x128xf32>
      %cst_214 = arith.constant 1.000000e+00 : f32
      %258 = vector.broadcast %cst_214 : f32 to vector<2x8x128xf32>
      %259 = arith.subf %258, %257 : vector<2x8x128xf32>
      %260 = arith.mulf %259, %259 : vector<2x8x128xf32>
      %261 = arith.mulf %260, %254 : vector<2x8x128xf32>
      %cst_215 = arith.constant 5.000000e-01 : f32
      %262 = vector.broadcast %cst_215 : f32 to vector<2x8x128xf32>
      %263 = arith.mulf %262, %229 : vector<2x8x128xf32>
      %cst_216 = arith.constant 7.500000e-01 : f32
      %264 = vector.broadcast %cst_216 : f32 to vector<2x8x128xf32>
      %265 = arith.subf %264, %263 : vector<2x8x128xf32>
      %266 = arith.mulf %261, %265 : vector<2x8x128xf32>
      %cst_217 = arith.constant dense<0.000000e+00> : vector<8x128xf32>
      %267 = vector.multi_reduction <add>, %266, %cst_217 [0] : vector<2x8x128xf32> to vector<8x128xf32>
      %268 = vector.shape_cast %267 : vector<8x128xf32> to vector<1x8x128xf32>
      %cst_218 = arith.constant dense<0.000000e+00> : vector<8x128xf32>
      %269 = vector.multi_reduction <add>, %268, %cst_218 [0] : vector<1x8x128xf32> to vector<8x128xf32>
      %270 = arith.addf %196, %269 : vector<8x128xf32>
      %c0_219 = arith.constant 0 : index
      %c0_220 = arith.constant 0 : index
      %c1_221 = arith.constant 1 : index
      %c0_222 = arith.constant 0 : index
      %c0_223 = arith.constant 0 : index
      %271 = vector.load %arg9[%c0_219, %c0_220, %c1_221, %c0_222, %c0_223] : memref<1x3x2x8x128xf32, #tpu.memory_space<vmem>>, vector<1x1x1x8x128xf32>
      %272 = vector.shape_cast %271 : vector<1x1x1x8x128xf32> to vector<8x128xf32>
      %273 = arith.mulf %229, %247 : vector<2x8x128xf32>
      %cst_224 = arith.constant dense<0.000000e+00> : vector<8x128xf32>
      %274 = vector.multi_reduction <add>, %273, %cst_224 [0] : vector<2x8x128xf32> to vector<8x128xf32>
      %275 = vector.shape_cast %274 : vector<8x128xf32> to vector<1x8x128xf32>
      %cst_225 = arith.constant dense<0.000000e+00> : vector<8x128xf32>
      %276 = vector.multi_reduction <add>, %275, %cst_225 [0] : vector<1x8x128xf32> to vector<8x128xf32>
      %277 = arith.addf %272, %276 : vector<8x128xf32>
      %c0_226 = arith.constant 0 : index
      %c0_227 = arith.constant 0 : index
      %c1_228 = arith.constant 1 : index
      %c0_229 = arith.constant 0 : index
      %c0_230 = arith.constant 0 : index
      %278 = vector.load %arg9[%c0_226, %c0_227, %c1_228, %c0_229, %c0_230] : memref<1x3x2x8x128xf32, #tpu.memory_space<vmem>>, vector<1x1x1x8x128xf32>
      %279 = vector.shape_cast %278 : vector<1x1x1x8x128xf32> to vector<8x128xf32>
      %280 = vector.shape_cast %277 : vector<8x128xf32> to vector<1x1x1x8x128xf32>
      tpu.vector_store %arg9[%c0_226, %c0_227, %c1_228, %c0_229, %c0_230], %280 {strides = array<i32>} : memref<1x3x2x8x128xf32, #tpu.memory_space<vmem>>, vector<1x1x1x8x128xf32>,
      %c0_231 = arith.constant 0 : index
      %c1_232 = arith.constant 1 : index
      %c1_233 = arith.constant 1 : index
      %c0_234 = arith.constant 0 : index
      %c0_235 = arith.constant 0 : index
      %281 = vector.load %arg9[%c0_231, %c1_232, %c1_233, %c0_234, %c0_235] : memref<1x3x2x8x128xf32, #tpu.memory_space<vmem>>, vector<1x1x1x8x128xf32>
      %282 = vector.shape_cast %281 : vector<1x1x1x8x128xf32> to vector<8x128xf32>
      %283 = arith.addf %229, %247 : vector<2x8x128xf32>
      %cst_236 = arith.constant dense<0.000000e+00> : vector<8x128xf32>
      %284 = vector.multi_reduction <add>, %283, %cst_236 [0] : vector<2x8x128xf32> to vector<8x128xf32>
      %285 = vector.shape_cast %284 : vector<8x128xf32> to vector<1x8x128xf32>
      %cst_237 = arith.constant dense<0.000000e+00> : vector<8x128xf32>
      %286 = vector.multi_reduction <add>, %285, %cst_237 [0] : vector<1x8x128xf32> to vector<8x128xf32>
      %287 = arith.addf %282, %286 : vector<8x128xf32>
      %c0_238 = arith.constant 0 : index
      %c1_239 = arith.constant 1 : index
      %c1_240 = arith.constant 1 : index
      %c0_241 = arith.constant 0 : index
      %c0_242 = arith.constant 0 : index
      %288 = vector.load %arg9[%c0_238, %c1_239, %c1_240, %c0_241, %c0_242] : memref<1x3x2x8x128xf32, #tpu.memory_space<vmem>>, vector<1x1x1x8x128xf32>
      %289 = vector.shape_cast %288 : vector<1x1x1x8x128xf32> to vector<8x128xf32>
      %290 = vector.shape_cast %287 : vector<8x128xf32> to vector<1x1x1x8x128xf32>
      tpu.vector_store %arg9[%c0_238, %c1_239, %c1_240, %c0_241, %c0_242], %290 {strides = array<i32>} : memref<1x3x2x8x128xf32, #tpu.memory_space<vmem>>, vector<1x1x1x8x128xf32>,
      %c0_243 = arith.constant 0 : index
      %c2_244 = arith.constant 2 : index
      %c1_245 = arith.constant 1 : index
      %c0_246 = arith.constant 0 : index
      %c0_247 = arith.constant 0 : index
      %291 = vector.load %arg9[%c0_243, %c2_244, %c1_245, %c0_246, %c0_247] : memref<1x3x2x8x128xf32, #tpu.memory_space<vmem>>, vector<1x1x1x8x128xf32>
      %292 = vector.shape_cast %291 : vector<1x1x1x8x128xf32> to vector<8x128xf32>
      %cst_248 = arith.constant dense<0.000000e+00> : vector<8x128xf32>
      %293 = vector.multi_reduction <add>, %229, %cst_248 [0] : vector<2x8x128xf32> to vector<8x128xf32>
      %294 = vector.shape_cast %293 : vector<8x128xf32> to vector<1x8x128xf32>
      %cst_249 = arith.constant dense<0.000000e+00> : vector<8x128xf32>
      %295 = vector.multi_reduction <add>, %294, %cst_249 [0] : vector<1x8x128xf32> to vector<8x128xf32>
      %296 = arith.addf %292, %295 : vector<8x128xf32>
      %c0_250 = arith.constant 0 : index
      %c2_251 = arith.constant 2 : index
      %c1_252 = arith.constant 1 : index
      %c0_253 = arith.constant 0 : index
      %c0_254 = arith.constant 0 : index
      %297 = vector.load %arg9[%c0_250, %c2_251, %c1_252, %c0_253, %c0_254] : memref<1x3x2x8x128xf32, #tpu.memory_space<vmem>>, vector<1x1x1x8x128xf32>
      %298 = vector.shape_cast %297 : vector<1x1x1x8x128xf32> to vector<8x128xf32>
      %299 = vector.shape_cast %296 : vector<8x128xf32> to vector<1x1x1x8x128xf32>
      tpu.vector_store %arg9[%c0_250, %c2_251, %c1_252, %c0_253, %c0_254], %299 {strides = array<i32>} : memref<1x3x2x8x128xf32, #tpu.memory_space<vmem>>, vector<1x1x1x8x128xf32>,
      %cst_255 = arith.constant 0.000000e+00 : f32
      %300 = vector.broadcast %cst_255 : f32 to vector<8x128xf32>
      %c0_256 = arith.constant 0 : index
      %c0_257 = arith.constant 0 : index
      %c0_258 = arith.constant 0 : index
      %c0_259 = arith.constant 0 : index
      %301 = vector.load %arg6[%c0_256, %c0_257, %c0_258, %c0_259] : memref<2x3x8x128xf32, #tpu.memory_space<vmem>>, vector<2x1x8x128xf32>
      %302 = vector.shape_cast %301 : vector<2x1x8x128xf32> to vector<2x8x128xf32>
      %c0_260 = arith.constant 0 : index
      %c0_261 = arith.constant 0 : index
      %c0_262 = arith.constant 0 : index
      %c0_263 = arith.constant 0 : index
      %303 = vector.load %arg7[%c0_260, %c0_261, %c0_262, %c0_263] : memref<2x3x8x128xf32, #tpu.memory_space<vmem>>, vector<2x1x8x128xf32>
      %304 = vector.shape_cast %303 : vector<2x1x8x128xf32> to vector<2x8x128xf32>
      %305 = arith.subf %302, %304 : vector<2x8x128xf32>
      %306 = math.absf %305 : vector<2x8x128xf32>
      %cst_264 = arith.constant dense<0.000000e+00> : vector<8x128xf32>
      %307 = vector.multi_reduction <add>, %306, %cst_264 [0] : vector<2x8x128xf32> to vector<8x128xf32>
      %308 = vector.shape_cast %307 : vector<8x128xf32> to vector<1x8x128xf32>
      %cst_265 = arith.constant dense<0.000000e+00> : vector<8x128xf32>
      %309 = vector.multi_reduction <add>, %308, %cst_265 [0] : vector<1x8x128xf32> to vector<8x128xf32>
      %310 = arith.addf %300, %309 : vector<8x128xf32>
      %c0_266 = arith.constant 0 : index
      %c1_267 = arith.constant 1 : index
      %c0_268 = arith.constant 0 : index
      %c0_269 = arith.constant 0 : index
      %311 = vector.load %arg6[%c0_266, %c1_267, %c0_268, %c0_269] : memref<2x3x8x128xf32, #tpu.memory_space<vmem>>, vector<2x1x8x128xf32>
      %312 = vector.shape_cast %311 : vector<2x1x8x128xf32> to vector<2x8x128xf32>
      %c0_270 = arith.constant 0 : index
      %c1_271 = arith.constant 1 : index
      %c0_272 = arith.constant 0 : index
      %c0_273 = arith.constant 0 : index
      %313 = vector.load %arg7[%c0_270, %c1_271, %c0_272, %c0_273] : memref<2x3x8x128xf32, #tpu.memory_space<vmem>>, vector<2x1x8x128xf32>
      %314 = vector.shape_cast %313 : vector<2x1x8x128xf32> to vector<2x8x128xf32>
      %315 = arith.subf %312, %314 : vector<2x8x128xf32>
      %316 = math.absf %315 : vector<2x8x128xf32>
      %cst_274 = arith.constant dense<0.000000e+00> : vector<8x128xf32>
      %317 = vector.multi_reduction <add>, %316, %cst_274 [0] : vector<2x8x128xf32> to vector<8x128xf32>
      %318 = vector.shape_cast %317 : vector<8x128xf32> to vector<1x8x128xf32>
      %cst_275 = arith.constant dense<0.000000e+00> : vector<8x128xf32>
      %319 = vector.multi_reduction <add>, %318, %cst_275 [0] : vector<1x8x128xf32> to vector<8x128xf32>
      %320 = arith.addf %310, %319 : vector<8x128xf32>
      %c0_276 = arith.constant 0 : index
      %c2_277 = arith.constant 2 : index
      %c0_278 = arith.constant 0 : index
      %c0_279 = arith.constant 0 : index
      %321 = vector.load %arg6[%c0_276, %c2_277, %c0_278, %c0_279] : memref<2x3x8x128xf32, #tpu.memory_space<vmem>>, vector<2x1x8x128xf32>
      %322 = vector.shape_cast %321 : vector<2x1x8x128xf32> to vector<2x8x128xf32>
      %c0_280 = arith.constant 0 : index
      %c2_281 = arith.constant 2 : index
      %c0_282 = arith.constant 0 : index
      %c0_283 = arith.constant 0 : index
      %323 = vector.load %arg7[%c0_280, %c2_281, %c0_282, %c0_283] : memref<2x3x8x128xf32, #tpu.memory_space<vmem>>, vector<2x1x8x128xf32>
      %324 = vector.shape_cast %323 : vector<2x1x8x128xf32> to vector<2x8x128xf32>
      %325 = arith.subf %322, %324 : vector<2x8x128xf32>
      %326 = math.absf %325 : vector<2x8x128xf32>
      %cst_284 = arith.constant dense<0.000000e+00> : vector<8x128xf32>
      %327 = vector.multi_reduction <add>, %326, %cst_284 [0] : vector<2x8x128xf32> to vector<8x128xf32>
      %328 = vector.shape_cast %327 : vector<8x128xf32> to vector<1x8x128xf32>
      %cst_285 = arith.constant dense<0.000000e+00> : vector<8x128xf32>
      %329 = vector.multi_reduction <add>, %328, %cst_285 [0] : vector<1x8x128xf32> to vector<8x128xf32>
      %330 = arith.addf %320, %329 : vector<8x128xf32>
      %c0_286 = arith.constant 0 : index
      %c0_287 = arith.constant 0 : index
      %c0_288 = arith.constant 0 : index
      %c0_289 = arith.constant 0 : index
      %331 = vector.load %arg10[%c0_286, %c0_287, %c0_288, %c0_289] : memref<1x3x8x128xf32, #tpu.memory_space<vmem>>, vector<1x1x8x128xf32>
      %332 = vector.shape_cast %331 : vector<1x1x8x128xf32> to vector<8x128xf32>
      %cst_290 = arith.constant dense<0.000000e+00> : vector<8x128xf32>
      %333 = vector.multi_reduction <add>, %60, %cst_290 [0] : vector<2x8x128xf32> to vector<8x128xf32>
      %334 = vector.shape_cast %333 : vector<8x128xf32> to vector<1x8x128xf32>
      %cst_291 = arith.constant dense<0.000000e+00> : vector<8x128xf32>
      %335 = vector.multi_reduction <add>, %334, %cst_291 [0] : vector<1x8x128xf32> to vector<8x128xf32>
      %336 = arith.addf %332, %335 : vector<8x128xf32>
      %c0_292 = arith.constant 0 : index
      %c0_293 = arith.constant 0 : index
      %c0_294 = arith.constant 0 : index
      %c0_295 = arith.constant 0 : index
      %337 = vector.load %arg10[%c0_292, %c0_293, %c0_294, %c0_295] : memref<1x3x8x128xf32, #tpu.memory_space<vmem>>, vector<1x1x8x128xf32>
      %338 = vector.shape_cast %337 : vector<1x1x8x128xf32> to vector<8x128xf32>
      %339 = vector.shape_cast %336 : vector<8x128xf32> to vector<1x1x8x128xf32>
      tpu.vector_store %arg10[%c0_292, %c0_293, %c0_294, %c0_295], %339 {strides = array<i32>} : memref<1x3x8x128xf32, #tpu.memory_space<vmem>>, vector<1x1x8x128xf32>,
      %c0_296 = arith.constant 0 : index
      %c1_297 = arith.constant 1 : index
      %c0_298 = arith.constant 0 : index
      %c0_299 = arith.constant 0 : index
      %340 = vector.load %arg10[%c0_296, %c1_297, %c0_298, %c0_299] : memref<1x3x8x128xf32, #tpu.memory_space<vmem>>, vector<1x1x8x128xf32>
      %341 = vector.shape_cast %340 : vector<1x1x8x128xf32> to vector<8x128xf32>
      %342 = arith.addf %341, %270 : vector<8x128xf32>
      %c0_300 = arith.constant 0 : index
      %c1_301 = arith.constant 1 : index
      %c0_302 = arith.constant 0 : index
      %c0_303 = arith.constant 0 : index
      %343 = vector.load %arg10[%c0_300, %c1_301, %c0_302, %c0_303] : memref<1x3x8x128xf32, #tpu.memory_space<vmem>>, vector<1x1x8x128xf32>
      %344 = vector.shape_cast %343 : vector<1x1x8x128xf32> to vector<8x128xf32>
      %345 = vector.shape_cast %342 : vector<8x128xf32> to vector<1x1x8x128xf32>
      tpu.vector_store %arg10[%c0_300, %c1_301, %c0_302, %c0_303], %345 {strides = array<i32>} : memref<1x3x8x128xf32, #tpu.memory_space<vmem>>, vector<1x1x8x128xf32>,
      %c0_304 = arith.constant 0 : index
      %c2_305 = arith.constant 2 : index
      %c0_306 = arith.constant 0 : index
      %c0_307 = arith.constant 0 : index
      %346 = vector.load %arg10[%c0_304, %c2_305, %c0_306, %c0_307] : memref<1x3x8x128xf32, #tpu.memory_space<vmem>>, vector<1x1x8x128xf32>
      %347 = vector.shape_cast %346 : vector<1x1x8x128xf32> to vector<8x128xf32>
      %348 = arith.addf %347, %330 : vector<8x128xf32>
      %c0_308 = arith.constant 0 : index
      %c2_309 = arith.constant 2 : index
      %c0_310 = arith.constant 0 : index
      %c0_311 = arith.constant 0 : index
      %349 = vector.load %arg10[%c0_308, %c2_309, %c0_310, %c0_311] : memref<1x3x8x128xf32, #tpu.memory_space<vmem>>, vector<1x1x8x128xf32>
      %350 = vector.shape_cast %349 : vector<1x1x8x128xf32> to vector<8x128xf32>
      %351 = vector.shape_cast %348 : vector<8x128xf32> to vector<1x1x8x128xf32>
      tpu.vector_store %arg10[%c0_308, %c2_309, %c0_310, %c0_311], %351 {strides = array<i32>} : memref<1x3x8x128xf32, #tpu.memory_space<vmem>>, vector<1x1x8x128xf32>,
    } else {
    }
    return
  }
  func.func @transform_0(%arg0: i32, %arg1: i32) -> (i32, i32, i32, i32) {
    %c1_i32 = arith.constant 1 : i32
    %0 = arith.muli %arg0, %c1_i32 : i32
    %1 = arith.addi %0, %arg1 : i32
    %c0_i32 = arith.constant 0 : i32
    %c0_i32_0 = arith.constant 0 : i32
    %c0_i32_1 = arith.constant 0 : i32
    %c0_i32_2 = arith.constant 0 : i32
    return %c0_i32, %c0_i32_0, %1, %c0_i32_1 : i32, i32, i32, i32
  }
  func.func @transform_1(%arg0: i32, %arg1: i32) -> (i32, i32, i32, i32) {
    %c1_i32 = arith.constant 1 : i32
    %0 = arith.muli %arg0, %c1_i32 : i32
    %1 = arith.addi %0, %arg1 : i32
    %c0_i32 = arith.constant 0 : i32
    %c0_i32_0 = arith.constant 0 : i32
    %c0_i32_1 = arith.constant 0 : i32
    %c0_i32_2 = arith.constant 0 : i32
    return %c0_i32, %c0_i32_0, %1, %c0_i32_1 : i32, i32, i32, i32
  }
  func.func @transform_2(%arg0: i32, %arg1: i32) -> (i32, i32, i32, i32) {
    %c1_i32 = arith.constant 1 : i32
    %0 = arith.muli %arg0, %c1_i32 : i32
    %1 = arith.addi %0, %arg1 : i32
    %c0_i32 = arith.constant 0 : i32
    %c0_i32_0 = arith.constant 0 : i32
    %c0_i32_1 = arith.constant 0 : i32
    %c0_i32_2 = arith.constant 0 : i32
    return %c0_i32, %c0_i32_0, %1, %c0_i32_1 : i32, i32, i32, i32
  }
  func.func @transform_3(%arg0: i32, %arg1: i32) -> (i32, i32, i32, i32) {
    %c1_i32 = arith.constant 1 : i32
    %0 = arith.muli %arg0, %c1_i32 : i32
    %1 = arith.addi %0, %arg1 : i32
    %c0_i32 = arith.constant 0 : i32
    %c0_i32_0 = arith.constant 0 : i32
    %c0_i32_1 = arith.constant 0 : i32
    %c0_i32_2 = arith.constant 0 : i32
    return %c0_i32, %c0_i32_0, %1, %c0_i32_1 : i32, i32, i32, i32
  }
  func.func @transform_4(%arg0: i32, %arg1: i32) -> (i32, i32, i32, i32) {
    %c1_i32 = arith.constant 1 : i32
    %0 = arith.muli %arg0, %c1_i32 : i32
    %1 = arith.addi %0, %arg1 : i32
    %c0_i32 = arith.constant 0 : i32
    %c0_i32_0 = arith.constant 0 : i32
    %c0_i32_1 = arith.constant 0 : i32
    %c0_i32_2 = arith.constant 0 : i32
    return %c0_i32, %c0_i32_0, %1, %c0_i32_1 : i32, i32, i32, i32
  }
  func.func @transform_5(%arg0: i32, %arg1: i32) -> (i32, i32, i32, i32) {
    %c1_i32 = arith.constant 1 : i32
    %0 = arith.muli %arg0, %c1_i32 : i32
    %1 = arith.addi %0, %arg1 : i32
    %c0_i32 = arith.constant 0 : i32
    %c0_i32_0 = arith.constant 0 : i32
    %c0_i32_1 = arith.constant 0 : i32
    %c0_i32_2 = arith.constant 0 : i32
    return %c0_i32, %c0_i32_0, %1, %c0_i32_1 : i32, i32, i32, i32
  }
  func.func @transform_6(%arg0: i32, %arg1: i32) -> (i32, i32, i32, i32, i32) {
    %c0_i32 = arith.constant 0 : i32
    %c0_i32_0 = arith.constant 0 : i32
    %c0_i32_1 = arith.constant 0 : i32
    %c0_i32_2 = arith.constant 0 : i32
    %c0_i32_3 = arith.constant 0 : i32
    return %arg0, %c0_i32, %c0_i32_0, %c0_i32_1, %c0_i32_2 : i32, i32, i32, i32, i32
  }
  func.func @transform_7(%arg0: i32, %arg1: i32) -> (i32, i32, i32, i32, i32) {
    %c0_i32 = arith.constant 0 : i32
    %c0_i32_0 = arith.constant 0 : i32
    %c0_i32_1 = arith.constant 0 : i32
    %c0_i32_2 = arith.constant 0 : i32
    %c0_i32_3 = arith.constant 0 : i32
    return %arg0, %c0_i32, %c0_i32_0, %c0_i32_1, %c0_i32_2 : i32, i32, i32, i32, i32
  }
  func.func @transform_8(%arg0: i32, %arg1: i32) -> (i32, i32, i32, i32) {
    %c0_i32 = arith.constant 0 : i32
    %c0_i32_0 = arith.constant 0 : i32
    %c0_i32_1 = arith.constant 0 : i32
    %c0_i32_2 = arith.constant 0 : i32
    return %arg0, %c0_i32, %c0_i32_0, %c0_i32_1 : i32, i32, i32, i32
  }
}

</mosaic_0001>

<llo_original>
// kernel: tpu_custom_call.1
$region0: #{tpu_custom_call.1}
  #allocation0 [shape = 'u32[]', space=smem, size = 0x4, offset = 0x4, fixed_abs, tag = 'smem constant byte address 0x4 - core index']
  #allocation1 [shape = 'u32[72,128]{1,0:T(1,128)}', space=vmem, size = 0x9000, scoped, tag = 'internal scratch']
  %s0 = inlined_call_operand.hbm [shape: f32[2,3,8,128], index: 0, kind: input, shape index: {}]
  %s1 = inlined_call_operand.hbm [shape: f32[2,3,8,128], index: 1, kind: input, shape index: {}]
  %s2 = inlined_call_operand.hbm [shape: f32[2,2,8,128], index: 2, kind: input, shape index: {}]
  %s3 = inlined_call_operand.hbm [shape: f32[2,2,8,128], index: 3, kind: input, shape index: {}]
  %s4 = inlined_call_operand.hbm [shape: f32[2,3,8,128], index: 4, kind: input, shape index: {}]
  %s5 = inlined_call_operand.hbm [shape: f32[2,3,8,128], index: 5, kind: input, shape index: {}]
  %s6 = inlined_call_operand.hbm [shape: f32[1,3,3,8,128], index: 6, kind: output, shape index: {0}]
  %s7 = inlined_call_operand.hbm [shape: f32[1,3,2,8,128], index: 7, kind: output, shape index: {1}]
  %s8 = inlined_call_operand.hbm [shape: f32[1,3,8,128], index: 8, kind: output, shape index: {2}]
  %9 = xla_tuple %s6, %s7, %s8
  %s10 = sld [smem:[#allocation0]]
  $region86: #{tpu_custom_call.1} parent=0
    _
  %s12 = ssub.s32 1, %s10
  %s13 = scalar_select 0, %s12, %s10
  $region1: #{tpu_custom_call.1} parent=0
    #allocation2 [shape = 'u8[24576]{0}', space=vmem, size = 0x6000, scoped, tag = 'input window, operand 0, single buffered']
    #allocation3 [shape = 's32[1]{0}', space=sflag, size = 0x4, scoped, tag = 'scoped memory for tpu_custom_call.1']
    #allocation4 [shape = 's32[1]{0}', space=sflag, size = 0x4, scoped, tag = 'scoped memory for tpu_custom_call.1']
    #allocation5 [shape = 'u8[24576]{0}', space=vmem, size = 0x6000, scoped, tag = 'input window, operand 1, single buffered']
    #allocation6 [shape = 's32[1]{0}', space=sflag, size = 0x4, scoped, tag = 'scoped memory for tpu_custom_call.1']
    #allocation7 [shape = 'u8[16384]{0}', space=vmem, size = 0x4000, scoped, tag = 'input window, operand 2, single buffered']
    #allocation8 [shape = 'u8[16384]{0}', space=vmem, size = 0x4000, scoped, tag = 'input window, operand 3, single buffered']
    #allocation9 [shape = 's32[1]{0}', space=sflag, size = 0x4, scoped, tag = 'scoped memory for tpu_custom_call.1']
    #allocation10 [shape = 'u8[24576]{0}', space=vmem, size = 0x6000, scoped, tag = 'input window, operand 4, single buffered']
    #allocation11 [shape = 'u8[24576]{0}', space=vmem, size = 0x6000, scoped, tag = 'input window, operand 5, single buffered']
    #allocation12 [shape = 's32[1]{0}', space=sflag, size = 0x4, scoped, tag = 'scoped memory for tpu_custom_call.1']
    #allocation13 [shape = 'u8[36864]{0}', space=vmem, size = 0x9000, scoped, tag = 'output window, operand 0, single buffered']
    #allocation14 [shape = 'u8[24576]{0}', space=vmem, size = 0x6000, scoped, tag = 'output window, operand 1, single buffered']
    #allocation15 [shape = 's32[1]{0}', space=sflag, size = 0x4, scoped, tag = 'scoped memory for tpu_custom_call.1']
    #allocation16 [shape = 'u8[12288]{0}', space=vmem, size = 0x3000, scoped, tag = 'output window, operand 2, single buffered']
    %14 = vsyncpa [#allocation3], 0
    %15 = vsyncpa [#allocation6], 0
    %16 = vsyncpa [#allocation9], 0
    %17 = vsyncpa [#allocation12], 0
    %18 = vsyncpa [#allocation4], 0
    %19 = vsyncpa [#allocation15], 0
    // Predicated region
    $region2: #{tpu_custom_call.1} parent=1 // pred_check
      _
    $region3: #{tpu_custom_call.1} parent=1 // pred_check_branch
      %21 = sbr.rel (0) target = $region5
    $region4: #{tpu_custom_call.1} parent=1 // pred_region
      %s22 = sadd.s32 0, 0
      %24 = vsyncadd [#allocation3], 0
      %s25 = smul.addr %s22, 8
      %s26 = scalar_lea.hbm %s0, %s25
      %s27 = sshll.u32 %s26, 4
      %s28 = int_to_ptr.hbm [resolvable:$true] %s27
      %s29 = sshll.u32 [#allocation2], 4
      %s30 = int_to_ptr.vmem [resolvable:$true] %s29
      %35 = dma.hbm_to_vmem [thread:$0]  %s28, 768, %s30, [#allocation3], 128, 128, 8
    $region5: #{tpu_custom_call.1} parent=1 // pred_fallthru
      _
    // Predicated region
    $region6: #{tpu_custom_call.1} parent=1 // pred_check
      _
    $region7: #{tpu_custom_call.1} parent=1 // pred_check_branch
      %37 = sbr.rel (0) target = $region9
    $region8: #{tpu_custom_call.1} parent=1 // pred_region
      %s38 = sadd.s32 0, 0
      %40 = vsyncadd [#allocation6], 0
      %s41 = smul.addr %s38, 8
      %s42 = scalar_lea.hbm %s1, %s41
      %s43 = sshll.u32 %s42, 4
      %s44 = int_to_ptr.hbm [resolvable:$true] %s43
      %s45 = sshll.u32 [#allocation5], 4
      %s46 = int_to_ptr.vmem [resolvable:$true] %s45
      %51 = dma.hbm_to_vmem [thread:$0]  %s44, 768, %s46, [#allocation6], 128, 128, 8
    $region9: #{tpu_custom_call.1} parent=1 // pred_fallthru
      _
    // Predicated region
    $region10: #{tpu_custom_call.1} parent=1 // pred_check
      _
    $region11: #{tpu_custom_call.1} parent=1 // pred_check_branch
      %53 = sbr.rel (0) target = $region13
    $region12: #{tpu_custom_call.1} parent=1 // pred_region
      %s54 = sadd.s32 0, 0
      %56 = vsyncadd [#allocation6], 0
      %s57 = smul.addr %s54, 8
      %s58 = scalar_lea.hbm %s2, %s57
      %s59 = sshll.u32 %s58, 4
      %s60 = int_to_ptr.hbm [resolvable:$true] %s59
      %s61 = sshll.u32 [#allocation7], 4
      %s62 = int_to_ptr.vmem [resolvable:$true] %s61
      %67 = dma.hbm_to_vmem [thread:$0]  %s60, 512, %s62, [#allocation6], 128, 128, 8
    $region13: #{tpu_custom_call.1} parent=1 // pred_fallthru
      _
    // Predicated region
    $region14: #{tpu_custom_call.1} parent=1 // pred_check
      _
    $region15: #{tpu_custom_call.1} parent=1 // pred_check_branch
      %69 = sbr.rel (0) target = $region17
    $region16: #{tpu_custom_call.1} parent=1 // pred_region
      %s70 = sadd.s32 0, 0
      %72 = vsyncadd [#allocation9], 0
      %s73 = smul.addr %s70, 8
      %s74 = scalar_lea.hbm %s3, %s73
      %s75 = sshll.u32 %s74, 4
      %s76 = int_to_ptr.hbm [resolvable:$true] %s75
      %s77 = sshll.u32 [#allocation8], 4
      %s78 = int_to_ptr.vmem [resolvable:$true] %s77
      %83 = dma.hbm_to_vmem [thread:$0]  %s76, 512, %s78, [#allocation9], 128, 128, 8
    $region17: #{tpu_custom_call.1} parent=1 // pred_fallthru
      _
    // Predicated region
    $region18: #{tpu_custom_call.1} parent=1 // pred_check
      _
    $region19: #{tpu_custom_call.1} parent=1 // pred_check_branch
      %85 = sbr.rel (0) target = $region21
    $region20: #{tpu_custom_call.1} parent=1 // pred_region
      %s86 = sadd.s32 0, 0
      %88 = vsyncadd [#allocation9], 0
      %s89 = smul.addr %s86, 8
      %s90 = scalar_lea.hbm %s4, %s89
      %s91 = sshll.u32 %s90, 4
      %s92 = int_to_ptr.hbm [resolvable:$true] %s91
      %s93 = sshll.u32 [#allocation10], 4
      %s94 = int_to_ptr.vmem [resolvable:$true] %s93
      %99 = dma.hbm_to_vmem [thread:$0]  %s92, 768, %s94, [#allocation9], 128, 128, 8
    $region21: #{tpu_custom_call.1} parent=1 // pred_fallthru
      _
    // Predicated region
    $region22: #{tpu_custom_call.1} parent=1 // pred_check
      _
    $region23: #{tpu_custom_call.1} parent=1 // pred_check_branch
      %101 = sbr.rel (0) target = $region25
    $region24: #{tpu_custom_call.1} parent=1 // pred_region
      %s102 = sadd.s32 0, 0
      %104 = vsyncadd [#allocation12], 0
      %s105 = smul.addr %s102, 8
      %s106 = scalar_lea.hbm %s5, %s105
      %s107 = sshll.u32 %s106, 4
      %s108 = int_to_ptr.hbm [resolvable:$true] %s107
      %s109 = sshll.u32 [#allocation11], 4
      %s110 = int_to_ptr.vmem [resolvable:$true] %s109
      %115 = dma.hbm_to_vmem [thread:$0]  %s108, 768, %s110, [#allocation12], 128, 128, 8
    $region25: #{tpu_custom_call.1} parent=1 // pred_fallthru
      _
    // Predicated region
    $region26: #{tpu_custom_call.1} parent=1 // pred_check
      _
    $region27: #{tpu_custom_call.1} parent=1 // pred_check_branch
      %117 = sbr.rel (0) target = $region29
    $region28: #{tpu_custom_call.1} parent=1 // pred_region
      %119 = dma.done [#allocation3], 768
    $region29: #{tpu_custom_call.1} parent=1 // pred_fallthru
      _
    // Predicated region
    $region30: #{tpu_custom_call.1} parent=1 // pred_check
      _
    $region31: #{tpu_custom_call.1} parent=1 // pred_check_branch
      %121 = sbr.rel (0) target = $region33
    $region32: #{tpu_custom_call.1} parent=1 // pred_region
      %123 = dma.done [#allocation6], 768
    $region33: #{tpu_custom_call.1} parent=1 // pred_fallthru
      _
    // Predicated region
    $region34: #{tpu_custom_call.1} parent=1 // pred_check
      _
    $region35: #{tpu_custom_call.1} parent=1 // pred_check_branch
      %125 = sbr.rel (0) target = $region37
    $region36: #{tpu_custom_call.1} parent=1 // pred_region
      %127 = dma.done [#allocation6], 512
    $region37: #{tpu_custom_call.1} parent=1 // pred_fallthru
      _
    // Predicated region
    $region38: #{tpu_custom_call.1} parent=1 // pred_check
      _
    $region39: #{tpu_custom_call.1} parent=1 // pred_check_branch
      %129 = sbr.rel (0) target = $region41
    $region40: #{tpu_custom_call.1} parent=1 // pred_region
      %131 = dma.done [#allocation9], 512
    $region41: #{tpu_custom_call.1} parent=1 // pred_fallthru
      _
    // Predicated region
    $region42: #{tpu_custom_call.1} parent=1 // pred_check
      _
    $region43: #{tpu_custom_call.1} parent=1 // pred_check_branch
      %133 = sbr.rel (0) target = $region45
    $region44: #{tpu_custom_call.1} parent=1 // pred_region
      %135 = dma.done [#allocation9], 768
    $region45: #{tpu_custom_call.1} parent=1 // pred_fallthru
      _
    // Predicated region
    $region46: #{tpu_custom_call.1} parent=1 // pred_check
      _
    $region47: #{tpu_custom_call.1} parent=1 // pred_check_branch
      %137 = sbr.rel (0) target = $region49
    $region48: #{tpu_custom_call.1} parent=1 // pred_region
      %139 = dma.done [#allocation12], 768
    $region49: #{tpu_custom_call.1} parent=1 // pred_fallthru
      _
    %s140 = sadd.s32 0, 0
    %s141 = sadd.s32 0, 0
    %s142 = sadd.s32 0, 0
    %s143 = sadd.s32 0, 0
    %s144 = sadd.s32 0, 0
    %s145 = sadd.s32 0, 0
    %s146 = sadd.s32 0, 0
    %p147 = scmp.eq.s32.totalorder 0, 0
    // Predicated region
    $region50: #{tpu_custom_call.1} parent=1 // pred_check
      %p148 = pneg %p147
    $region51: #{tpu_custom_call.1} parent=1 // pred_check_branch
      %150 = sbr.rel (%p148) target = $region53
    $region52: #{tpu_custom_call.1} parent=1 // pred_region
      %151 = vst [vmem:[#allocation13] sm:$0xff] 0.0
      %152 = vst [vmem:[#allocation13 + $0x8] sm:$0xff] 0.0
      %153 = vst [vmem:[#allocation13 + $0x10] sm:$0xff] 0.0
      %154 = vst [vmem:[#allocation13 + $0x18] sm:$0xff] 0.0
      %155 = vst [vmem:[#allocation13 + $0x20] sm:$0xff] 0.0
      %156 = vst [vmem:[#allocation13 + $0x28] sm:$0xff] 0.0
      %157 = vst [vmem:[#allocation13 + $0x30] sm:$0xff] 0.0
      %158 = vst [vmem:[#allocation13 + $0x38] sm:$0xff] 0.0
      %159 = vst [vmem:[#allocation13 + $0x40] sm:$0xff] 0.0
      %160 = vst [vmem:[#allocation14] sm:$0xff] 0.0
      %161 = vst [vmem:[#allocation14 + $0x8] sm:$0xff] 0.0
      %162 = vst [vmem:[#allocation14 + $0x10] sm:$0xff] 0.0
      %163 = vst [vmem:[#allocation14 + $0x18] sm:$0xff] 0.0
      %164 = vst [vmem:[#allocation14 + $0x20] sm:$0xff] 0.0
      %165 = vst [vmem:[#allocation14 + $0x28] sm:$0xff] 0.0
      %166 = vst [vmem:[#allocation16] sm:$0xff] 0.0
      %167 = vst [vmem:[#allocation16 + $0x8] sm:$0xff] 0.0
      %168 = vst [vmem:[#allocation16 + $0x10] sm:$0xff] 0.0
    $region53: #{tpu_custom_call.1} parent=1 // pred_fallthru
      _
    %p169 = scmp.eq.s32.totalorder %s146, 0
    %p170 = scmp.ne.s32.totalorder %s146, 0
    // Predicated region
    $region54: #{tpu_custom_call.1} parent=1 // pred_check
      %p171 = pneg %p169
    $region55: #{tpu_custom_call.1} parent=1 // pred_check_branch
      %173 = sbr.rel (%p171) target = $region57
    $region56: #{tpu_custom_call.1} parent=1 // pred_region
      %v174 = vlaneseq
      %v175 = vshrl.u32 %v174, 7
      %v176 = vlaneseq
      %v177 = vand.u32 %v176, 127
      %v178 = vmul.u32 %v175, 128
      %v179 = vadd.s32 %v178, %v177
      %vm180 = vcmp.lt.s32.totalorder %v179, 256
      %v181 = vsel %vm180, 1, 0
      %v182 = vcvt.s32.f32 %v181
      %v183 = vld [vmem:[#allocation2] sm:$0xff]
      %v184 = vld [vmem:[#allocation2 + $0x18] sm:$0xff]
      %s185 = scalar_lea.vmem [#allocation2], 8
      %v186 = vld [vmem:[%s185] sm:$0xff]
      %v187 = vld [vmem:[%s185 + $0x18] sm:$0xff]
      %s188 = scalar_lea.vmem [#allocation2], 16
      %v189 = vld [vmem:[%s188] sm:$0xff]
      %v190 = vld [vmem:[%s188 + $0x18] sm:$0xff]
      %v191 = vld [vmem:[#allocation5] sm:$0xff]
      %v192 = vld [vmem:[#allocation5 + $0x18] sm:$0xff]
      %s193 = scalar_lea.vmem [#allocation5], 8
      %v194 = vld [vmem:[%s193] sm:$0xff]
      %v195 = vld [vmem:[%s193 + $0x18] sm:$0xff]
      %s196 = scalar_lea.vmem [#allocation5], 16
      %v197 = vld [vmem:[%s196] sm:$0xff]
      %v198 = vld [vmem:[%s196 + $0x18] sm:$0xff]
      %v199 = vmax.f32 %v183, %v186
      %v200 = vmax.f32 %v184, %v187
      %v201 = vmax.f32 %v199, %v189
      %v202 = vmax.f32 %v200, %v190
      %v203 = vsub.f32 %v183, %v201
      %v204 = vsub.f32 %v184, %v202
      %v205 = vmul.f32 %v203, 1.442695
      %v206 = vpow.pop %v205
      %v207 = vmul.f32 %v204, 1.442695
      %v208 = vpow.pop %v207
      %v209 = vsub.f32 %v186, %v201
      %v210 = vsub.f32 %v187, %v202
      %v211 = vmul.f32 %v209, 1.442695
      %v212 = vpow.pop %v211
      %v213 = vmul.f32 %v210, 1.442695
      %v214 = vpow.pop %v213
      %v215 = vsub.f32 %v189, %v201
      %v216 = vsub.f32 %v190, %v202
      %v217 = vmul.f32 %v215, 1.442695
      %v218 = vpow.pop %v217
      %v219 = vmul.f32 %v216, 1.442695
      %v220 = vpow.pop %v219
      %v221 = vadd.f32 %v206, %v212
      %v222 = vadd.f32 %v208, %v214
      %v223 = vadd.f32 %v221, %v218
      %v224 = vadd.f32 %v222, %v220
      %v225 = vrcp.pop %v223
      %v226 = vrcp.pop %v224
      %v227 = vlog2.pop %v223
      %v228 = vmul.f32 %v227, 0.6931472
      %v229 = vlog2.pop %v224
      %v230 = vmul.f32 %v229, 0.6931472
      %v231 = vsub.f32 %v203, %v228
      %v232 = vsub.f32 %v204, %v230
      %v233 = vsub.f32 %v209, %v228
      %v234 = vsub.f32 %v210, %v230
      %v235 = vsub.f32 %v215, %v228
      %v236 = vsub.f32 %v216, %v230
      %v237 = vmul.f32 %v191, 0.6
      %v238 = vmul.f32 %v192, 0.6
      %v239 = vmul.f32 %v237, %v231
      %v240 = vmul.f32 %v238, %v232
      %v241 = vmul.f32 %v194, 0.2
      %v242 = vmul.f32 %v195, 0.2
      %v243 = vmul.f32 %v241, %v233
      %v244 = vmul.f32 %v242, %v234
      %v245 = vadd.f32 %v239, %v243
      %v246 = vadd.f32 %v240, %v244
      %v247 = vmul.f32 %v197, 0.2
      %v248 = vmul.f32 %v198, 0.2
      %v249 = vmul.f32 %v247, %v235
      %v250 = vmul.f32 %v248, %v236
      %v251 = vadd.f32 %v245, %v249
      %v252 = vadd.f32 %v246, %v250
      %v253 = vsub.f32 0.0, %v251
      %v254 = vsub.f32 0.0, %v252
      %v255 = vsub.f32 0.0, %v253
      %v256 = vsub.f32 0.0, %v254
      %v257 = vmul.f32 %v255, 1.442695
      %v258 = vpow.pop %v257
      %v259 = vmul.f32 %v256, 1.442695
      %v260 = vpow.pop %v259
      %v261 = vsub.f32 1.0, %v258
      %v262 = vsub.f32 1.0, %v260
      %v263 = vmul.f32 %v261, %v261
      %v264 = vmul.f32 %v262, %v262
      %v265 = vmul.f32 %v263, %v253
      %v266 = vmul.f32 %v264, %v254
      %v267 = vmul.f32 %v206, %v225
      %v268 = vmul.f32 %v208, %v226
      %v269 = vmul.f32 %v212, %v225
      %v270 = vmul.f32 %v214, %v226
      %v271 = vmul.f32 %v218, %v225
      %v272 = vmul.f32 %v220, %v226
      %v273 = vmul.f32 %v267, %v182
      %v274 = vmul.f32 %v268, %v182
      %v275 = vmul.f32 %v269, %v182
      %v276 = vmul.f32 %v270, %v182
      %v277 = vmul.f32 %v271, %v182
      %v278 = vmul.f32 %v272, %v182
      %v279 = vld [vmem:[#allocation13] sm:$0xff]
      %v280 = vmul.f32 %v191, %v273
      %v281 = vmul.f32 %v192, %v274
      %v282 = vadd.f32 %v280, %v281
      %v283 = vadd.f32 %v282, 0.0
      %v284 = vadd.f32 %v279, %v283
      %285 = vst [vmem:[#allocation13] sm:$0xff] %v284
      %s286 = scalar_lea.vmem [#allocation13], 24
      %v287 = vld [vmem:[%s286] sm:$0xff]
      %v288 = vadd.f32 %v191, %v273
      %v289 = vadd.f32 %v192, %v274
      %v290 = vadd.f32 %v288, %v289
      %v291 = vadd.f32 %v290, 0.0
      %v292 = vadd.f32 %v287, %v291
      %293 = vst [vmem:[%s286] sm:$0xff] %v292
      %s294 = scalar_lea.vmem [#allocation13], 48
      %v295 = vld [vmem:[%s294] sm:$0xff]
      %v296 = vadd.f32 %v191, %v192
      %v297 = vadd.f32 %v296, 0.0
      %v298 = vadd.f32 %v295, %v297
      %299 = vst [vmem:[%s294] sm:$0xff] %v298
      %s300 = scalar_lea.vmem [#allocation13], 8
      %v301 = vld [vmem:[%s300] sm:$0xff]
      %v302 = vmul.f32 %v194, %v275
      %v303 = vmul.f32 %v195, %v276
      %v304 = vadd.f32 %v302, %v303
      %v305 = vadd.f32 %v304, 0.0
      %v306 = vadd.f32 %v301, %v305
      %307 = vst [vmem:[%s300] sm:$0xff] %v306
      %s308 = scalar_lea.vmem [#allocation13], 32
      %v309 = vld [vmem:[%s308] sm:$0xff]
      %v310 = vadd.f32 %v194, %v275
      %v311 = vadd.f32 %v195, %v276
      %v312 = vadd.f32 %v310, %v311
      %v313 = vadd.f32 %v312, 0.0
      %v314 = vadd.f32 %v309, %v313
      %315 = vst [vmem:[%s308] sm:$0xff] %v314
      %s316 = scalar_lea.vmem [#allocation13], 56
      %v317 = vld [vmem:[%s316] sm:$0xff]
      %v318 = vadd.f32 %v194, %v195
      %v319 = vadd.f32 %v318, 0.0
      %v320 = vadd.f32 %v317, %v319
      %321 = vst [vmem:[%s316] sm:$0xff] %v320
      %s322 = scalar_lea.vmem [#allocation13], 16
      %v323 = vld [vmem:[%s322] sm:$0xff]
      %v324 = vmul.f32 %v197, %v277
      %v325 = vmul.f32 %v198, %v278
      %v326 = vadd.f32 %v324, %v325
      %v327 = vadd.f32 %v326, 0.0
      %v328 = vadd.f32 %v323, %v327
      %329 = vst [vmem:[%s322] sm:$0xff] %v328
      %s330 = scalar_lea.vmem [#allocation13], 40
      %v331 = vld [vmem:[%s330] sm:$0xff]
      %v332 = vadd.f32 %v197, %v277
      %v333 = vadd.f32 %v198, %v278
      %v334 = vadd.f32 %v332, %v333
      %v335 = vadd.f32 %v334, 0.0
      %v336 = vadd.f32 %v331, %v335
      %337 = vst [vmem:[%s330] sm:$0xff] %v336
      %s338 = scalar_lea.vmem [#allocation13], 64
      %v339 = vld [vmem:[%s338] sm:$0xff]
      %v340 = vadd.f32 %v197, %v198
      %v341 = vadd.f32 %v340, 0.0
      %v342 = vadd.f32 %v339, %v341
      %343 = vst [vmem:[%s338] sm:$0xff] %v342
      %v344 = vld [vmem:[#allocation7] sm:$0xff]
      %v345 = vld [vmem:[#allocation7 + $0x10] sm:$0xff]
      %v346 = vld [vmem:[#allocation8] sm:$0xff]
      %v347 = vld [vmem:[#allocation8 + $0x10] sm:$0xff]
      %v348 = vmax.f32 %v344, 0.0
      %v349 = vmax.f32 %v345, 0.0
      %v350 = vand.u32 2147483647, %v344
      %v351 = vand.u32 2147483647, %v345
      %v352 = vsub.f32 0.0, %v350
      %v353 = vsub.f32 0.0, %v351
      %v354 = vmul.f32 %v352, 1.442695
      %v355 = vpow.pop %v354
      %v356 = vmul.f32 %v353, 1.442695
      %v357 = vpow.pop %v356
      %v358 = vadd.f32 %v355, 1.0
      %v359 = vadd.f32 %v357, 1.0
      %v360 = vlog2.pop %v358
      %v361 = vmul.f32 %v360, 0.6931472
      %v362 = vlog2.pop %v359
      %v363 = vmul.f32 %v362, 0.6931472
      %v364 = vadd.f32 %v348, %v361
      %v365 = vadd.f32 %v349, %v363
      %v366 = vsub.f32 %v344, %v364
      %v367 = vsub.f32 %v345, %v365
      %v368 = vmax.f32 %v366, -100.0
      %v369 = vmax.f32 %v367, -100.0
      %v370 = vsub.f32 0.0, %v364
      %v371 = vsub.f32 0.0, %v365
      %v372 = vmax.f32 %v370, -100.0
      %v373 = vmax.f32 %v371, -100.0
      %v374 = vmul.f32 %v368, 1.442695
      %v375 = vpow.pop %v374
      %v376 = vmul.f32 %v369, 1.442695
      %v377 = vpow.pop %v376
      %v378 = vmul.f32 %v346, %v368
      %v379 = vmul.f32 %v347, %v369
      %v380 = vsub.f32 1.0, %v346
      %v381 = vsub.f32 1.0, %v347
      %v382 = vmul.f32 %v380, %v372
      %v383 = vmul.f32 %v381, %v373
      %v384 = vadd.f32 %v378, %v382
      %v385 = vadd.f32 %v379, %v383
      %v386 = vsub.f32 0.0, %v384
      %v387 = vsub.f32 0.0, %v385
      %v388 = vsub.f32 0.0, %v386
      %v389 = vsub.f32 0.0, %v387
      %v390 = vmul.f32 %v388, 1.442695
      %v391 = vpow.pop %v390
      %v392 = vmul.f32 %v389, 1.442695
      %v393 = vpow.pop %v392
      %v394 = vsub.f32 1.0, %v391
      %v395 = vsub.f32 1.0, %v393
      %v396 = vmul.f32 %v394, %v394
      %v397 = vmul.f32 %v395, %v395
      %v398 = vmul.f32 %v396, %v386
      %v399 = vmul.f32 %v397, %v387
      %v400 = vmul.f32 %v346, 0.5
      %v401 = vmul.f32 %v347, 0.5
      %v402 = vsub.f32 0.75, %v400
      %v403 = vsub.f32 0.75, %v401
      %v404 = vmul.f32 %v398, %v402
      %v405 = vmul.f32 %v399, %v403
      %v406 = vmul.f32 %v404, %v182
      %v407 = vmul.f32 %v405, %v182
      %v408 = vmul.f32 %v375, %v182
      %v409 = vmul.f32 %v377, %v182
      %v410 = vadd.f32 %v406, %v407
      %v411 = vadd.f32 %v410, 0.0
      %v412 = vadd.f32 %v411, 0.0
      %v413 = vld [vmem:[#allocation14] sm:$0xff]
      %v414 = vmul.f32 %v346, %v408
      %v415 = vmul.f32 %v347, %v409
      %v416 = vadd.f32 %v414, %v415
      %v417 = vadd.f32 %v416, 0.0
      %v418 = vadd.f32 %v413, %v417
      %419 = vst [vmem:[#allocation14] sm:$0xff] %v418
      %s420 = scalar_lea.vmem [#allocation14], 16
      %v421 = vld [vmem:[%s420] sm:$0xff]
      %v422 = vadd.f32 %v346, %v408
      %v423 = vadd.f32 %v347, %v409
      %v424 = vadd.f32 %v422, %v423
      %v425 = vadd.f32 %v424, 0.0
      %v426 = vadd.f32 %v421, %v425
      %427 = vst [vmem:[%s420] sm:$0xff] %v426
      %s428 = scalar_lea.vmem [#allocation14], 32
      %v429 = vld [vmem:[%s428] sm:$0xff]
      %v430 = vadd.f32 %v346, %v347
      %v431 = vadd.f32 %v430, 0.0
      %v432 = vadd.f32 %v429, %v431
      %433 = vst [vmem:[%s428] sm:$0xff] %v432
      %s434 = scalar_lea.vmem [#allocation7], 8
      %v435 = vld [vmem:[%s434] sm:$0xff]
      %v436 = vld [vmem:[%s434 + $0x10] sm:$0xff]
      %s437 = scalar_lea.vmem [#allocation8], 8
      %v438 = vld [vmem:[%s437] sm:$0xff]
      %v439 = vld [vmem:[%s437 + $0x10] sm:$0xff]
      %v440 = vmax.f32 %v435, 0.0
      %v441 = vmax.f32 %v436, 0.0
      %v442 = vand.u32 2147483647, %v435
      %v443 = vand.u32 2147483647, %v436
      %v444 = vsub.f32 0.0, %v442
      %v445 = vsub.f32 0.0, %v443
      %v446 = vmul.f32 %v444, 1.442695
      %v447 = vpow.pop %v446
      %v448 = vmul.f32 %v445, 1.442695
      %v449 = vpow.pop %v448
      %v450 = vadd.f32 %v447, 1.0
      %v451 = vadd.f32 %v449, 1.0
      %v452 = vlog2.pop %v450
      %v453 = vmul.f32 %v452, 0.6931472
      %v454 = vlog2.pop %v451
      %v455 = vmul.f32 %v454, 0.6931472
      %v456 = vadd.f32 %v440, %v453
      %v457 = vadd.f32 %v441, %v455
      %v458 = vsub.f32 %v435, %v456
      %v459 = vsub.f32 %v436, %v457
      %v460 = vmax.f32 %v458, -100.0
      %v461 = vmax.f32 %v459, -100.0
      %v462 = vsub.f32 0.0, %v456
      %v463 = vsub.f32 0.0, %v457
      %v464 = vmax.f32 %v462, -100.0
      %v465 = vmax.f32 %v463, -100.0
      %v466 = vmul.f32 %v460, 1.442695
      %v467 = vpow.pop %v466
      %v468 = vmul.f32 %v461, 1.442695
      %v469 = vpow.pop %v468
      %v470 = vmul.f32 %v438, %v460
      %v471 = vmul.f32 %v439, %v461
      %v472 = vsub.f32 1.0, %v438
      %v473 = vsub.f32 1.0, %v439
      %v474 = vmul.f32 %v472, %v464
      %v475 = vmul.f32 %v473, %v465
      %v476 = vadd.f32 %v470, %v474
      %v477 = vadd.f32 %v471, %v475
      %v478 = vsub.f32 0.0, %v476
      %v479 = vsub.f32 0.0, %v477
      %v480 = vsub.f32 0.0, %v478
      %v481 = vsub.f32 0.0, %v479
      %v482 = vmul.f32 %v480, 1.442695
      %v483 = vpow.pop %v482
      %v484 = vmul.f32 %v481, 1.442695
      %v485 = vpow.pop %v484
      %v486 = vsub.f32 1.0, %v483
      %v487 = vsub.f32 1.0, %v485
      %v488 = vmul.f32 %v486, %v486
      %v489 = vmul.f32 %v487, %v487
      %v490 = vmul.f32 %v488, %v478
      %v491 = vmul.f32 %v489, %v479
      %v492 = vmul.f32 %v438, 0.5
      %v493 = vmul.f32 %v439, 0.5
      %v494 = vsub.f32 0.75, %v492
      %v495 = vsub.f32 0.75, %v493
      %v496 = vmul.f32 %v490, %v494
      %v497 = vmul.f32 %v491, %v495
      %v498 = vmul.f32 %v496, %v182
      %v499 = vmul.f32 %v497, %v182
      %v500 = vmul.f32 %v467, %v182
      %v501 = vmul.f32 %v469, %v182
      %v502 = vadd.f32 %v498, %v499
      %v503 = vadd.f32 %v502, 0.0
      %v504 = vadd.f32 %v412, %v503
      %s505 = scalar_lea.vmem [#allocation14], 8
      %v506 = vld [vmem:[%s505] sm:$0xff]
      %v507 = vmul.f32 %v438, %v500
      %v508 = vmul.f32 %v439, %v501
      %v509 = vadd.f32 %v507, %v508
      %v510 = vadd.f32 %v509, 0.0
      %v511 = vadd.f32 %v506, %v510
      %512 = vst [vmem:[%s505] sm:$0xff] %v511
      %s513 = scalar_lea.vmem [#allocation14], 24
      %v514 = vld [vmem:[%s513] sm:$0xff]
      %v515 = vadd.f32 %v438, %v500
      %v516 = vadd.f32 %v439, %v501
      %v517 = vadd.f32 %v515, %v516
      %v518 = vadd.f32 %v517, 0.0
      %v519 = vadd.f32 %v514, %v518
      %520 = vst [vmem:[%s513] sm:$0xff] %v519
      %s521 = scalar_lea.vmem [#allocation14], 40
      %v522 = vld [vmem:[%s521] sm:$0xff]
      %v523 = vadd.f32 %v438, %v439
      %v524 = vadd.f32 %v523, 0.0
      %v525 = vadd.f32 %v522, %v524
      %526 = vst [vmem:[%s521] sm:$0xff] %v525
      %v527 = vld [vmem:[#allocation10] sm:$0xff]
      %v528 = vld [vmem:[#allocation10 + $0x18] sm:$0xff]
      %v529 = vld [vmem:[#allocation11] sm:$0xff]
      %v530 = vld [vmem:[#allocation11 + $0x18] sm:$0xff]
      %v531 = vsub.f32 %v527, %v529
      %v532 = vsub.f32 %v528, %v530
      %v533 = vand.u32 2147483647, %v531
      %v534 = vand.u32 2147483647, %v532
      %v535 = vadd.f32 %v533, %v534
      %v536 = vadd.f32 %v535, 0.0
      %v537 = vadd.f32 %v536, 0.0
      %s538 = scalar_lea.vmem [#allocation10], 8
      %v539 = vld [vmem:[%s538] sm:$0xff]
      %v540 = vld [vmem:[%s538 + $0x18] sm:$0xff]
      %s541 = scalar_lea.vmem [#allocation11], 8
      %v542 = vld [vmem:[%s541] sm:$0xff]
      %v543 = vld [vmem:[%s541 + $0x18] sm:$0xff]
      %v544 = vsub.f32 %v539, %v542
      %v545 = vsub.f32 %v540, %v543
      %v546 = vand.u32 2147483647, %v544
      %v547 = vand.u32 2147483647, %v545
      %v548 = vadd.f32 %v546, %v547
      %v549 = vadd.f32 %v548, 0.0
      %v550 = vadd.f32 %v537, %v549
      %s551 = scalar_lea.vmem [#allocation10], 16
      %v552 = vld [vmem:[%s551] sm:$0xff]
      %v553 = vld [vmem:[%s551 + $0x18] sm:$0xff]
      %s554 = scalar_lea.vmem [#allocation11], 16
      %v555 = vld [vmem:[%s554] sm:$0xff]
      %v556 = vld [vmem:[%s554 + $0x18] sm:$0xff]
      %v557 = vsub.f32 %v552, %v555
      %v558 = vsub.f32 %v553, %v556
      %v559 = vand.u32 2147483647, %v557
      %v560 = vand.u32 2147483647, %v558
      %v561 = vadd.f32 %v559, %v560
      %v562 = vadd.f32 %v561, 0.0
      %v563 = vadd.f32 %v550, %v562
      %v564 = vld [vmem:[#allocation16] sm:$0xff]
      %v565 = vadd.f32 %v265, %v266
      %v566 = vadd.f32 %v565, 0.0
      %v567 = vadd.f32 %v564, %v566
      %568 = vst [vmem:[#allocation16] sm:$0xff] %v567
      %s569 = scalar_lea.vmem [#allocation16], 8
      %v570 = vld [vmem:[%s569] sm:$0xff]
      %v571 = vadd.f32 %v570, %v504
      %572 = vst [vmem:[%s569] sm:$0xff] %v571
      %s573 = scalar_lea.vmem [#allocation16], 16
      %v574 = vld [vmem:[%s573] sm:$0xff]
      %v575 = vadd.f32 %v574, %v563
      %576 = vst [vmem:[%s573] sm:$0xff] %v575
    $region57: #{tpu_custom_call.1} parent=1 // pred_fallthru
      _
    // Predicated region
    $region58: #{tpu_custom_call.1} parent=1 // pred_check
      %p577 = pneg %p170
    $region59: #{tpu_custom_call.1} parent=1 // pred_check_branch
      %579 = sbr.rel (%p577) target = $region61
    $region60: #{tpu_custom_call.1} parent=1 // pred_region
      %v580 = vld [vmem:[#allocation2] sm:$0xff]
      %v581 = vld [vmem:[#allocation2 + $0x18] sm:$0xff]
      %s582 = scalar_lea.vmem [#allocation2], 8
      %v583 = vld [vmem:[%s582] sm:$0xff]
      %v584 = vld [vmem:[%s582 + $0x18] sm:$0xff]
      %s585 = scalar_lea.vmem [#allocation2], 16
      %v586 = vld [vmem:[%s585] sm:$0xff]
      %v587 = vld [vmem:[%s585 + $0x18] sm:$0xff]
      %v588 = vld [vmem:[#allocation5] sm:$0xff]
      %v589 = vld [vmem:[#allocation5 + $0x18] sm:$0xff]
      %s590 = scalar_lea.vmem [#allocation5], 8
      %v591 = vld [vmem:[%s590] sm:$0xff]
      %v592 = vld [vmem:[%s590 + $0x18] sm:$0xff]
      %s593 = scalar_lea.vmem [#allocation5], 16
      %v594 = vld [vmem:[%s593] sm:$0xff]
      %v595 = vld [vmem:[%s593 + $0x18] sm:$0xff]
      %v596 = vmax.f32 %v580, %v583
      %v597 = vmax.f32 %v581, %v584
      %v598 = vmax.f32 %v596, %v586
      %v599 = vmax.f32 %v597, %v587
      %v600 = vsub.f32 %v580, %v598
      %v601 = vsub.f32 %v581, %v599
      %v602 = vmul.f32 %v600, 1.442695
      %v603 = vpow.pop %v602
      %v604 = vmul.f32 %v601, 1.442695
      %v605 = vpow.pop %v604
      %v606 = vsub.f32 %v583, %v598
      %v607 = vsub.f32 %v584, %v599
      %v608 = vmul.f32 %v606, 1.442695
      %v609 = vpow.pop %v608
      %v610 = vmul.f32 %v607, 1.442695
      %v611 = vpow.pop %v610
      %v612 = vsub.f32 %v586, %v598
      %v613 = vsub.f32 %v587, %v599
      %v614 = vmul.f32 %v612, 1.442695
      %v615 = vpow.pop %v614
      %v616 = vmul.f32 %v613, 1.442695
      %v617 = vpow.pop %v616
      %v618 = vadd.f32 %v603, %v609
      %v619 = vadd.f32 %v605, %v611
      %v620 = vadd.f32 %v618, %v615
      %v621 = vadd.f32 %v619, %v617
      %v622 = vrcp.pop %v620
      %v623 = vrcp.pop %v621
      %v624 = vlog2.pop %v620
      %v625 = vmul.f32 %v624, 0.6931472
      %v626 = vlog2.pop %v621
      %v627 = vmul.f32 %v626, 0.6931472
      %v628 = vsub.f32 %v600, %v625
      %v629 = vsub.f32 %v601, %v627
      %v630 = vsub.f32 %v606, %v625
      %v631 = vsub.f32 %v607, %v627
      %v632 = vsub.f32 %v612, %v625
      %v633 = vsub.f32 %v613, %v627
      %v634 = vmul.f32 %v588, 0.6
      %v635 = vmul.f32 %v589, 0.6
      %v636 = vmul.f32 %v634, %v628
      %v637 = vmul.f32 %v635, %v629
      %v638 = vmul.f32 %v591, 0.2
      %v639 = vmul.f32 %v592, 0.2
      %v640 = vmul.f32 %v638, %v630
      %v641 = vmul.f32 %v639, %v631
      %v642 = vadd.f32 %v636, %v640
      %v643 = vadd.f32 %v637, %v641
      %v644 = vmul.f32 %v594, 0.2
      %v645 = vmul.f32 %v595, 0.2
      %v646 = vmul.f32 %v644, %v632
      %v647 = vmul.f32 %v645, %v633
      %v648 = vadd.f32 %v642, %v646
      %v649 = vadd.f32 %v643, %v647
      %v650 = vsub.f32 0.0, %v648
      %v651 = vsub.f32 0.0, %v649
      %v652 = vsub.f32 0.0, %v650
      %v653 = vsub.f32 0.0, %v651
      %v654 = vmul.f32 %v652, 1.442695
      %v655 = vpow.pop %v654
      %v656 = vmul.f32 %v653, 1.442695
      %v657 = vpow.pop %v656
      %v658 = vsub.f32 1.0, %v655
      %v659 = vsub.f32 1.0, %v657
      %v660 = vmul.f32 %v658, %v658
      %v661 = vmul.f32 %v659, %v659
      %v662 = vmul.f32 %v660, %v650
      %v663 = vmul.f32 %v661, %v651
      %v664 = vmul.f32 %v603, %v622
      %v665 = vmul.f32 %v605, %v623
      %v666 = vmul.f32 %v609, %v622
      %v667 = vmul.f32 %v611, %v623
      %v668 = vmul.f32 %v615, %v622
      %v669 = vmul.f32 %v617, %v623
      %v670 = vld [vmem:[#allocation13] sm:$0xff]
      %v671 = vmul.f32 %v588, %v664
      %v672 = vmul.f32 %v589, %v665
      %v673 = vadd.f32 %v671, %v672
      %v674 = vadd.f32 %v673, 0.0
      %v675 = vadd.f32 %v670, %v674
      %676 = vst [vmem:[#allocation13] sm:$0xff] %v675
      %s677 = scalar_lea.vmem [#allocation13], 24
      %v678 = vld [vmem:[%s677] sm:$0xff]
      %v679 = vadd.f32 %v588, %v664
      %v680 = vadd.f32 %v589, %v665
      %v681 = vadd.f32 %v679, %v680
      %v682 = vadd.f32 %v681, 0.0
      %v683 = vadd.f32 %v678, %v682
      %684 = vst [vmem:[%s677] sm:$0xff] %v683
      %s685 = scalar_lea.vmem [#allocation13], 48
      %v686 = vld [vmem:[%s685] sm:$0xff]
      %v687 = vadd.f32 %v588, %v589
      %v688 = vadd.f32 %v687, 0.0
      %v689 = vadd.f32 %v686, %v688
      %690 = vst [vmem:[%s685] sm:$0xff] %v689
      %s691 = scalar_lea.vmem [#allocation13], 8
      %v692 = vld [vmem:[%s691] sm:$0xff]
      %v693 = vmul.f32 %v591, %v666
      %v694 = vmul.f32 %v592, %v667
      %v695 = vadd.f32 %v693, %v694
      %v696 = vadd.f32 %v695, 0.0
      %v697 = vadd.f32 %v692, %v696
      %698 = vst [vmem:[%s691] sm:$0xff] %v697
      %s699 = scalar_lea.vmem [#allocation13], 32
      %v700 = vld [vmem:[%s699] sm:$0xff]
      %v701 = vadd.f32 %v591, %v666
      %v702 = vadd.f32 %v592, %v667
      %v703 = vadd.f32 %v701, %v702
      %v704 = vadd.f32 %v703, 0.0
      %v705 = vadd.f32 %v700, %v704
      %706 = vst [vmem:[%s699] sm:$0xff] %v705
      %s707 = scalar_lea.vmem [#allocation13], 56
      %v708 = vld [vmem:[%s707] sm:$0xff]
      %v709 = vadd.f32 %v591, %v592
      %v710 = vadd.f32 %v709, 0.0
      %v711 = vadd.f32 %v708, %v710
      %712 = vst [vmem:[%s707] sm:$0xff] %v711
      %s713 = scalar_lea.vmem [#allocation13], 16
      %v714 = vld [vmem:[%s713] sm:$0xff]
      %v715 = vmul.f32 %v594, %v668
      %v716 = vmul.f32 %v595, %v669
      %v717 = vadd.f32 %v715, %v716
      %v718 = vadd.f32 %v717, 0.0
      %v719 = vadd.f32 %v714, %v718
      %720 = vst [vmem:[%s713] sm:$0xff] %v719
      %s721 = scalar_lea.vmem [#allocation13], 40
      %v722 = vld [vmem:[%s721] sm:$0xff]
      %v723 = vadd.f32 %v594, %v668
      %v724 = vadd.f32 %v595, %v669
      %v725 = vadd.f32 %v723, %v724
      %v726 = vadd.f32 %v725, 0.0
      %v727 = vadd.f32 %v722, %v726
      %728 = vst [vmem:[%s721] sm:$0xff] %v727
      %s729 = scalar_lea.vmem [#allocation13], 64
      %v730 = vld [vmem:[%s729] sm:$0xff]
      %v731 = vadd.f32 %v594, %v595
      %v732 = vadd.f32 %v731, 0.0
      %v733 = vadd.f32 %v730, %v732
      %734 = vst [vmem:[%s729] sm:$0xff] %v733
      %v735 = vld [vmem:[#allocation7] sm:$0xff]
      %v736 = vld [vmem:[#allocation7 + $0x10] sm:$0xff]
      %v737 = vld [vmem:[#allocation8] sm:$0xff]
      %v738 = vld [vmem:[#allocation8 + $0x10] sm:$0xff]
      %v739 = vmax.f32 %v735, 0.0
      %v740 = vmax.f32 %v736, 0.0
      %v741 = vand.u32 2147483647, %v735
      %v742 = vand.u32 2147483647, %v736
      %v743 = vsub.f32 0.0, %v741
      %v744 = vsub.f32 0.0, %v742
      %v745 = vmul.f32 %v743, 1.442695
      %v746 = vpow.pop %v745
      %v747 = vmul.f32 %v744, 1.442695
      %v748 = vpow.pop %v747
      %v749 = vadd.f32 %v746, 1.0
      %v750 = vadd.f32 %v748, 1.0
      %v751 = vlog2.pop %v749
      %v752 = vmul.f32 %v751, 0.6931472
      %v753 = vlog2.pop %v750
      %v754 = vmul.f32 %v753, 0.6931472
      %v755 = vadd.f32 %v739, %v752
      %v756 = vadd.f32 %v740, %v754
      %v757 = vsub.f32 %v735, %v755
      %v758 = vsub.f32 %v736, %v756
      %v759 = vmax.f32 %v757, -100.0
      %v760 = vmax.f32 %v758, -100.0
      %v761 = vsub.f32 0.0, %v755
      %v762 = vsub.f32 0.0, %v756
      %v763 = vmax.f32 %v761, -100.0
      %v764 = vmax.f32 %v762, -100.0
      %v765 = vmul.f32 %v759, 1.442695
      %v766 = vpow.pop %v765
      %v767 = vmul.f32 %v760, 1.442695
      %v768 = vpow.pop %v767
      %v769 = vmul.f32 %v737, %v759
      %v770 = vmul.f32 %v738, %v760
      %v771 = vsub.f32 1.0, %v737
      %v772 = vsub.f32 1.0, %v738
      %v773 = vmul.f32 %v771, %v763
      %v774 = vmul.f32 %v772, %v764
      %v775 = vadd.f32 %v769, %v773
      %v776 = vadd.f32 %v770, %v774
      %v777 = vsub.f32 0.0, %v775
      %v778 = vsub.f32 0.0, %v776
      %v779 = vsub.f32 0.0, %v777
      %v780 = vsub.f32 0.0, %v778
      %v781 = vmul.f32 %v779, 1.442695
      %v782 = vpow.pop %v781
      %v783 = vmul.f32 %v780, 1.442695
      %v784 = vpow.pop %v783
      %v785 = vsub.f32 1.0, %v782
      %v786 = vsub.f32 1.0, %v784
      %v787 = vmul.f32 %v785, %v785
      %v788 = vmul.f32 %v786, %v786
      %v789 = vmul.f32 %v787, %v777
      %v790 = vmul.f32 %v788, %v778
      %v791 = vmul.f32 %v737, 0.5
      %v792 = vmul.f32 %v738, 0.5
      %v793 = vsub.f32 0.75, %v791
      %v794 = vsub.f32 0.75, %v792
      %v795 = vmul.f32 %v789, %v793
      %v796 = vmul.f32 %v790, %v794
      %v797 = vadd.f32 %v795, %v796
      %v798 = vadd.f32 %v797, 0.0
      %v799 = vadd.f32 %v798, 0.0
      %v800 = vld [vmem:[#allocation14] sm:$0xff]
      %v801 = vmul.f32 %v737, %v766
      %v802 = vmul.f32 %v738, %v768
      %v803 = vadd.f32 %v801, %v802
      %v804 = vadd.f32 %v803, 0.0
      %v805 = vadd.f32 %v800, %v804
      %806 = vst [vmem:[#allocation14] sm:$0xff] %v805
      %s807 = scalar_lea.vmem [#allocation14], 16
      %v808 = vld [vmem:[%s807] sm:$0xff]
      %v809 = vadd.f32 %v737, %v766
      %v810 = vadd.f32 %v738, %v768
      %v811 = vadd.f32 %v809, %v810
      %v812 = vadd.f32 %v811, 0.0
      %v813 = vadd.f32 %v808, %v812
      %814 = vst [vmem:[%s807] sm:$0xff] %v813
      %s815 = scalar_lea.vmem [#allocation14], 32
      %v816 = vld [vmem:[%s815] sm:$0xff]
      %v817 = vadd.f32 %v737, %v738
      %v818 = vadd.f32 %v817, 0.0
      %v819 = vadd.f32 %v816, %v818
      %820 = vst [vmem:[%s815] sm:$0xff] %v819
      %s821 = scalar_lea.vmem [#allocation7], 8
      %v822 = vld [vmem:[%s821] sm:$0xff]
      %v823 = vld [vmem:[%s821 + $0x10] sm:$0xff]
      %s824 = scalar_lea.vmem [#allocation8], 8
      %v825 = vld [vmem:[%s824] sm:$0xff]
      %v826 = vld [vmem:[%s824 + $0x10] sm:$0xff]
      %v827 = vmax.f32 %v822, 0.0
      %v828 = vmax.f32 %v823, 0.0
      %v829 = vand.u32 2147483647, %v822
      %v830 = vand.u32 2147483647, %v823
      %v831 = vsub.f32 0.0, %v829
      %v832 = vsub.f32 0.0, %v830
      %v833 = vmul.f32 %v831, 1.442695
      %v834 = vpow.pop %v833
      %v835 = vmul.f32 %v832, 1.442695
      %v836 = vpow.pop %v835
      %v837 = vadd.f32 %v834, 1.0
      %v838 = vadd.f32 %v836, 1.0
      %v839 = vlog2.pop %v837
      %v840 = vmul.f32 %v839, 0.6931472
      %v841 = vlog2.pop %v838
      %v842 = vmul.f32 %v841, 0.6931472
      %v843 = vadd.f32 %v827, %v840
      %v844 = vadd.f32 %v828, %v842
      %v845 = vsub.f32 %v822, %v843
      %v846 = vsub.f32 %v823, %v844
      %v847 = vmax.f32 %v845, -100.0
      %v848 = vmax.f32 %v846, -100.0
      %v849 = vsub.f32 0.0, %v843
      %v850 = vsub.f32 0.0, %v844
      %v851 = vmax.f32 %v849, -100.0
      %v852 = vmax.f32 %v850, -100.0
      %v853 = vmul.f32 %v847, 1.442695
      %v854 = vpow.pop %v853
      %v855 = vmul.f32 %v848, 1.442695
      %v856 = vpow.pop %v855
      %v857 = vmul.f32 %v825, %v847
      %v858 = vmul.f32 %v826, %v848
      %v859 = vsub.f32 1.0, %v825
      %v860 = vsub.f32 1.0, %v826
      %v861 = vmul.f32 %v859, %v851
      %v862 = vmul.f32 %v860, %v852
      %v863 = vadd.f32 %v857, %v861
      %v864 = vadd.f32 %v858, %v862
      %v865 = vsub.f32 0.0, %v863
      %v866 = vsub.f32 0.0, %v864
      %v867 = vsub.f32 0.0, %v865
      %v868 = vsub.f32 0.0, %v866
      %v869 = vmul.f32 %v867, 1.442695
      %v870 = vpow.pop %v869
      %v871 = vmul.f32 %v868, 1.442695
      %v872 = vpow.pop %v871
      %v873 = vsub.f32 1.0, %v870
      %v874 = vsub.f32 1.0, %v872
      %v875 = vmul.f32 %v873, %v873
      %v876 = vmul.f32 %v874, %v874
      %v877 = vmul.f32 %v875, %v865
      %v878 = vmul.f32 %v876, %v866
      %v879 = vmul.f32 %v825, 0.5
      %v880 = vmul.f32 %v826, 0.5
      %v881 = vsub.f32 0.75, %v879
      %v882 = vsub.f32 0.75, %v880
      %v883 = vmul.f32 %v877, %v881
      %v884 = vmul.f32 %v878, %v882
      %v885 = vadd.f32 %v883, %v884
      %v886 = vadd.f32 %v885, 0.0
      %v887 = vadd.f32 %v799, %v886
      %s888 = scalar_lea.vmem [#allocation14], 8
      %v889 = vld [vmem:[%s888] sm:$0xff]
      %v890 = vmul.f32 %v825, %v854
      %v891 = vmul.f32 %v826, %v856
      %v892 = vadd.f32 %v890, %v891
      %v893 = vadd.f32 %v892, 0.0
      %v894 = vadd.f32 %v889, %v893
      %895 = vst [vmem:[%s888] sm:$0xff] %v894
      %s896 = scalar_lea.vmem [#allocation14], 24
      %v897 = vld [vmem:[%s896] sm:$0xff]
      %v898 = vadd.f32 %v825, %v854
      %v899 = vadd.f32 %v826, %v856
      %v900 = vadd.f32 %v898, %v899
      %v901 = vadd.f32 %v900, 0.0
      %v902 = vadd.f32 %v897, %v901
      %903 = vst [vmem:[%s896] sm:$0xff] %v902
      %s904 = scalar_lea.vmem [#allocation14], 40
      %v905 = vld [vmem:[%s904] sm:$0xff]
      %v906 = vadd.f32 %v825, %v826
      %v907 = vadd.f32 %v906, 0.0
      %v908 = vadd.f32 %v905, %v907
      %909 = vst [vmem:[%s904] sm:$0xff] %v908
      %v910 = vld [vmem:[#allocation10] sm:$0xff]
      %v911 = vld [vmem:[#allocation10 + $0x18] sm:$0xff]
      %v912 = vld [vmem:[#allocation11] sm:$0xff]
      %v913 = vld [vmem:[#allocation11 + $0x18] sm:$0xff]
      %v914 = vsub.f32 %v910, %v912
      %v915 = vsub.f32 %v911, %v913
      %v916 = vand.u32 2147483647, %v914
      %v917 = vand.u32 2147483647, %v915
      %v918 = vadd.f32 %v916, %v917
      %v919 = vadd.f32 %v918, 0.0
      %v920 = vadd.f32 %v919, 0.0
      %s921 = scalar_lea.vmem [#allocation10], 8
      %v922 = vld [vmem:[%s921] sm:$0xff]
      %v923 = vld [vmem:[%s921 + $0x18] sm:$0xff]
      %s924 = scalar_lea.vmem [#allocation11], 8
      %v925 = vld [vmem:[%s924] sm:$0xff]
      %v926 = vld [vmem:[%s924 + $0x18] sm:$0xff]
      %v927 = vsub.f32 %v922, %v925
      %v928 = vsub.f32 %v923, %v926
      %v929 = vand.u32 2147483647, %v927
      %v930 = vand.u32 2147483647, %v928
      %v931 = vadd.f32 %v929, %v930
      %v932 = vadd.f32 %v931, 0.0
      %v933 = vadd.f32 %v920, %v932
      %s934 = scalar_lea.vmem [#allocation10], 16
      %v935 = vld [vmem:[%s934] sm:$0xff]
      %v936 = vld [vmem:[%s934 + $0x18] sm:$0xff]
      %s937 = scalar_lea.vmem [#allocation11], 16
      %v938 = vld [vmem:[%s937] sm:$0xff]
      %v939 = vld [vmem:[%s937 + $0x18] sm:$0xff]
      %v940 = vsub.f32 %v935, %v938
      %v941 = vsub.f32 %v936, %v939
      %v942 = vand.u32 2147483647, %v940
      %v943 = vand.u32 2147483647, %v941
      %v944 = vadd.f32 %v942, %v943
      %v945 = vadd.f32 %v944, 0.0
      %v946 = vadd.f32 %v933, %v945
      %v947 = vld [vmem:[#allocation16] sm:$0xff]
      %v948 = vadd.f32 %v662, %v663
      %v949 = vadd.f32 %v948, 0.0
      %v950 = vadd.f32 %v947, %v949
      %951 = vst [vmem:[#allocation16] sm:$0xff] %v950
      %s952 = scalar_lea.vmem [#allocation16], 8
      %v953 = vld [vmem:[%s952] sm:$0xff]
      %v954 = vadd.f32 %v953, %v887
      %955 = vst [vmem:[%s952] sm:$0xff] %v954
      %s956 = scalar_lea.vmem [#allocation16], 16
      %v957 = vld [vmem:[%s956] sm:$0xff]
      %v958 = vadd.f32 %v957, %v946
      %959 = vst [vmem:[%s956] sm:$0xff] %v958
    $region61: #{tpu_custom_call.1} parent=1 // pred_fallthru
      _
    // Predicated region
    $region62: #{tpu_custom_call.1} parent=1 // pred_check
      _
    $region63: #{tpu_custom_call.1} parent=1 // pred_check_branch
      %961 = sbr.rel (0) target = $region65
    $region64: #{tpu_custom_call.1} parent=1 // pred_region
      %963 = vsyncadd [#allocation4], 0
      %s964 = sshll.u32 [#allocation13], 4
      %s965 = int_to_ptr.vmem [resolvable:$true] %s964
      %s966 = sshll.u32 %s6, 4
      %s967 = int_to_ptr.hbm [resolvable:$true] %s966
      %972 = dma.vmem_to_hbm [thread:$0]  %s965, 1152, %s967, [#allocation4], 128, 128, 8
    $region65: #{tpu_custom_call.1} parent=1 // pred_fallthru
      _
    // Predicated region
    $region66: #{tpu_custom_call.1} parent=1 // pred_check
      _
    $region67: #{tpu_custom_call.1} parent=1 // pred_check_branch
      %974 = sbr.rel (0) target = $region69
    $region68: #{tpu_custom_call.1} parent=1 // pred_region
      %976 = vsyncadd [#allocation15], 0
      %s977 = sshll.u32 [#allocation14], 4
      %s978 = int_to_ptr.vmem [resolvable:$true] %s977
      %s979 = sshll.u32 %s7, 4
      %s980 = int_to_ptr.hbm [resolvable:$true] %s979
      %985 = dma.vmem_to_hbm [thread:$0]  %s978, 768, %s980, [#allocation15], 128, 128, 8
    $region69: #{tpu_custom_call.1} parent=1 // pred_fallthru
      _
    // Predicated region
    $region70: #{tpu_custom_call.1} parent=1 // pred_check
      _
    $region71: #{tpu_custom_call.1} parent=1 // pred_check_branch
      %987 = sbr.rel (0) target = $region73
    $region72: #{tpu_custom_call.1} parent=1 // pred_region
      %989 = vsyncadd [#allocation15], 0
      %s990 = sshll.u32 [#allocation16], 4
      %s991 = int_to_ptr.vmem [resolvable:$true] %s990
      %s992 = sshll.u32 %s8, 4
      %s993 = int_to_ptr.hbm [resolvable:$true] %s992
      %998 = dma.vmem_to_hbm [thread:$0]  %s991, 384, %s993, [#allocation15], 128, 128, 8
    $region73: #{tpu_custom_call.1} parent=1 // pred_fallthru
      _
    // Predicated region
    $region74: #{tpu_custom_call.1} parent=1 // pred_check
      _
    $region75: #{tpu_custom_call.1} parent=1 // pred_check_branch
      %1000 = sbr.rel (0) target = $region77
    $region76: #{tpu_custom_call.1} parent=1 // pred_region
      %1002 = dma.done [#allocation4], 1152
    $region77: #{tpu_custom_call.1} parent=1 // pred_fallthru
      _
    // Predicated region
    $region78: #{tpu_custom_call.1} parent=1 // pred_check
      _
    $region79: #{tpu_custom_call.1} parent=1 // pred_check_branch
      %1004 = sbr.rel (0) target = $region81
    $region80: #{tpu_custom_call.1} parent=1 // pred_region
      %1006 = dma.done [#allocation15], 768
    $region81: #{tpu_custom_call.1} parent=1 // pred_fallthru
      _
    // Predicated region
    $region82: #{tpu_custom_call.1} parent=1 // pred_check
      _
    $region83: #{tpu_custom_call.1} parent=1 // pred_check_branch
      %1008 = sbr.rel (0) target = $region85
    $region84: #{tpu_custom_call.1} parent=1 // pred_region
      %1010 = dma.done [#allocation15], 384
    $region85: #{tpu_custom_call.1} parent=1 // pred_fallthru
      _
    %1011 = vsyncpa [#allocation3], 1
    %1012 = vsyncpa [#allocation6], 1
    %1013 = vsyncpa [#allocation9], 1
    %1014 = vsyncpa [#allocation12], 1
    %1015 = vsyncpa [#allocation4], 1
    %1016 = vsyncpa [#allocation15], 1

</llo_original>
